<compile_context>
chip_gen: v7x
topology: tpu7x:2x2x1
jax: 0.10.0
libtpu: 0.0.40
codegen_flags: <defaults>
</compile_context>

<pallas_src>
import functools

import jax
import jax.numpy as jnp
from jax.experimental import pallas as pl
from jax.experimental.pallas import tpu as pltpu


# (cin, cout, bn_affine, relu) per layer of the PyTorch Sequential.
_LAYER_CFGS = [
    (1, 4, True, True),
    (4, 8, True, True),
    (8, 4, True, True),
    (4, 1, False, False),   # BatchNorm2d(1, affine=False), no trailing ReLU
]

_C_PAD = 8                                            # channel slot size (>= max channels)
_TAP_OFFSETS = tuple((dy, dx) for dy in (-1, 0, 1) for dx in (-1, 0, 1))
_N_TAPS = len(_TAP_OFFSETS)                           # 9
_BIAS_ROW = _N_TAPS * _C_PAD                          # 72: constant-1 row (carries conv bias)
_K_ROWS = _BIAS_ROW + _C_PAD                          # 80: padded contraction dim


def _encoder_kernel(w_ref, g_ref, b_ref, mask_ref, x_ref, o_ref, taps_ref, *,
                    relu_flags, width, eps):
    """Whole MnistEncoder forward in a single kernel invocation.

    w_ref    : VMEM f32[L, 8, 80]      per-layer conv weights, column 8*k+ci for tap k,
                                       input channel ci; column 72 = conv bias; rest 0
    g_ref    : VMEM f32[L, 8, 1]       BN gammas (0 in padded channel rows)
    b_ref    : VMEM f32[L, 8, 1]       BN betas  (0 in padded channel rows)
    mask_ref : VMEM f32[9, N*H*W]      per-tap boundary masks (emulate zero padding)
    x_ref    : VMEM f32[8, N*H*W]      channel-padded, lane-dense input
    o_ref    : VMEM f32[C_last, N*H*W] lane-dense output
    taps_ref : VMEM f32[80, N*H*W]     im2col slab (scratch)
    """
    n_pix = x_ref.shape[1]

    # One-time slab init: rows beyond the taps stay 0 (their weight columns are 0
    # too, and this also kills any NaN bit-pattern left in uninitialized VMEM);
    # row 72 is the constant-1 bias row.
    taps_ref[...] = jnp.zeros_like(taps_ref)
    taps_ref[_BIAS_ROW:_BIAS_ROW + 1, :] = jnp.ones((1, n_pix), jnp.float32)

    act = x_ref[...]                                            # (8, n_pix), 4 vregs
    for li, relu in enumerate(relu_flags):
        # ---- im2col: 9 shifted + boundary-masked copies of act (zero padding) ----
        for k, (dy, dx) in enumerate(_TAP_OFFSETS):
            off = dy * width + dx
            if off == 0:
                tap = act
            else:
                # tap[:, i] = act[:, i + off] where the source pixel is in-bounds, else 0.
                tap = pltpu.roll(act, shift=(-off) % n_pix, axis=1)
                tap = tap * mask_ref[k:k + 1, :]
            taps_ref[_C_PAD * k:_C_PAD * (k + 1), :] = tap      # aligned 8-row slot
        # ---- conv (+ bias via the ones row): one MXU contraction per layer ----
        conv = jnp.dot(w_ref[li], taps_ref[...],
                       preferred_element_type=jnp.float32)       # (8, n_pix)
        # ---- BatchNorm2d: training-mode batch stats (biased var) + ReLU ----
        mean = jnp.mean(conv, axis=1, keepdims=True)
        var = jnp.mean(jnp.square(conv - mean), axis=1, keepdims=True)
        scale = g_ref[li] * jax.lax.rsqrt(var + eps)             # (8, 1)
        shift = b_ref[li] - mean * scale
        act = conv * scale + shift
        if relu:
            act = jnp.maximum(act, 0.0)
        # Padded channel rows stay exactly 0 (zero weight rows -> conv 0, gamma/beta 0).
    o_ref[...] = act[:o_ref.shape[0], :]


def _pack_params(params):
    """Pad/reorder torch-style params into the kernel's VMEM layouts."""
    w_mats, gammas, betas = [], [], []
    for p in params:
        w = jnp.asarray(p["w"], jnp.float32)                     # (cout, cin, 3, 3)
        cout, cin = int(w.shape[0]), int(w.shape[1])
        # column index = 8*k + ci with k = ky*3 + kx  (cross-correlation, like torch)
        wt = jnp.transpose(w, (0, 2, 3, 1)).reshape(cout, _N_TAPS, cin)
        wt = jnp.pad(wt, ((0, 0), (0, 0), (0, _C_PAD - cin))).reshape(cout, _BIAS_ROW)
        w_mat = jnp.zeros((_C_PAD, _K_ROWS), jnp.float32)
        w_mat = w_mat.at[:cout, :_BIAS_ROW].set(wt)
        w_mat = w_mat.at[:cout, _BIAS_ROW].set(jnp.asarray(p["b"], jnp.float32))
        w_mats.append(w_mat)
        gammas.append(jnp.zeros((_C_PAD, 1), jnp.float32)
                      .at[:cout, 0].set(jnp.asarray(p["gamma"], jnp.float32)))
        betas.append(jnp.zeros((_C_PAD, 1), jnp.float32)
                     .at[:cout, 0].set(jnp.asarray(p["beta"], jnp.float32)))
    return jnp.stack(w_mats), jnp.stack(gammas), jnp.stack(betas)


def _boundary_masks(N, H, W):
    """mask[k, i] = 1 iff tap k's source pixel for flat output position i is in-bounds."""
    idx = jnp.arange(N * H * W, dtype=jnp.int32)
    h = (idx // W) % H
    w = idx % W
    rows = []
    for dy, dx in _TAP_OFFSETS:
        valid = (h + dy >= 0) & (h + dy < H) & (w + dx >= 0) & (w + dx < W)
        rows.append(valid)
    return jnp.stack(rows).astype(jnp.float32)                   # (9, N*H*W)


def mnist_encoder_forward(x, params, flatten=True, eps=1e-5):
    """x: (N, 1, H, W) f32; params: list of dicts with 'w' (OIHW), 'b', 'gamma', 'beta'."""
    N, cin0, H, W = x.shape
    n_pix = N * H * W
    cins = [int(p["w"].shape[1]) for p in params]
    couts = [int(p["w"].shape[0]) for p in params]
    relu_flags = tuple(cfg[3] for cfg in _LAYER_CFGS[:len(params)])
    assert cins[0] == cin0 and max(cins + couts) <= _C_PAD, (cins, couts, cin0)
    cout_last = couts[-1]

    w_all, g_all, b_all = _pack_params(params)
    masks = _boundary_masks(N, H, W)
    # Lane-dense, channel-padded input: (C_pad, N*H*W) in (n, h, w) flat order.
    x2d = jnp.transpose(x.astype(jnp.float32), (1, 0, 2, 3)).reshape(cin0, n_pix)
    x2d = jnp.pad(x2d, ((0, _C_PAD - cin0), (0, 0)))

    kernel = functools.partial(_encoder_kernel, relu_flags=relu_flags, width=W, eps=eps)
    out2d = pl.pallas_call(
        kernel,
        out_shape=jax.ShapeDtypeStruct((cout_last, n_pix), jnp.float32),
        in_specs=[
            pl.BlockSpec(memory_space=pltpu.MemorySpace.VMEM),   # weights
            pl.BlockSpec(memory_space=pltpu.MemorySpace.VMEM),   # BN gammas
            pl.BlockSpec(memory_space=pltpu.MemorySpace.VMEM),   # BN betas
            pl.BlockSpec(memory_space=pltpu.MemorySpace.VMEM),   # boundary masks
            pl.BlockSpec(memory_space=pltpu.MemorySpace.VMEM),   # input
        ],
        out_specs=pl.BlockSpec(memory_space=pltpu.MemorySpace.VMEM),
        scratch_shapes=[pltpu.VMEM((_K_ROWS, n_pix), jnp.float32)],  # im2col slab
    )(w_all, g_all, b_all, masks, x2d)

    # Undo the channel-major kernel layout outside the kernel (free for C_last == 1).
    out = out2d.reshape(cout_last, N, H, W).transpose(1, 0, 2, 3)
    if flatten:
        out = out.reshape(N, -1)
    return out


# ----------------------------- parameter setup -----------------------------

def init_params(key):
    params = []
    for cin, cout, affine, _ in _LAYER_CFGS:
        k1, k2, k3, k4, key = jax.random.split(key, 5)
        bound = 1.0 / ((cin * 9) ** 0.5)   # same scale as torch Conv2d default init
        w = jax.random.uniform(k1, (cout, cin, 3, 3), jnp.float32, -bound, bound)
        b = jax.random.uniform(k2, (cout,), jnp.float32, -bound, bound)
        if affine:
            gamma = 1.0 + 0.1 * jax.random.normal(k3, (cout,), jnp.float32)
            beta = 0.1 * jax.random.normal(k4, (cout,), jnp.float32)
        else:  # BatchNorm2d(cout, affine=False)
            gamma = jnp.ones((cout,), jnp.float32)
            beta = jnp.zeros((cout,), jnp.float32)
        params.append(dict(w=w, b=b, gamma=gamma, beta=beta))
    return params


# --------------------------- pure-JAX reference ----------------------------

def reference_forward(x, params, flatten=True, eps=1e-5):
    for p, (_, _, _, relu) in zip(params, _LAYER_CFGS):
        y = jax.lax.conv_general_dilated(
            x, p["w"], window_strides=(1, 1), padding=((1, 1), (1, 1)),
            dimension_numbers=("NCHW", "OIHW", "NCHW"))
        y = y + p["b"][None, :, None, None]
        mean = jnp.mean(y, axis=(0, 2, 3), keepdims=True)
        var = jnp.mean((y - mean) ** 2, axis=(0, 2, 3), keepdims=True)
        y = (y - mean) * jax.lax.rsqrt(var + eps)
        y = y * p["gamma"][None, :, None, None] + p["beta"][None, :, None, None]
        if relu:
            y = jnp.maximum(y, 0.0)
        x = y
    if flatten:
        x = x.reshape(x.shape[0], -1)
    return x


if __name__ == "__main__":
    key = jax.random.PRNGKey(0)
    kx, kp = jax.random.split(key)
    N, C, H, W = 2, 1, 16, 16            # MNIST-like single-channel input, small spatial
    x = jax.random.normal(kx, (N, C, H, W), jnp.float32)
    params = init_params(kp)

    out = mnist_encoder_forward(x, params, flatten=True)
    out = jax.block_until_ready(out)
    assert out.shape == (N, C * H * W), out.shape

    ref = reference_forward(x, params, flatten=True)
    err = float(jnp.max(jnp.abs(out - ref)))
    if err > 1e-3:
        raise AssertionError(f"mismatch vs reference: max abs err {err}")

    print("KERNEL_OK")
</pallas_src>

<mosaic_0001>
module attributes {stable_mosaic.version = 11 : i64} {
  func.func @_encoder_kernel(%arg0: memref<4x8x80xf32, #tpu.memory_space<vmem>>, %arg1: memref<4x8x1xf32, #tpu.memory_space<vmem>>, %arg2: memref<4x8x1xf32, #tpu.memory_space<vmem>>, %arg3: memref<9x512xf32, #tpu.memory_space<vmem>>, %arg4: memref<8x512xf32, #tpu.memory_space<vmem>>, %arg5: memref<1x512xf32, #tpu.memory_space<vmem>>, %arg6: memref<80x512xf32, #tpu.memory_space<vmem>>) attributes {dimension_semantics = [], scalar_prefetch = 0 : i64, scratch_operands = 1 : i64, tpu.core_type = #tpu.core_type<tc>} {
    %cst = arith.constant 0.000000e+00 : f32
    %0 = vector.broadcast %cst : f32 to vector<80x512xf32>
    %c0 = arith.constant 0 : index
    %c0_0 = arith.constant 0 : index
    %1 = vector.load %arg6[%c0, %c0_0] : memref<80x512xf32, #tpu.memory_space<vmem>>, vector<80x512xf32>
    tpu.vector_store %arg6[%c0, %c0_0], %0 {strides = array<i32>} : memref<80x512xf32, #tpu.memory_space<vmem>>, vector<80x512xf32>,
    %cst_1 = arith.constant 1.000000e+00 : f32
    %2 = vector.broadcast %cst_1 : f32 to vector<1x512xf32>
    %c72 = arith.constant 72 : index
    %c0_2 = arith.constant 0 : index
    %3 = vector.load %arg6[%c72, %c0_2] : memref<80x512xf32, #tpu.memory_space<vmem>>, vector<1x512xf32>
    tpu.vector_store %arg6[%c72, %c0_2], %2 {strides = array<i32>} : memref<80x512xf32, #tpu.memory_space<vmem>>, vector<1x512xf32>,
    %c0_3 = arith.constant 0 : index
    %c0_4 = arith.constant 0 : index
    %4 = vector.load %arg4[%c0_3, %c0_4] : memref<8x512xf32, #tpu.memory_space<vmem>>, vector<8x512xf32>
    %c17_i32 = arith.constant 17 : i32
    %5 = tpu.dynamic_rotate %4 by %c17_i32 dim 1 : vector<8x512xf32>, i32 -> vector<8x512xf32>
    %c0_5 = arith.constant 0 : index
    %c0_6 = arith.constant 0 : index
    %6 = vector.load %arg3[%c0_5, %c0_6] : memref<9x512xf32, #tpu.memory_space<vmem>>, vector<1x512xf32>
    %7 = vector.broadcast %6 : vector<1x512xf32> to vector<8x512xf32>
    %8 = arith.mulf %5, %7 : vector<8x512xf32>
    %c0_7 = arith.constant 0 : index
    %c0_8 = arith.constant 0 : index
    %9 = vector.load %arg6[%c0_7, %c0_8] : memref<80x512xf32, #tpu.memory_space<vmem>>, vector<8x512xf32>
    tpu.vector_store %arg6[%c0_7, %c0_8], %8 {strides = array<i32>} : memref<80x512xf32, #tpu.memory_space<vmem>>, vector<8x512xf32>,
    %c16_i32 = arith.constant 16 : i32
    %10 = tpu.dynamic_rotate %4 by %c16_i32 dim 1 : vector<8x512xf32>, i32 -> vector<8x512xf32>
    %c1 = arith.constant 1 : index
    %c0_9 = arith.constant 0 : index
    %11 = vector.load %arg3[%c1, %c0_9] : memref<9x512xf32, #tpu.memory_space<vmem>>, vector<1x512xf32>
    %12 = vector.broadcast %11 : vector<1x512xf32> to vector<8x512xf32>
    %13 = arith.mulf %10, %12 : vector<8x512xf32>
    %c8 = arith.constant 8 : index
    %c0_10 = arith.constant 0 : index
    %14 = vector.load %arg6[%c8, %c0_10] : memref<80x512xf32, #tpu.memory_space<vmem>>, vector<8x512xf32>
    tpu.vector_store %arg6[%c8, %c0_10], %13 {strides = array<i32>} : memref<80x512xf32, #tpu.memory_space<vmem>>, vector<8x512xf32>,
    %c15_i32 = arith.constant 15 : i32
    %15 = tpu.dynamic_rotate %4 by %c15_i32 dim 1 : vector<8x512xf32>, i32 -> vector<8x512xf32>
    %c2 = arith.constant 2 : index
    %c0_11 = arith.constant 0 : index
    %16 = vector.load %arg3[%c2, %c0_11] : memref<9x512xf32, #tpu.memory_space<vmem>>, vector<1x512xf32>
    %17 = vector.broadcast %16 : vector<1x512xf32> to vector<8x512xf32>
    %18 = arith.mulf %15, %17 : vector<8x512xf32>
    %c16 = arith.constant 16 : index
    %c0_12 = arith.constant 0 : index
    %19 = vector.load %arg6[%c16, %c0_12] : memref<80x512xf32, #tpu.memory_space<vmem>>, vector<8x512xf32>
    tpu.vector_store %arg6[%c16, %c0_12], %18 {strides = array<i32>} : memref<80x512xf32, #tpu.memory_space<vmem>>, vector<8x512xf32>,
    %c1_i32 = arith.constant 1 : i32
    %20 = tpu.dynamic_rotate %4 by %c1_i32 dim 1 : vector<8x512xf32>, i32 -> vector<8x512xf32>
    %c3 = arith.constant 3 : index
    %c0_13 = arith.constant 0 : index
    %21 = vector.load %arg3[%c3, %c0_13] : memref<9x512xf32, #tpu.memory_space<vmem>>, vector<1x512xf32>
    %22 = vector.broadcast %21 : vector<1x512xf32> to vector<8x512xf32>
    %23 = arith.mulf %20, %22 : vector<8x512xf32>
    %c24 = arith.constant 24 : index
    %c0_14 = arith.constant 0 : index
    %24 = vector.load %arg6[%c24, %c0_14] : memref<80x512xf32, #tpu.memory_space<vmem>>, vector<8x512xf32>
    tpu.vector_store %arg6[%c24, %c0_14], %23 {strides = array<i32>} : memref<80x512xf32, #tpu.memory_space<vmem>>, vector<8x512xf32>,
    %c32 = arith.constant 32 : index
    %c0_15 = arith.constant 0 : index
    %25 = vector.load %arg6[%c32, %c0_15] : memref<80x512xf32, #tpu.memory_space<vmem>>, vector<8x512xf32>
    tpu.vector_store %arg6[%c32, %c0_15], %4 {strides = array<i32>} : memref<80x512xf32, #tpu.memory_space<vmem>>, vector<8x512xf32>,
    %c511_i32 = arith.constant 511 : i32
    %26 = tpu.dynamic_rotate %4 by %c511_i32 dim 1 : vector<8x512xf32>, i32 -> vector<8x512xf32>
    %c5 = arith.constant 5 : index
    %c0_16 = arith.constant 0 : index
    %27 = vector.load %arg3[%c5, %c0_16] : memref<9x512xf32, #tpu.memory_space<vmem>>, vector<1x512xf32>
    %28 = vector.broadcast %27 : vector<1x512xf32> to vector<8x512xf32>
    %29 = arith.mulf %26, %28 : vector<8x512xf32>
    %c40 = arith.constant 40 : index
    %c0_17 = arith.constant 0 : index
    %30 = vector.load %arg6[%c40, %c0_17] : memref<80x512xf32, #tpu.memory_space<vmem>>, vector<8x512xf32>
    tpu.vector_store %arg6[%c40, %c0_17], %29 {strides = array<i32>} : memref<80x512xf32, #tpu.memory_space<vmem>>, vector<8x512xf32>,
    %c497_i32 = arith.constant 497 : i32
    %31 = tpu.dynamic_rotate %4 by %c497_i32 dim 1 : vector<8x512xf32>, i32 -> vector<8x512xf32>
    %c6 = arith.constant 6 : index
    %c0_18 = arith.constant 0 : index
    %32 = vector.load %arg3[%c6, %c0_18] : memref<9x512xf32, #tpu.memory_space<vmem>>, vector<1x512xf32>
    %33 = vector.broadcast %32 : vector<1x512xf32> to vector<8x512xf32>
    %34 = arith.mulf %31, %33 : vector<8x512xf32>
    %c48 = arith.constant 48 : index
    %c0_19 = arith.constant 0 : index
    %35 = vector.load %arg6[%c48, %c0_19] : memref<80x512xf32, #tpu.memory_space<vmem>>, vector<8x512xf32>
    tpu.vector_store %arg6[%c48, %c0_19], %34 {strides = array<i32>} : memref<80x512xf32, #tpu.memory_space<vmem>>, vector<8x512xf32>,
    %c496_i32 = arith.constant 496 : i32
    %36 = tpu.dynamic_rotate %4 by %c496_i32 dim 1 : vector<8x512xf32>, i32 -> vector<8x512xf32>
    %c7 = arith.constant 7 : index
    %c0_20 = arith.constant 0 : index
    %37 = vector.load %arg3[%c7, %c0_20] : memref<9x512xf32, #tpu.memory_space<vmem>>, vector<1x512xf32>
    %38 = vector.broadcast %37 : vector<1x512xf32> to vector<8x512xf32>
    %39 = arith.mulf %36, %38 : vector<8x512xf32>
    %c56 = arith.constant 56 : index
    %c0_21 = arith.constant 0 : index
    %40 = vector.load %arg6[%c56, %c0_21] : memref<80x512xf32, #tpu.memory_space<vmem>>, vector<8x512xf32>
    tpu.vector_store %arg6[%c56, %c0_21], %39 {strides = array<i32>} : memref<80x512xf32, #tpu.memory_space<vmem>>, vector<8x512xf32>,
    %c495_i32 = arith.constant 495 : i32
    %41 = tpu.dynamic_rotate %4 by %c495_i32 dim 1 : vector<8x512xf32>, i32 -> vector<8x512xf32>
    %c8_22 = arith.constant 8 : index
    %c0_23 = arith.constant 0 : index
    %42 = vector.load %arg3[%c8_22, %c0_23] : memref<9x512xf32, #tpu.memory_space<vmem>>, vector<1x512xf32>
    %43 = vector.broadcast %42 : vector<1x512xf32> to vector<8x512xf32>
    %44 = arith.mulf %41, %43 : vector<8x512xf32>
    %c64 = arith.constant 64 : index
    %c0_24 = arith.constant 0 : index
    %45 = vector.load %arg6[%c64, %c0_24] : memref<80x512xf32, #tpu.memory_space<vmem>>, vector<8x512xf32>
    tpu.vector_store %arg6[%c64, %c0_24], %44 {strides = array<i32>} : memref<80x512xf32, #tpu.memory_space<vmem>>, vector<8x512xf32>,
    %c0_25 = arith.constant 0 : index
    %c0_26 = arith.constant 0 : index
    %c0_27 = arith.constant 0 : index
    %46 = vector.load %arg0[%c0_25, %c0_26, %c0_27] : memref<4x8x80xf32, #tpu.memory_space<vmem>>, vector<1x8x80xf32>
    %47 = vector.shape_cast %46 : vector<1x8x80xf32> to vector<8x80xf32>
    %c0_28 = arith.constant 0 : index
    %c0_29 = arith.constant 0 : index
    %48 = vector.load %arg6[%c0_28, %c0_29] : memref<80x512xf32, #tpu.memory_space<vmem>>, vector<80x512xf32>
    %cst_30 = arith.constant dense<0.000000e+00> : vector<8x512xf32>
    %49 = tpu.matmul %47, %48, %cst_30 {dimension_numbers = #tpu.dot_dimension_numbers<[1], [0], [0], [1], [0, 0, 1, 1], [], []>} : vector<8x80xf32>, vector<80x512xf32>, vector<8x512xf32> -> vector<8x512xf32>
    %cst_31 = arith.constant dense<0.000000e+00> : vector<8xf32>
    %50 = vector.multi_reduction <add>, %49, %cst_31 [1] : vector<8x512xf32> to vector<8xf32>
    %51 = vector.shape_cast %50 : vector<8xf32> to vector<8x1xf32>
    %cst_32 = arith.constant 5.120000e+02 : f32
    %52 = vector.broadcast %cst_32 : f32 to vector<8x1xf32>
    %53 = arith.divf %51, %52 : vector<8x1xf32>
    %54 = vector.broadcast %53 : vector<8x1xf32> to vector<8x512xf32>
    %55 = arith.subf %49, %54 : vector<8x512xf32>
    %56 = arith.mulf %55, %55 : vector<8x512xf32>
    %cst_33 = arith.constant dense<0.000000e+00> : vector<8xf32>
    %57 = vector.multi_reduction <add>, %56, %cst_33 [1] : vector<8x512xf32> to vector<8xf32>
    %58 = vector.shape_cast %57 : vector<8xf32> to vector<8x1xf32>
    %cst_34 = arith.constant 5.120000e+02 : f32
    %59 = vector.broadcast %cst_34 : f32 to vector<8x1xf32>
    %60 = arith.divf %58, %59 : vector<8x1xf32>
    %c0_35 = arith.constant 0 : index
    %c0_36 = arith.constant 0 : index
    %c0_37 = arith.constant 0 : index
    %61 = vector.load %arg1[%c0_35, %c0_36, %c0_37] : memref<4x8x1xf32, #tpu.memory_space<vmem>>, vector<1x8x1xf32>
    %62 = vector.shape_cast %61 : vector<1x8x1xf32> to vector<8x1xf32>
    %cst_38 = arith.constant 9.99999974E-6 : f32
    %63 = vector.broadcast %cst_38 : f32 to vector<8x1xf32>
    %64 = arith.addf %60, %63 : vector<8x1xf32>
    %65 = math.rsqrt %64 : vector<8x1xf32>
    %66 = arith.mulf %62, %65 : vector<8x1xf32>
    %c0_39 = arith.constant 0 : index
    %c0_40 = arith.constant 0 : index
    %c0_41 = arith.constant 0 : index
    %67 = vector.load %arg2[%c0_39, %c0_40, %c0_41] : memref<4x8x1xf32, #tpu.memory_space<vmem>>, vector<1x8x1xf32>
    %68 = vector.shape_cast %67 : vector<1x8x1xf32> to vector<8x1xf32>
    %69 = arith.mulf %53, %66 : vector<8x1xf32>
    %70 = arith.subf %68, %69 : vector<8x1xf32>
    %71 = vector.broadcast %66 : vector<8x1xf32> to vector<8x512xf32>
    %72 = arith.mulf %49, %71 : vector<8x512xf32>
    %73 = vector.broadcast %70 : vector<8x1xf32> to vector<8x512xf32>
    %74 = arith.addf %72, %73 : vector<8x512xf32>
    %cst_42 = arith.constant 0.000000e+00 : f32
    %75 = vector.broadcast %cst_42 : f32 to vector<8x512xf32>
    %76 = arith.maximumf %74, %75 : vector<8x512xf32>
    %c17_i32_43 = arith.constant 17 : i32
    %77 = tpu.dynamic_rotate %76 by %c17_i32_43 dim 1 : vector<8x512xf32>, i32 -> vector<8x512xf32>
    %c0_44 = arith.constant 0 : index
    %c0_45 = arith.constant 0 : index
    %78 = vector.load %arg3[%c0_44, %c0_45] : memref<9x512xf32, #tpu.memory_space<vmem>>, vector<1x512xf32>
    %79 = vector.broadcast %78 : vector<1x512xf32> to vector<8x512xf32>
    %80 = arith.mulf %77, %79 : vector<8x512xf32>
    %c0_46 = arith.constant 0 : index
    %c0_47 = arith.constant 0 : index
    %81 = vector.load %arg6[%c0_46, %c0_47] : memref<80x512xf32, #tpu.memory_space<vmem>>, vector<8x512xf32>
    tpu.vector_store %arg6[%c0_46, %c0_47], %80 {strides = array<i32>} : memref<80x512xf32, #tpu.memory_space<vmem>>, vector<8x512xf32>,
    %c16_i32_48 = arith.constant 16 : i32
    %82 = tpu.dynamic_rotate %76 by %c16_i32_48 dim 1 : vector<8x512xf32>, i32 -> vector<8x512xf32>
    %c1_49 = arith.constant 1 : index
    %c0_50 = arith.constant 0 : index
    %83 = vector.load %arg3[%c1_49, %c0_50] : memref<9x512xf32, #tpu.memory_space<vmem>>, vector<1x512xf32>
    %84 = vector.broadcast %83 : vector<1x512xf32> to vector<8x512xf32>
    %85 = arith.mulf %82, %84 : vector<8x512xf32>
    %c8_51 = arith.constant 8 : index
    %c0_52 = arith.constant 0 : index
    %86 = vector.load %arg6[%c8_51, %c0_52] : memref<80x512xf32, #tpu.memory_space<vmem>>, vector<8x512xf32>
    tpu.vector_store %arg6[%c8_51, %c0_52], %85 {strides = array<i32>} : memref<80x512xf32, #tpu.memory_space<vmem>>, vector<8x512xf32>,
    %c15_i32_53 = arith.constant 15 : i32
    %87 = tpu.dynamic_rotate %76 by %c15_i32_53 dim 1 : vector<8x512xf32>, i32 -> vector<8x512xf32>
    %c2_54 = arith.constant 2 : index
    %c0_55 = arith.constant 0 : index
    %88 = vector.load %arg3[%c2_54, %c0_55] : memref<9x512xf32, #tpu.memory_space<vmem>>, vector<1x512xf32>
    %89 = vector.broadcast %88 : vector<1x512xf32> to vector<8x512xf32>
    %90 = arith.mulf %87, %89 : vector<8x512xf32>
    %c16_56 = arith.constant 16 : index
    %c0_57 = arith.constant 0 : index
    %91 = vector.load %arg6[%c16_56, %c0_57] : memref<80x512xf32, #tpu.memory_space<vmem>>, vector<8x512xf32>
    tpu.vector_store %arg6[%c16_56, %c0_57], %90 {strides = array<i32>} : memref<80x512xf32, #tpu.memory_space<vmem>>, vector<8x512xf32>,
    %c1_i32_58 = arith.constant 1 : i32
    %92 = tpu.dynamic_rotate %76 by %c1_i32_58 dim 1 : vector<8x512xf32>, i32 -> vector<8x512xf32>
    %c3_59 = arith.constant 3 : index
    %c0_60 = arith.constant 0 : index
    %93 = vector.load %arg3[%c3_59, %c0_60] : memref<9x512xf32, #tpu.memory_space<vmem>>, vector<1x512xf32>
    %94 = vector.broadcast %93 : vector<1x512xf32> to vector<8x512xf32>
    %95 = arith.mulf %92, %94 : vector<8x512xf32>
    %c24_61 = arith.constant 24 : index
    %c0_62 = arith.constant 0 : index
    %96 = vector.load %arg6[%c24_61, %c0_62] : memref<80x512xf32, #tpu.memory_space<vmem>>, vector<8x512xf32>
    tpu.vector_store %arg6[%c24_61, %c0_62], %95 {strides = array<i32>} : memref<80x512xf32, #tpu.memory_space<vmem>>, vector<8x512xf32>,
    %c32_63 = arith.constant 32 : index
    %c0_64 = arith.constant 0 : index
    %97 = vector.load %arg6[%c32_63, %c0_64] : memref<80x512xf32, #tpu.memory_space<vmem>>, vector<8x512xf32>
    tpu.vector_store %arg6[%c32_63, %c0_64], %76 {strides = array<i32>} : memref<80x512xf32, #tpu.memory_space<vmem>>, vector<8x512xf32>,
    %c511_i32_65 = arith.constant 511 : i32
    %98 = tpu.dynamic_rotate %76 by %c511_i32_65 dim 1 : vector<8x512xf32>, i32 -> vector<8x512xf32>
    %c5_66 = arith.constant 5 : index
    %c0_67 = arith.constant 0 : index
    %99 = vector.load %arg3[%c5_66, %c0_67] : memref<9x512xf32, #tpu.memory_space<vmem>>, vector<1x512xf32>
    %100 = vector.broadcast %99 : vector<1x512xf32> to vector<8x512xf32>
    %101 = arith.mulf %98, %100 : vector<8x512xf32>
    %c40_68 = arith.constant 40 : index
    %c0_69 = arith.constant 0 : index
    %102 = vector.load %arg6[%c40_68, %c0_69] : memref<80x512xf32, #tpu.memory_space<vmem>>, vector<8x512xf32>
    tpu.vector_store %arg6[%c40_68, %c0_69], %101 {strides = array<i32>} : memref<80x512xf32, #tpu.memory_space<vmem>>, vector<8x512xf32>,
    %c497_i32_70 = arith.constant 497 : i32
    %103 = tpu.dynamic_rotate %76 by %c497_i32_70 dim 1 : vector<8x512xf32>, i32 -> vector<8x512xf32>
    %c6_71 = arith.constant 6 : index
    %c0_72 = arith.constant 0 : index
    %104 = vector.load %arg3[%c6_71, %c0_72] : memref<9x512xf32, #tpu.memory_space<vmem>>, vector<1x512xf32>
    %105 = vector.broadcast %104 : vector<1x512xf32> to vector<8x512xf32>
    %106 = arith.mulf %103, %105 : vector<8x512xf32>
    %c48_73 = arith.constant 48 : index
    %c0_74 = arith.constant 0 : index
    %107 = vector.load %arg6[%c48_73, %c0_74] : memref<80x512xf32, #tpu.memory_space<vmem>>, vector<8x512xf32>
    tpu.vector_store %arg6[%c48_73, %c0_74], %106 {strides = array<i32>} : memref<80x512xf32, #tpu.memory_space<vmem>>, vector<8x512xf32>,
    %c496_i32_75 = arith.constant 496 : i32
    %108 = tpu.dynamic_rotate %76 by %c496_i32_75 dim 1 : vector<8x512xf32>, i32 -> vector<8x512xf32>
    %c7_76 = arith.constant 7 : index
    %c0_77 = arith.constant 0 : index
    %109 = vector.load %arg3[%c7_76, %c0_77] : memref<9x512xf32, #tpu.memory_space<vmem>>, vector<1x512xf32>
    %110 = vector.broadcast %109 : vector<1x512xf32> to vector<8x512xf32>
    %111 = arith.mulf %108, %110 : vector<8x512xf32>
    %c56_78 = arith.constant 56 : index
    %c0_79 = arith.constant 0 : index
    %112 = vector.load %arg6[%c56_78, %c0_79] : memref<80x512xf32, #tpu.memory_space<vmem>>, vector<8x512xf32>
    tpu.vector_store %arg6[%c56_78, %c0_79], %111 {strides = array<i32>} : memref<80x512xf32, #tpu.memory_space<vmem>>, vector<8x512xf32>,
    %c495_i32_80 = arith.constant 495 : i32
    %113 = tpu.dynamic_rotate %76 by %c495_i32_80 dim 1 : vector<8x512xf32>, i32 -> vector<8x512xf32>
    %c8_81 = arith.constant 8 : index
    %c0_82 = arith.constant 0 : index
    %114 = vector.load %arg3[%c8_81, %c0_82] : memref<9x512xf32, #tpu.memory_space<vmem>>, vector<1x512xf32>
    %115 = vector.broadcast %114 : vector<1x512xf32> to vector<8x512xf32>
    %116 = arith.mulf %113, %115 : vector<8x512xf32>
    %c64_83 = arith.constant 64 : index
    %c0_84 = arith.constant 0 : index
    %117 = vector.load %arg6[%c64_83, %c0_84] : memref<80x512xf32, #tpu.memory_space<vmem>>, vector<8x512xf32>
    tpu.vector_store %arg6[%c64_83, %c0_84], %116 {strides = array<i32>} : memref<80x512xf32, #tpu.memory_space<vmem>>, vector<8x512xf32>,
    %c1_85 = arith.constant 1 : index
    %c0_86 = arith.constant 0 : index
    %c0_87 = arith.constant 0 : index
    %118 = vector.load %arg0[%c1_85, %c0_86, %c0_87] : memref<4x8x80xf32, #tpu.memory_space<vmem>>, vector<1x8x80xf32>
    %119 = vector.shape_cast %118 : vector<1x8x80xf32> to vector<8x80xf32>
    %c0_88 = arith.constant 0 : index
    %c0_89 = arith.constant 0 : index
    %120 = vector.load %arg6[%c0_88, %c0_89] : memref<80x512xf32, #tpu.memory_space<vmem>>, vector<80x512xf32>
    %cst_90 = arith.constant dense<0.000000e+00> : vector<8x512xf32>
    %121 = tpu.matmul %119, %120, %cst_90 {dimension_numbers = #tpu.dot_dimension_numbers<[1], [0], [0], [1], [0, 0, 1, 1], [], []>} : vector<8x80xf32>, vector<80x512xf32>, vector<8x512xf32> -> vector<8x512xf32>
    %cst_91 = arith.constant dense<0.000000e+00> : vector<8xf32>
    %122 = vector.multi_reduction <add>, %121, %cst_91 [1] : vector<8x512xf32> to vector<8xf32>
    %123 = vector.shape_cast %122 : vector<8xf32> to vector<8x1xf32>
    %cst_92 = arith.constant 5.120000e+02 : f32
    %124 = vector.broadcast %cst_92 : f32 to vector<8x1xf32>
    %125 = arith.divf %123, %124 : vector<8x1xf32>
    %126 = vector.broadcast %125 : vector<8x1xf32> to vector<8x512xf32>
    %127 = arith.subf %121, %126 : vector<8x512xf32>
    %128 = arith.mulf %127, %127 : vector<8x512xf32>
    %cst_93 = arith.constant dense<0.000000e+00> : vector<8xf32>
    %129 = vector.multi_reduction <add>, %128, %cst_93 [1] : vector<8x512xf32> to vector<8xf32>
    %130 = vector.shape_cast %129 : vector<8xf32> to vector<8x1xf32>
    %cst_94 = arith.constant 5.120000e+02 : f32
    %131 = vector.broadcast %cst_94 : f32 to vector<8x1xf32>
    %132 = arith.divf %130, %131 : vector<8x1xf32>
    %c1_95 = arith.constant 1 : index
    %c0_96 = arith.constant 0 : index
    %c0_97 = arith.constant 0 : index
    %133 = vector.load %arg1[%c1_95, %c0_96, %c0_97] : memref<4x8x1xf32, #tpu.memory_space<vmem>>, vector<1x8x1xf32>
    %134 = vector.shape_cast %133 : vector<1x8x1xf32> to vector<8x1xf32>
    %cst_98 = arith.constant 9.99999974E-6 : f32
    %135 = vector.broadcast %cst_98 : f32 to vector<8x1xf32>
    %136 = arith.addf %132, %135 : vector<8x1xf32>
    %137 = math.rsqrt %136 : vector<8x1xf32>
    %138 = arith.mulf %134, %137 : vector<8x1xf32>
    %c1_99 = arith.constant 1 : index
    %c0_100 = arith.constant 0 : index
    %c0_101 = arith.constant 0 : index
    %139 = vector.load %arg2[%c1_99, %c0_100, %c0_101] : memref<4x8x1xf32, #tpu.memory_space<vmem>>, vector<1x8x1xf32>
    %140 = vector.shape_cast %139 : vector<1x8x1xf32> to vector<8x1xf32>
    %141 = arith.mulf %125, %138 : vector<8x1xf32>
    %142 = arith.subf %140, %141 : vector<8x1xf32>
    %143 = vector.broadcast %138 : vector<8x1xf32> to vector<8x512xf32>
    %144 = arith.mulf %121, %143 : vector<8x512xf32>
    %145 = vector.broadcast %142 : vector<8x1xf32> to vector<8x512xf32>
    %146 = arith.addf %144, %145 : vector<8x512xf32>
    %cst_102 = arith.constant 0.000000e+00 : f32
    %147 = vector.broadcast %cst_102 : f32 to vector<8x512xf32>
    %148 = arith.maximumf %146, %147 : vector<8x512xf32>
    %c17_i32_103 = arith.constant 17 : i32
    %149 = tpu.dynamic_rotate %148 by %c17_i32_103 dim 1 : vector<8x512xf32>, i32 -> vector<8x512xf32>
    %c0_104 = arith.constant 0 : index
    %c0_105 = arith.constant 0 : index
    %150 = vector.load %arg3[%c0_104, %c0_105] : memref<9x512xf32, #tpu.memory_space<vmem>>, vector<1x512xf32>
    %151 = vector.broadcast %150 : vector<1x512xf32> to vector<8x512xf32>
    %152 = arith.mulf %149, %151 : vector<8x512xf32>
    %c0_106 = arith.constant 0 : index
    %c0_107 = arith.constant 0 : index
    %153 = vector.load %arg6[%c0_106, %c0_107] : memref<80x512xf32, #tpu.memory_space<vmem>>, vector<8x512xf32>
    tpu.vector_store %arg6[%c0_106, %c0_107], %152 {strides = array<i32>} : memref<80x512xf32, #tpu.memory_space<vmem>>, vector<8x512xf32>,
    %c16_i32_108 = arith.constant 16 : i32
    %154 = tpu.dynamic_rotate %148 by %c16_i32_108 dim 1 : vector<8x512xf32>, i32 -> vector<8x512xf32>
    %c1_109 = arith.constant 1 : index
    %c0_110 = arith.constant 0 : index
    %155 = vector.load %arg3[%c1_109, %c0_110] : memref<9x512xf32, #tpu.memory_space<vmem>>, vector<1x512xf32>
    %156 = vector.broadcast %155 : vector<1x512xf32> to vector<8x512xf32>
    %157 = arith.mulf %154, %156 : vector<8x512xf32>
    %c8_111 = arith.constant 8 : index
    %c0_112 = arith.constant 0 : index
    %158 = vector.load %arg6[%c8_111, %c0_112] : memref<80x512xf32, #tpu.memory_space<vmem>>, vector<8x512xf32>
    tpu.vector_store %arg6[%c8_111, %c0_112], %157 {strides = array<i32>} : memref<80x512xf32, #tpu.memory_space<vmem>>, vector<8x512xf32>,
    %c15_i32_113 = arith.constant 15 : i32
    %159 = tpu.dynamic_rotate %148 by %c15_i32_113 dim 1 : vector<8x512xf32>, i32 -> vector<8x512xf32>
    %c2_114 = arith.constant 2 : index
    %c0_115 = arith.constant 0 : index
    %160 = vector.load %arg3[%c2_114, %c0_115] : memref<9x512xf32, #tpu.memory_space<vmem>>, vector<1x512xf32>
    %161 = vector.broadcast %160 : vector<1x512xf32> to vector<8x512xf32>
    %162 = arith.mulf %159, %161 : vector<8x512xf32>
    %c16_116 = arith.constant 16 : index
    %c0_117 = arith.constant 0 : index
    %163 = vector.load %arg6[%c16_116, %c0_117] : memref<80x512xf32, #tpu.memory_space<vmem>>, vector<8x512xf32>
    tpu.vector_store %arg6[%c16_116, %c0_117], %162 {strides = array<i32>} : memref<80x512xf32, #tpu.memory_space<vmem>>, vector<8x512xf32>,
    %c1_i32_118 = arith.constant 1 : i32
    %164 = tpu.dynamic_rotate %148 by %c1_i32_118 dim 1 : vector<8x512xf32>, i32 -> vector<8x512xf32>
    %c3_119 = arith.constant 3 : index
    %c0_120 = arith.constant 0 : index
    %165 = vector.load %arg3[%c3_119, %c0_120] : memref<9x512xf32, #tpu.memory_space<vmem>>, vector<1x512xf32>
    %166 = vector.broadcast %165 : vector<1x512xf32> to vector<8x512xf32>
    %167 = arith.mulf %164, %166 : vector<8x512xf32>
    %c24_121 = arith.constant 24 : index
    %c0_122 = arith.constant 0 : index
    %168 = vector.load %arg6[%c24_121, %c0_122] : memref<80x512xf32, #tpu.memory_space<vmem>>, vector<8x512xf32>
    tpu.vector_store %arg6[%c24_121, %c0_122], %167 {strides = array<i32>} : memref<80x512xf32, #tpu.memory_space<vmem>>, vector<8x512xf32>,
    %c32_123 = arith.constant 32 : index
    %c0_124 = arith.constant 0 : index
    %169 = vector.load %arg6[%c32_123, %c0_124] : memref<80x512xf32, #tpu.memory_space<vmem>>, vector<8x512xf32>
    tpu.vector_store %arg6[%c32_123, %c0_124], %148 {strides = array<i32>} : memref<80x512xf32, #tpu.memory_space<vmem>>, vector<8x512xf32>,
    %c511_i32_125 = arith.constant 511 : i32
    %170 = tpu.dynamic_rotate %148 by %c511_i32_125 dim 1 : vector<8x512xf32>, i32 -> vector<8x512xf32>
    %c5_126 = arith.constant 5 : index
    %c0_127 = arith.constant 0 : index
    %171 = vector.load %arg3[%c5_126, %c0_127] : memref<9x512xf32, #tpu.memory_space<vmem>>, vector<1x512xf32>
    %172 = vector.broadcast %171 : vector<1x512xf32> to vector<8x512xf32>
    %173 = arith.mulf %170, %172 : vector<8x512xf32>
    %c40_128 = arith.constant 40 : index
    %c0_129 = arith.constant 0 : index
    %174 = vector.load %arg6[%c40_128, %c0_129] : memref<80x512xf32, #tpu.memory_space<vmem>>, vector<8x512xf32>
    tpu.vector_store %arg6[%c40_128, %c0_129], %173 {strides = array<i32>} : memref<80x512xf32, #tpu.memory_space<vmem>>, vector<8x512xf32>,
    %c497_i32_130 = arith.constant 497 : i32
    %175 = tpu.dynamic_rotate %148 by %c497_i32_130 dim 1 : vector<8x512xf32>, i32 -> vector<8x512xf32>
    %c6_131 = arith.constant 6 : index
    %c0_132 = arith.constant 0 : index
    %176 = vector.load %arg3[%c6_131, %c0_132] : memref<9x512xf32, #tpu.memory_space<vmem>>, vector<1x512xf32>
    %177 = vector.broadcast %176 : vector<1x512xf32> to vector<8x512xf32>
    %178 = arith.mulf %175, %177 : vector<8x512xf32>
    %c48_133 = arith.constant 48 : index
    %c0_134 = arith.constant 0 : index
    %179 = vector.load %arg6[%c48_133, %c0_134] : memref<80x512xf32, #tpu.memory_space<vmem>>, vector<8x512xf32>
    tpu.vector_store %arg6[%c48_133, %c0_134], %178 {strides = array<i32>} : memref<80x512xf32, #tpu.memory_space<vmem>>, vector<8x512xf32>,
    %c496_i32_135 = arith.constant 496 : i32
    %180 = tpu.dynamic_rotate %148 by %c496_i32_135 dim 1 : vector<8x512xf32>, i32 -> vector<8x512xf32>
    %c7_136 = arith.constant 7 : index
    %c0_137 = arith.constant 0 : index
    %181 = vector.load %arg3[%c7_136, %c0_137] : memref<9x512xf32, #tpu.memory_space<vmem>>, vector<1x512xf32>
    %182 = vector.broadcast %181 : vector<1x512xf32> to vector<8x512xf32>
    %183 = arith.mulf %180, %182 : vector<8x512xf32>
    %c56_138 = arith.constant 56 : index
    %c0_139 = arith.constant 0 : index
    %184 = vector.load %arg6[%c56_138, %c0_139] : memref<80x512xf32, #tpu.memory_space<vmem>>, vector<8x512xf32>
    tpu.vector_store %arg6[%c56_138, %c0_139], %183 {strides = array<i32>} : memref<80x512xf32, #tpu.memory_space<vmem>>, vector<8x512xf32>,
    %c495_i32_140 = arith.constant 495 : i32
    %185 = tpu.dynamic_rotate %148 by %c495_i32_140 dim 1 : vector<8x512xf32>, i32 -> vector<8x512xf32>
    %c8_141 = arith.constant 8 : index
    %c0_142 = arith.constant 0 : index
    %186 = vector.load %arg3[%c8_141, %c0_142] : memref<9x512xf32, #tpu.memory_space<vmem>>, vector<1x512xf32>
    %187 = vector.broadcast %186 : vector<1x512xf32> to vector<8x512xf32>
    %188 = arith.mulf %185, %187 : vector<8x512xf32>
    %c64_143 = arith.constant 64 : index
    %c0_144 = arith.constant 0 : index
    %189 = vector.load %arg6[%c64_143, %c0_144] : memref<80x512xf32, #tpu.memory_space<vmem>>, vector<8x512xf32>
    tpu.vector_store %arg6[%c64_143, %c0_144], %188 {strides = array<i32>} : memref<80x512xf32, #tpu.memory_space<vmem>>, vector<8x512xf32>,
    %c2_145 = arith.constant 2 : index
    %c0_146 = arith.constant 0 : index
    %c0_147 = arith.constant 0 : index
    %190 = vector.load %arg0[%c2_145, %c0_146, %c0_147] : memref<4x8x80xf32, #tpu.memory_space<vmem>>, vector<1x8x80xf32>
    %191 = vector.shape_cast %190 : vector<1x8x80xf32> to vector<8x80xf32>
    %c0_148 = arith.constant 0 : index
    %c0_149 = arith.constant 0 : index
    %192 = vector.load %arg6[%c0_148, %c0_149] : memref<80x512xf32, #tpu.memory_space<vmem>>, vector<80x512xf32>
    %cst_150 = arith.constant dense<0.000000e+00> : vector<8x512xf32>
    %193 = tpu.matmul %191, %192, %cst_150 {dimension_numbers = #tpu.dot_dimension_numbers<[1], [0], [0], [1], [0, 0, 1, 1], [], []>} : vector<8x80xf32>, vector<80x512xf32>, vector<8x512xf32> -> vector<8x512xf32>
    %cst_151 = arith.constant dense<0.000000e+00> : vector<8xf32>
    %194 = vector.multi_reduction <add>, %193, %cst_151 [1] : vector<8x512xf32> to vector<8xf32>
    %195 = vector.shape_cast %194 : vector<8xf32> to vector<8x1xf32>
    %cst_152 = arith.constant 5.120000e+02 : f32
    %196 = vector.broadcast %cst_152 : f32 to vector<8x1xf32>
    %197 = arith.divf %195, %196 : vector<8x1xf32>
    %198 = vector.broadcast %197 : vector<8x1xf32> to vector<8x512xf32>
    %199 = arith.subf %193, %198 : vector<8x512xf32>
    %200 = arith.mulf %199, %199 : vector<8x512xf32>
    %cst_153 = arith.constant dense<0.000000e+00> : vector<8xf32>
    %201 = vector.multi_reduction <add>, %200, %cst_153 [1] : vector<8x512xf32> to vector<8xf32>
    %202 = vector.shape_cast %201 : vector<8xf32> to vector<8x1xf32>
    %cst_154 = arith.constant 5.120000e+02 : f32
    %203 = vector.broadcast %cst_154 : f32 to vector<8x1xf32>
    %204 = arith.divf %202, %203 : vector<8x1xf32>
    %c2_155 = arith.constant 2 : index
    %c0_156 = arith.constant 0 : index
    %c0_157 = arith.constant 0 : index
    %205 = vector.load %arg1[%c2_155, %c0_156, %c0_157] : memref<4x8x1xf32, #tpu.memory_space<vmem>>, vector<1x8x1xf32>
    %206 = vector.shape_cast %205 : vector<1x8x1xf32> to vector<8x1xf32>
    %cst_158 = arith.constant 9.99999974E-6 : f32
    %207 = vector.broadcast %cst_158 : f32 to vector<8x1xf32>
    %208 = arith.addf %204, %207 : vector<8x1xf32>
    %209 = math.rsqrt %208 : vector<8x1xf32>
    %210 = arith.mulf %206, %209 : vector<8x1xf32>
    %c2_159 = arith.constant 2 : index
    %c0_160 = arith.constant 0 : index
    %c0_161 = arith.constant 0 : index
    %211 = vector.load %arg2[%c2_159, %c0_160, %c0_161] : memref<4x8x1xf32, #tpu.memory_space<vmem>>, vector<1x8x1xf32>
    %212 = vector.shape_cast %211 : vector<1x8x1xf32> to vector<8x1xf32>
    %213 = arith.mulf %197, %210 : vector<8x1xf32>
    %214 = arith.subf %212, %213 : vector<8x1xf32>
    %215 = vector.broadcast %210 : vector<8x1xf32> to vector<8x512xf32>
    %216 = arith.mulf %193, %215 : vector<8x512xf32>
    %217 = vector.broadcast %214 : vector<8x1xf32> to vector<8x512xf32>
    %218 = arith.addf %216, %217 : vector<8x512xf32>
    %cst_162 = arith.constant 0.000000e+00 : f32
    %219 = vector.broadcast %cst_162 : f32 to vector<8x512xf32>
    %220 = arith.maximumf %218, %219 : vector<8x512xf32>
    %c17_i32_163 = arith.constant 17 : i32
    %221 = tpu.dynamic_rotate %220 by %c17_i32_163 dim 1 : vector<8x512xf32>, i32 -> vector<8x512xf32>
    %c0_164 = arith.constant 0 : index
    %c0_165 = arith.constant 0 : index
    %222 = vector.load %arg3[%c0_164, %c0_165] : memref<9x512xf32, #tpu.memory_space<vmem>>, vector<1x512xf32>
    %223 = vector.broadcast %222 : vector<1x512xf32> to vector<8x512xf32>
    %224 = arith.mulf %221, %223 : vector<8x512xf32>
    %c0_166 = arith.constant 0 : index
    %c0_167 = arith.constant 0 : index
    %225 = vector.load %arg6[%c0_166, %c0_167] : memref<80x512xf32, #tpu.memory_space<vmem>>, vector<8x512xf32>
    tpu.vector_store %arg6[%c0_166, %c0_167], %224 {strides = array<i32>} : memref<80x512xf32, #tpu.memory_space<vmem>>, vector<8x512xf32>,
    %c16_i32_168 = arith.constant 16 : i32
    %226 = tpu.dynamic_rotate %220 by %c16_i32_168 dim 1 : vector<8x512xf32>, i32 -> vector<8x512xf32>
    %c1_169 = arith.constant 1 : index
    %c0_170 = arith.constant 0 : index
    %227 = vector.load %arg3[%c1_169, %c0_170] : memref<9x512xf32, #tpu.memory_space<vmem>>, vector<1x512xf32>
    %228 = vector.broadcast %227 : vector<1x512xf32> to vector<8x512xf32>
    %229 = arith.mulf %226, %228 : vector<8x512xf32>
    %c8_171 = arith.constant 8 : index
    %c0_172 = arith.constant 0 : index
    %230 = vector.load %arg6[%c8_171, %c0_172] : memref<80x512xf32, #tpu.memory_space<vmem>>, vector<8x512xf32>
    tpu.vector_store %arg6[%c8_171, %c0_172], %229 {strides = array<i32>} : memref<80x512xf32, #tpu.memory_space<vmem>>, vector<8x512xf32>,
    %c15_i32_173 = arith.constant 15 : i32
    %231 = tpu.dynamic_rotate %220 by %c15_i32_173 dim 1 : vector<8x512xf32>, i32 -> vector<8x512xf32>
    %c2_174 = arith.constant 2 : index
    %c0_175 = arith.constant 0 : index
    %232 = vector.load %arg3[%c2_174, %c0_175] : memref<9x512xf32, #tpu.memory_space<vmem>>, vector<1x512xf32>
    %233 = vector.broadcast %232 : vector<1x512xf32> to vector<8x512xf32>
    %234 = arith.mulf %231, %233 : vector<8x512xf32>
    %c16_176 = arith.constant 16 : index
    %c0_177 = arith.constant 0 : index
    %235 = vector.load %arg6[%c16_176, %c0_177] : memref<80x512xf32, #tpu.memory_space<vmem>>, vector<8x512xf32>
    tpu.vector_store %arg6[%c16_176, %c0_177], %234 {strides = array<i32>} : memref<80x512xf32, #tpu.memory_space<vmem>>, vector<8x512xf32>,
    %c1_i32_178 = arith.constant 1 : i32
    %236 = tpu.dynamic_rotate %220 by %c1_i32_178 dim 1 : vector<8x512xf32>, i32 -> vector<8x512xf32>
    %c3_179 = arith.constant 3 : index
    %c0_180 = arith.constant 0 : index
    %237 = vector.load %arg3[%c3_179, %c0_180] : memref<9x512xf32, #tpu.memory_space<vmem>>, vector<1x512xf32>
    %238 = vector.broadcast %237 : vector<1x512xf32> to vector<8x512xf32>
    %239 = arith.mulf %236, %238 : vector<8x512xf32>
    %c24_181 = arith.constant 24 : index
    %c0_182 = arith.constant 0 : index
    %240 = vector.load %arg6[%c24_181, %c0_182] : memref<80x512xf32, #tpu.memory_space<vmem>>, vector<8x512xf32>
    tpu.vector_store %arg6[%c24_181, %c0_182], %239 {strides = array<i32>} : memref<80x512xf32, #tpu.memory_space<vmem>>, vector<8x512xf32>,
    %c32_183 = arith.constant 32 : index
    %c0_184 = arith.constant 0 : index
    %241 = vector.load %arg6[%c32_183, %c0_184] : memref<80x512xf32, #tpu.memory_space<vmem>>, vector<8x512xf32>
    tpu.vector_store %arg6[%c32_183, %c0_184], %220 {strides = array<i32>} : memref<80x512xf32, #tpu.memory_space<vmem>>, vector<8x512xf32>,
    %c511_i32_185 = arith.constant 511 : i32
    %242 = tpu.dynamic_rotate %220 by %c511_i32_185 dim 1 : vector<8x512xf32>, i32 -> vector<8x512xf32>
    %c5_186 = arith.constant 5 : index
    %c0_187 = arith.constant 0 : index
    %243 = vector.load %arg3[%c5_186, %c0_187] : memref<9x512xf32, #tpu.memory_space<vmem>>, vector<1x512xf32>
    %244 = vector.broadcast %243 : vector<1x512xf32> to vector<8x512xf32>
    %245 = arith.mulf %242, %244 : vector<8x512xf32>
    %c40_188 = arith.constant 40 : index
    %c0_189 = arith.constant 0 : index
    %246 = vector.load %arg6[%c40_188, %c0_189] : memref<80x512xf32, #tpu.memory_space<vmem>>, vector<8x512xf32>
    tpu.vector_store %arg6[%c40_188, %c0_189], %245 {strides = array<i32>} : memref<80x512xf32, #tpu.memory_space<vmem>>, vector<8x512xf32>,
    %c497_i32_190 = arith.constant 497 : i32
    %247 = tpu.dynamic_rotate %220 by %c497_i32_190 dim 1 : vector<8x512xf32>, i32 -> vector<8x512xf32>
    %c6_191 = arith.constant 6 : index
    %c0_192 = arith.constant 0 : index
    %248 = vector.load %arg3[%c6_191, %c0_192] : memref<9x512xf32, #tpu.memory_space<vmem>>, vector<1x512xf32>
    %249 = vector.broadcast %248 : vector<1x512xf32> to vector<8x512xf32>
    %250 = arith.mulf %247, %249 : vector<8x512xf32>
    %c48_193 = arith.constant 48 : index
    %c0_194 = arith.constant 0 : index
    %251 = vector.load %arg6[%c48_193, %c0_194] : memref<80x512xf32, #tpu.memory_space<vmem>>, vector<8x512xf32>
    tpu.vector_store %arg6[%c48_193, %c0_194], %250 {strides = array<i32>} : memref<80x512xf32, #tpu.memory_space<vmem>>, vector<8x512xf32>,
    %c496_i32_195 = arith.constant 496 : i32
    %252 = tpu.dynamic_rotate %220 by %c496_i32_195 dim 1 : vector<8x512xf32>, i32 -> vector<8x512xf32>
    %c7_196 = arith.constant 7 : index
    %c0_197 = arith.constant 0 : index
    %253 = vector.load %arg3[%c7_196, %c0_197] : memref<9x512xf32, #tpu.memory_space<vmem>>, vector<1x512xf32>
    %254 = vector.broadcast %253 : vector<1x512xf32> to vector<8x512xf32>
    %255 = arith.mulf %252, %254 : vector<8x512xf32>
    %c56_198 = arith.constant 56 : index
    %c0_199 = arith.constant 0 : index
    %256 = vector.load %arg6[%c56_198, %c0_199] : memref<80x512xf32, #tpu.memory_space<vmem>>, vector<8x512xf32>
    tpu.vector_store %arg6[%c56_198, %c0_199], %255 {strides = array<i32>} : memref<80x512xf32, #tpu.memory_space<vmem>>, vector<8x512xf32>,
    %c495_i32_200 = arith.constant 495 : i32
    %257 = tpu.dynamic_rotate %220 by %c495_i32_200 dim 1 : vector<8x512xf32>, i32 -> vector<8x512xf32>
    %c8_201 = arith.constant 8 : index
    %c0_202 = arith.constant 0 : index
    %258 = vector.load %arg3[%c8_201, %c0_202] : memref<9x512xf32, #tpu.memory_space<vmem>>, vector<1x512xf32>
    %259 = vector.broadcast %258 : vector<1x512xf32> to vector<8x512xf32>
    %260 = arith.mulf %257, %259 : vector<8x512xf32>
    %c64_203 = arith.constant 64 : index
    %c0_204 = arith.constant 0 : index
    %261 = vector.load %arg6[%c64_203, %c0_204] : memref<80x512xf32, #tpu.memory_space<vmem>>, vector<8x512xf32>
    tpu.vector_store %arg6[%c64_203, %c0_204], %260 {strides = array<i32>} : memref<80x512xf32, #tpu.memory_space<vmem>>, vector<8x512xf32>,
    %c3_205 = arith.constant 3 : index
    %c0_206 = arith.constant 0 : index
    %c0_207 = arith.constant 0 : index
    %262 = vector.load %arg0[%c3_205, %c0_206, %c0_207] : memref<4x8x80xf32, #tpu.memory_space<vmem>>, vector<1x8x80xf32>
    %263 = vector.shape_cast %262 : vector<1x8x80xf32> to vector<8x80xf32>
    %c0_208 = arith.constant 0 : index
    %c0_209 = arith.constant 0 : index
    %264 = vector.load %arg6[%c0_208, %c0_209] : memref<80x512xf32, #tpu.memory_space<vmem>>, vector<80x512xf32>
    %cst_210 = arith.constant dense<0.000000e+00> : vector<8x512xf32>
    %265 = tpu.matmul %263, %264, %cst_210 {dimension_numbers = #tpu.dot_dimension_numbers<[1], [0], [0], [1], [0, 0, 1, 1], [], []>} : vector<8x80xf32>, vector<80x512xf32>, vector<8x512xf32> -> vector<8x512xf32>
    %cst_211 = arith.constant dense<0.000000e+00> : vector<8xf32>
    %266 = vector.multi_reduction <add>, %265, %cst_211 [1] : vector<8x512xf32> to vector<8xf32>
    %267 = vector.shape_cast %266 : vector<8xf32> to vector<8x1xf32>
    %cst_212 = arith.constant 5.120000e+02 : f32
    %268 = vector.broadcast %cst_212 : f32 to vector<8x1xf32>
    %269 = arith.divf %267, %268 : vector<8x1xf32>
    %270 = vector.broadcast %269 : vector<8x1xf32> to vector<8x512xf32>
    %271 = arith.subf %265, %270 : vector<8x512xf32>
    %272 = arith.mulf %271, %271 : vector<8x512xf32>
    %cst_213 = arith.constant dense<0.000000e+00> : vector<8xf32>
    %273 = vector.multi_reduction <add>, %272, %cst_213 [1] : vector<8x512xf32> to vector<8xf32>
    %274 = vector.shape_cast %273 : vector<8xf32> to vector<8x1xf32>
    %cst_214 = arith.constant 5.120000e+02 : f32
    %275 = vector.broadcast %cst_214 : f32 to vector<8x1xf32>
    %276 = arith.divf %274, %275 : vector<8x1xf32>
    %c3_215 = arith.constant 3 : index
    %c0_216 = arith.constant 0 : index
    %c0_217 = arith.constant 0 : index
    %277 = vector.load %arg1[%c3_215, %c0_216, %c0_217] : memref<4x8x1xf32, #tpu.memory_space<vmem>>, vector<1x8x1xf32>
    %278 = vector.shape_cast %277 : vector<1x8x1xf32> to vector<8x1xf32>
    %cst_218 = arith.constant 9.99999974E-6 : f32
    %279 = vector.broadcast %cst_218 : f32 to vector<8x1xf32>
    %280 = arith.addf %276, %279 : vector<8x1xf32>
    %281 = math.rsqrt %280 : vector<8x1xf32>
    %282 = arith.mulf %278, %281 : vector<8x1xf32>
    %c3_219 = arith.constant 3 : index
    %c0_220 = arith.constant 0 : index
    %c0_221 = arith.constant 0 : index
    %283 = vector.load %arg2[%c3_219, %c0_220, %c0_221] : memref<4x8x1xf32, #tpu.memory_space<vmem>>, vector<1x8x1xf32>
    %284 = vector.shape_cast %283 : vector<1x8x1xf32> to vector<8x1xf32>
    %285 = arith.mulf %269, %282 : vector<8x1xf32>
    %286 = arith.subf %284, %285 : vector<8x1xf32>
    %287 = vector.broadcast %282 : vector<8x1xf32> to vector<8x512xf32>
    %288 = arith.mulf %265, %287 : vector<8x512xf32>
    %289 = vector.broadcast %286 : vector<8x1xf32> to vector<8x512xf32>
    %290 = arith.addf %288, %289 : vector<8x512xf32>
    %291 = vector.extract_strided_slice %290 {offsets = [0, 0], sizes = [1, 512], strides = [1, 1]} : vector<8x512xf32> to vector<1x512xf32>
    %c0_222 = arith.constant 0 : index
    %c0_223 = arith.constant 0 : index
    %292 = vector.load %arg5[%c0_222, %c0_223] : memref<1x512xf32, #tpu.memory_space<vmem>>, vector<1x512xf32>
    tpu.vector_store %arg5[%c0_222, %c0_223], %291 {strides = array<i32>} : memref<1x512xf32, #tpu.memory_space<vmem>>, vector<1x512xf32>,
    return
  }
}

</mosaic_0001>

<llo_original>
// kernel: tpu_custom_call.1
$region0: #{tpu_custom_call.1}
  #allocation0 [shape = 'u32[]', space=smem, size = 0x4, offset = 0x4, fixed_abs, tag = 'smem constant byte address 0x4 - core index']
  #allocation1 [shape = 'u32[144,128]{1,0:T(1,128)}', space=vmem, size = 0x12000, scoped, tag = 'internal scratch']
  #allocation2 [shape = 'f32[80,512]{1,0:T(8,128)}', space=vmem, size = 0x28000, scoped, tag = 'scratch operand']
  %s0 = inlined_call_operand.hbm [shape: f32[4,8,80], index: 0, kind: input, shape index: {}]
  %s1 = inlined_call_operand.vmem [shape: f32[4,8,1], index: 1, kind: input, shape index: {}]
  %s2 = inlined_call_operand.vmem [shape: f32[4,8,1], index: 2, kind: input, shape index: {}]
  %s3 = inlined_call_operand.vmem [shape: f32[9,512], index: 3, kind: input, shape index: {}]
  %s4 = inlined_call_operand.hbm [shape: f32[8,512], index: 4, kind: input, shape index: {}]
  %s5 = inlined_call_operand.hbm [shape: f32[1,512], index: 5, kind: output, shape index: {}]
  %s6 = sld [smem:[#allocation0]]
  $region38: #{tpu_custom_call.1} parent=0
    _
  %s8 = ssub.s32 1, %s6
  %s9 = scalar_select 0, %s8, %s6
  $region1: #{tpu_custom_call.1} parent=0
    #allocation3 [shape = 'u8[16384]{0}', space=vmem, size = 0x4000, scoped, tag = 'input window, operand 0, single buffered']
    #allocation4 [shape = 's32[1]{0}', space=sflag, size = 0x4, scoped, tag = 'scoped memory for tpu_custom_call.1']
    #allocation5 [shape = 's32[1]{0}', space=sflag, size = 0x4, scoped, tag = 'scoped memory for tpu_custom_call.1']
    #allocation6 [shape = 'u8[16384]{0}', space=vmem, size = 0x4000, scoped, tag = 'input window, operand 4, single buffered']
    #allocation7 [shape = 's32[1]{0}', space=sflag, size = 0x4, scoped, tag = 'scoped memory for tpu_custom_call.1']
    #allocation8 [shape = 'u8[2048]{0}', space=vmem, size = 0x800, scoped, tag = 'output window, operand 0, single buffered']
    %10 = vsyncpa [#allocation4], 0
    %11 = vsyncpa [#allocation7], 0
    %12 = vsyncpa [#allocation5], 0
    // Predicated region
    $region2: #{tpu_custom_call.1} parent=1 // pred_check
      _
    $region3: #{tpu_custom_call.1} parent=1 // pred_check_branch
      %14 = sbr.rel (0) target = $region5
    $region4: #{tpu_custom_call.1} parent=1 // pred_region
      %s16 = ssub.s32 512, 512
      %17 = vsyncadd [#allocation4], %s16
      %s18 = sshll.u32 [#allocation3], 4
      %s19 = int_to_ptr.vmem [resolvable:$true] %s18
      %24 = dma.hbm_to_vmem [thread:$0]  %s0, 512, %s19, [#allocation4], 128, 128, 8
    $region5: #{tpu_custom_call.1} parent=1 // pred_fallthru
      _
    // Predicated region
    $region6: #{tpu_custom_call.1} parent=1 // pred_check
      _
    $region7: #{tpu_custom_call.1} parent=1 // pred_check_branch
      %26 = sbr.rel (0) target = $region9
    $region8: #{tpu_custom_call.1} parent=1 // pred_region
      _
    $region9: #{tpu_custom_call.1} parent=1 // pred_fallthru
      _
    // Predicated region
    $region10: #{tpu_custom_call.1} parent=1 // pred_check
      _
    $region11: #{tpu_custom_call.1} parent=1 // pred_check_branch
      %28 = sbr.rel (0) target = $region13
    $region12: #{tpu_custom_call.1} parent=1 // pred_region
      _
    $region13: #{tpu_custom_call.1} parent=1 // pred_fallthru
      _
    // Predicated region
    $region14: #{tpu_custom_call.1} parent=1 // pred_check
      _
    $region15: #{tpu_custom_call.1} parent=1 // pred_check_branch
      %30 = sbr.rel (0) target = $region17
    $region16: #{tpu_custom_call.1} parent=1 // pred_region
      _
    $region17: #{tpu_custom_call.1} parent=1 // pred_fallthru
      _
    // Predicated region
    $region18: #{tpu_custom_call.1} parent=1 // pred_check
      _
    $region19: #{tpu_custom_call.1} parent=1 // pred_check_branch
      %32 = sbr.rel (0) target = $region21
    $region20: #{tpu_custom_call.1} parent=1 // pred_region
      %s34 = ssub.s32 512, 512
      %35 = vsyncadd [#allocation7], %s34
      %s37 = sshll.u32 [#allocation6], 4
      %s38 = int_to_ptr.vmem [resolvable:$true] %s37
      %40 = dma.hbm_to_vmem [thread:$0]  %s4, 512, %s38, [#allocation7]
    $region21: #{tpu_custom_call.1} parent=1 // pred_fallthru
      _
    // Predicated region
    $region22: #{tpu_custom_call.1} parent=1 // pred_check
      _
    $region23: #{tpu_custom_call.1} parent=1 // pred_check_branch
      %42 = sbr.rel (0) target = $region25
    $region24: #{tpu_custom_call.1} parent=1 // pred_region
      %43 = dma.done [#allocation4], 512
    $region25: #{tpu_custom_call.1} parent=1 // pred_fallthru
      _
    // Predicated region
    $region26: #{tpu_custom_call.1} parent=1 // pred_check
      _
    $region27: #{tpu_custom_call.1} parent=1 // pred_check_branch
      %45 = sbr.rel (0) target = $region29
    $region28: #{tpu_custom_call.1} parent=1 // pred_region
      %46 = dma.done [#allocation7], 512
    $region29: #{tpu_custom_call.1} parent=1 // pred_fallthru
      _
    %47 = vst [vmem:[#allocation2] sm:$0xff] 0.0
    %48 = vst [vmem:[#allocation2 + $0x8] sm:$0xff] 0.0
    %49 = vst [vmem:[#allocation2 + $0x10] sm:$0xff] 0.0
    %50 = vst [vmem:[#allocation2 + $0x18] sm:$0xff] 0.0
    %51 = vst [vmem:[#allocation2 + $0x20] sm:$0xff] 0.0
    %52 = vst [vmem:[#allocation2 + $0x28] sm:$0xff] 0.0
    %53 = vst [vmem:[#allocation2 + $0x30] sm:$0xff] 0.0
    %54 = vst [vmem:[#allocation2 + $0x38] sm:$0xff] 0.0
    %55 = vst [vmem:[#allocation2 + $0x40] sm:$0xff] 0.0
    %56 = vst [vmem:[#allocation2 + $0x48] sm:$0xff] 0.0
    %57 = vst [vmem:[#allocation2 + $0x50] sm:$0xff] 0.0
    %58 = vst [vmem:[#allocation2 + $0x58] sm:$0xff] 0.0
    %59 = vst [vmem:[#allocation2 + $0x60] sm:$0xff] 0.0
    %60 = vst [vmem:[#allocation2 + $0x68] sm:$0xff] 0.0
    %61 = vst [vmem:[#allocation2 + $0x70] sm:$0xff] 0.0
    %62 = vst [vmem:[#allocation2 + $0x78] sm:$0xff] 0.0
    %63 = vst [vmem:[#allocation2 + $0x80] sm:$0xff] 0.0
    %64 = vst [vmem:[#allocation2 + $0x88] sm:$0xff] 0.0
    %65 = vst [vmem:[#allocation2 + $0x90] sm:$0xff] 0.0
    %66 = vst [vmem:[#allocation2 + $0x98] sm:$0xff] 0.0
    %67 = vst [vmem:[#allocation2 + $0xa0] sm:$0xff] 0.0
    %68 = vst [vmem:[#allocation2 + $0xa8] sm:$0xff] 0.0
    %69 = vst [vmem:[#allocation2 + $0xb0] sm:$0xff] 0.0
    %70 = vst [vmem:[#allocation2 + $0xb8] sm:$0xff] 0.0
    %71 = vst [vmem:[#allocation2 + $0xc0] sm:$0xff] 0.0
    %72 = vst [vmem:[#allocation2 + $0xc8] sm:$0xff] 0.0
    %73 = vst [vmem:[#allocation2 + $0xd0] sm:$0xff] 0.0
    %74 = vst [vmem:[#allocation2 + $0xd8] sm:$0xff] 0.0
    %75 = vst [vmem:[#allocation2 + $0xe0] sm:$0xff] 0.0
    %76 = vst [vmem:[#allocation2 + $0xe8] sm:$0xff] 0.0
    %77 = vst [vmem:[#allocation2 + $0xf0] sm:$0xff] 0.0
    %78 = vst [vmem:[#allocation2 + $0xf8] sm:$0xff] 0.0
    %79 = vst [vmem:[#allocation2 + $0x100] sm:$0xff] 0.0
    %80 = vst [vmem:[#allocation2 + $0x108] sm:$0xff] 0.0
    %81 = vst [vmem:[#allocation2 + $0x110] sm:$0xff] 0.0
    %82 = vst [vmem:[#allocation2 + $0x118] sm:$0xff] 0.0
    %83 = vst [vmem:[#allocation2 + $0x120] sm:$0xff] 0.0
    %84 = vst [vmem:[#allocation2 + $0x128] sm:$0xff] 0.0
    %85 = vst [vmem:[#allocation2 + $0x130] sm:$0xff] 0.0
    %86 = vst [vmem:[#allocation2 + $0x138] sm:$0xff] 0.0
    %v87 = vlaneseq
    %vm88 = vcmp.ge.s32.totalorder %v87, 0
    %vm89 = vcmp.lt.s32.totalorder %v87, 512
    %vm90 = vmand %vm88, %vm89
    %s91 = scalar_lea.vmem [#allocation2], 288
    %92 = vst.msk [vmem:[%s91] ss:$8 sm:$0xf] %vm90, 1.0
    %93 = vst.msk [vmem:[%s91] ss:$8 sm:$0x0] %vm90, 1.0
    %v94 = vld [vmem:[#allocation6] sm:$0xff]
    %v95 = vld [vmem:[#allocation6 + $0x8] sm:$0xff]
    %v96 = vld [vmem:[#allocation6 + $0x10] sm:$0xff]
    %v97 = vld [vmem:[#allocation6 + $0x18] sm:$0xff]
    %98 = vrot.lane.b32.xlu0 %v94, 17
    %v99 = vpop.permute.xlu0 %98
    %100 = vrot.lane.b32.xlu0 %v95, 17
    %v101 = vpop.permute.xlu0 %100
    %102 = vrot.lane.b32.xlu0 %v96, 17
    %v103 = vpop.permute.xlu0 %102
    %104 = vrot.lane.b32.xlu0 %v97, 17
    %v105 = vpop.permute.xlu0 %104
    %v106 = vlaneseq
    %v107 = vand.u32 %v106, 127
    %vm108 = vcmp.lt.s32.totalorder %v107, 17
    %v109 = vsel %vm108, %v103, %v105
    %v110 = vsel %vm108, %v101, %v103
    %v111 = vsel %vm108, %v99, %v101
    %v112 = vsel %vm108, %v105, %v99
    %v113 = vld [vmem:[%s3] ss:$8 sm:$0xf]
    %v115 = vlaneseq
    %v116 = vshrl.u32 %v115, 7
    %v117 = vsub.s32 0, %v116
    %v118 = vrot.slane %v113, %v117
    %v119 = vlaneseq
    %v120 = vshrl.u32 %v119, 7
    %v121 = vsub.s32 1, %v120
    %v122 = vrot.slane %v113, %v121
    %v123 = vlaneseq
    %v124 = vshrl.u32 %v123, 7
    %v125 = vsub.s32 2, %v124
    %v126 = vrot.slane %v113, %v125
    %v127 = vlaneseq
    %v128 = vshrl.u32 %v127, 7
    %v129 = vsub.s32 3, %v128
    %v130 = vrot.slane %v113, %v129
    %v135 = vmul.f32 %v112, %v118
    %v136 = vmul.f32 %v111, %v122
    %v137 = vmul.f32 %v110, %v126
    %v138 = vmul.f32 %v109, %v130
    %139 = vst [vmem:[#allocation2] sm:$0xff] %v135
    %140 = vst [vmem:[#allocation2 + $0x8] sm:$0xff] %v136
    %141 = vst [vmem:[#allocation2 + $0x10] sm:$0xff] %v137
    %142 = vst [vmem:[#allocation2 + $0x18] sm:$0xff] %v138
    %143 = vrot.lane.b32.xlu0 %v94, 16
    %v144 = vpop.permute.xlu0 %143
    %145 = vrot.lane.b32.xlu0 %v95, 16
    %v146 = vpop.permute.xlu0 %145
    %147 = vrot.lane.b32.xlu0 %v96, 16
    %v148 = vpop.permute.xlu0 %147
    %149 = vrot.lane.b32.xlu0 %v97, 16
    %v150 = vpop.permute.xlu0 %149
    %vm151 = vcmp.lt.s32.totalorder %v107, 16
    %v152 = vsel %vm151, %v148, %v150
    %v153 = vsel %vm151, %v146, %v148
    %v154 = vsel %vm151, %v144, %v146
    %v155 = vsel %vm151, %v150, %v144
    %s156 = scalar_lea.vmem %s3, 1
    %v157 = vld [vmem:[%s156] ss:$8 sm:$0xf]
    %v159 = vlaneseq
    %v160 = vshrl.u32 %v159, 7
    %v161 = vsub.s32 0, %v160
    %v162 = vrot.slane %v157, %v161
    %v163 = vlaneseq
    %v164 = vshrl.u32 %v163, 7
    %v165 = vsub.s32 1, %v164
    %v166 = vrot.slane %v157, %v165
    %v167 = vlaneseq
    %v168 = vshrl.u32 %v167, 7
    %v169 = vsub.s32 2, %v168
    %v170 = vrot.slane %v157, %v169
    %v171 = vlaneseq
    %v172 = vshrl.u32 %v171, 7
    %v173 = vsub.s32 3, %v172
    %v174 = vrot.slane %v157, %v173
    %v179 = vmul.f32 %v155, %v162
    %v180 = vmul.f32 %v154, %v166
    %v181 = vmul.f32 %v153, %v170
    %v182 = vmul.f32 %v152, %v174
    %183 = vst [vmem:[#allocation2 + $0x20] sm:$0xff] %v179
    %184 = vst [vmem:[#allocation2 + $0x28] sm:$0xff] %v180
    %185 = vst [vmem:[#allocation2 + $0x30] sm:$0xff] %v181
    %186 = vst [vmem:[#allocation2 + $0x38] sm:$0xff] %v182
    %187 = vrot.lane.b32.xlu0 %v94, 15
    %v188 = vpop.permute.xlu0 %187
    %189 = vrot.lane.b32.xlu0 %v95, 15
    %v190 = vpop.permute.xlu0 %189
    %191 = vrot.lane.b32.xlu0 %v96, 15
    %v192 = vpop.permute.xlu0 %191
    %193 = vrot.lane.b32.xlu0 %v97, 15
    %v194 = vpop.permute.xlu0 %193
    %vm195 = vcmp.lt.s32.totalorder %v107, 15
    %v196 = vsel %vm195, %v192, %v194
    %v197 = vsel %vm195, %v190, %v192
    %v198 = vsel %vm195, %v188, %v190
    %v199 = vsel %vm195, %v194, %v188
    %s200 = scalar_lea.vmem %s3, 2
    %v201 = vld [vmem:[%s200] ss:$8 sm:$0xf]
    %v203 = vlaneseq
    %v204 = vshrl.u32 %v203, 7
    %v205 = vsub.s32 0, %v204
    %v206 = vrot.slane %v201, %v205
    %v207 = vlaneseq
    %v208 = vshrl.u32 %v207, 7
    %v209 = vsub.s32 1, %v208
    %v210 = vrot.slane %v201, %v209
    %v211 = vlaneseq
    %v212 = vshrl.u32 %v211, 7
    %v213 = vsub.s32 2, %v212
    %v214 = vrot.slane %v201, %v213
    %v215 = vlaneseq
    %v216 = vshrl.u32 %v215, 7
    %v217 = vsub.s32 3, %v216
    %v218 = vrot.slane %v201, %v217
    %v223 = vmul.f32 %v199, %v206
    %v224 = vmul.f32 %v198, %v210
    %v225 = vmul.f32 %v197, %v214
    %v226 = vmul.f32 %v196, %v218
    %227 = vst [vmem:[#allocation2 + $0x40] sm:$0xff] %v223
    %228 = vst [vmem:[#allocation2 + $0x48] sm:$0xff] %v224
    %229 = vst [vmem:[#allocation2 + $0x50] sm:$0xff] %v225
    %230 = vst [vmem:[#allocation2 + $0x58] sm:$0xff] %v226
    %231 = vrot.lane.b32.xlu0 %v94, 1
    %v232 = vpop.permute.xlu0 %231
    %233 = vrot.lane.b32.xlu0 %v95, 1
    %v234 = vpop.permute.xlu0 %233
    %235 = vrot.lane.b32.xlu0 %v96, 1
    %v236 = vpop.permute.xlu0 %235
    %237 = vrot.lane.b32.xlu0 %v97, 1
    %v238 = vpop.permute.xlu0 %237
    %vm239 = vcmp.lt.s32.totalorder %v107, 1
    %v240 = vsel %vm239, %v236, %v238
    %v241 = vsel %vm239, %v234, %v236
    %v242 = vsel %vm239, %v232, %v234
    %v243 = vsel %vm239, %v238, %v232
    %s244 = scalar_lea.vmem %s3, 3
    %v245 = vld [vmem:[%s244] ss:$8 sm:$0xf]
    %v247 = vlaneseq
    %v248 = vshrl.u32 %v247, 7
    %v249 = vsub.s32 0, %v248
    %v250 = vrot.slane %v245, %v249
    %v251 = vlaneseq
    %v252 = vshrl.u32 %v251, 7
    %v253 = vsub.s32 1, %v252
    %v254 = vrot.slane %v245, %v253
    %v255 = vlaneseq
    %v256 = vshrl.u32 %v255, 7
    %v257 = vsub.s32 2, %v256
    %v258 = vrot.slane %v245, %v257
    %v259 = vlaneseq
    %v260 = vshrl.u32 %v259, 7
    %v261 = vsub.s32 3, %v260
    %v262 = vrot.slane %v245, %v261
    %v267 = vmul.f32 %v243, %v250
    %v268 = vmul.f32 %v242, %v254
    %v269 = vmul.f32 %v241, %v258
    %v270 = vmul.f32 %v240, %v262
    %271 = vst [vmem:[#allocation2 + $0x60] sm:$0xff] %v267
    %272 = vst [vmem:[#allocation2 + $0x68] sm:$0xff] %v268
    %273 = vst [vmem:[#allocation2 + $0x70] sm:$0xff] %v269
    %274 = vst [vmem:[#allocation2 + $0x78] sm:$0xff] %v270
    %275 = vst [vmem:[#allocation2 + $0x80] sm:$0xff] %v94
    %276 = vst [vmem:[#allocation2 + $0x88] sm:$0xff] %v95
    %277 = vst [vmem:[#allocation2 + $0x90] sm:$0xff] %v96
    %278 = vst [vmem:[#allocation2 + $0x98] sm:$0xff] %v97
    %279 = vrot.lane.b32.xlu0 %v94, 127
    %v280 = vpop.permute.xlu0 %279
    %281 = vrot.lane.b32.xlu0 %v95, 127
    %v282 = vpop.permute.xlu0 %281
    %283 = vrot.lane.b32.xlu0 %v96, 127
    %v284 = vpop.permute.xlu0 %283
    %285 = vrot.lane.b32.xlu0 %v97, 127
    %v286 = vpop.permute.xlu0 %285
    %vm287 = vcmp.lt.s32.totalorder %v107, 127
    %v288 = vsel %vm287, %v284, %v286
    %v289 = vsel %vm287, %v282, %v284
    %v290 = vsel %vm287, %v280, %v282
    %v291 = vsel %vm287, %v286, %v280
    %s292 = scalar_lea.vmem %s3, 5
    %v293 = vld [vmem:[%s292] ss:$8 sm:$0xf]
    %v295 = vlaneseq
    %v296 = vshrl.u32 %v295, 7
    %v297 = vsub.s32 0, %v296
    %v298 = vrot.slane %v293, %v297
    %v299 = vlaneseq
    %v300 = vshrl.u32 %v299, 7
    %v301 = vsub.s32 1, %v300
    %v302 = vrot.slane %v293, %v301
    %v303 = vlaneseq
    %v304 = vshrl.u32 %v303, 7
    %v305 = vsub.s32 2, %v304
    %v306 = vrot.slane %v293, %v305
    %v307 = vlaneseq
    %v308 = vshrl.u32 %v307, 7
    %v309 = vsub.s32 3, %v308
    %v310 = vrot.slane %v293, %v309
    %v315 = vmul.f32 %v290, %v298
    %v316 = vmul.f32 %v289, %v302
    %v317 = vmul.f32 %v288, %v306
    %v318 = vmul.f32 %v291, %v310
    %319 = vst [vmem:[#allocation2 + $0xa0] sm:$0xff] %v315
    %320 = vst [vmem:[#allocation2 + $0xa8] sm:$0xff] %v316
    %321 = vst [vmem:[#allocation2 + $0xb0] sm:$0xff] %v317
    %322 = vst [vmem:[#allocation2 + $0xb8] sm:$0xff] %v318
    %323 = vrot.lane.b32.xlu0 %v94, 113
    %v324 = vpop.permute.xlu0 %323
    %325 = vrot.lane.b32.xlu0 %v95, 113
    %v326 = vpop.permute.xlu0 %325
    %327 = vrot.lane.b32.xlu0 %v96, 113
    %v328 = vpop.permute.xlu0 %327
    %329 = vrot.lane.b32.xlu0 %v97, 113
    %v330 = vpop.permute.xlu0 %329
    %vm331 = vcmp.lt.s32.totalorder %v107, 113
    %v332 = vsel %vm331, %v328, %v330
    %v333 = vsel %vm331, %v326, %v328
    %v334 = vsel %vm331, %v324, %v326
    %v335 = vsel %vm331, %v330, %v324
    %s336 = scalar_lea.vmem %s3, 6
    %v337 = vld [vmem:[%s336] ss:$8 sm:$0xf]
    %v339 = vlaneseq
    %v340 = vshrl.u32 %v339, 7
    %v341 = vsub.s32 0, %v340
    %v342 = vrot.slane %v337, %v341
    %v343 = vlaneseq
    %v344 = vshrl.u32 %v343, 7
    %v345 = vsub.s32 1, %v344
    %v346 = vrot.slane %v337, %v345
    %v347 = vlaneseq
    %v348 = vshrl.u32 %v347, 7
    %v349 = vsub.s32 2, %v348
    %v350 = vrot.slane %v337, %v349
    %v351 = vlaneseq
    %v352 = vshrl.u32 %v351, 7
    %v353 = vsub.s32 3, %v352
    %v354 = vrot.slane %v337, %v353
    %v359 = vmul.f32 %v334, %v342
    %v360 = vmul.f32 %v333, %v346
    %v361 = vmul.f32 %v332, %v350
    %v362 = vmul.f32 %v335, %v354
    %363 = vst [vmem:[#allocation2 + $0xc0] sm:$0xff] %v359
    %364 = vst [vmem:[#allocation2 + $0xc8] sm:$0xff] %v360
    %365 = vst [vmem:[#allocation2 + $0xd0] sm:$0xff] %v361
    %366 = vst [vmem:[#allocation2 + $0xd8] sm:$0xff] %v362
    %367 = vrot.lane.b32.xlu0 %v94, 112
    %v368 = vpop.permute.xlu0 %367
    %369 = vrot.lane.b32.xlu0 %v95, 112
    %v370 = vpop.permute.xlu0 %369
    %371 = vrot.lane.b32.xlu0 %v96, 112
    %v372 = vpop.permute.xlu0 %371
    %373 = vrot.lane.b32.xlu0 %v97, 112
    %v374 = vpop.permute.xlu0 %373
    %vm375 = vcmp.lt.s32.totalorder %v107, 112
    %v376 = vsel %vm375, %v372, %v374
    %v377 = vsel %vm375, %v370, %v372
    %v378 = vsel %vm375, %v368, %v370
    %v379 = vsel %vm375, %v374, %v368
    %s380 = scalar_lea.vmem %s3, 7
    %v381 = vld [vmem:[%s380] ss:$8 sm:$0xf]
    %v383 = vlaneseq
    %v384 = vshrl.u32 %v383, 7
    %v385 = vsub.s32 0, %v384
    %v386 = vrot.slane %v381, %v385
    %v387 = vlaneseq
    %v388 = vshrl.u32 %v387, 7
    %v389 = vsub.s32 1, %v388
    %v390 = vrot.slane %v381, %v389
    %v391 = vlaneseq
    %v392 = vshrl.u32 %v391, 7
    %v393 = vsub.s32 2, %v392
    %v394 = vrot.slane %v381, %v393
    %v395 = vlaneseq
    %v396 = vshrl.u32 %v395, 7
    %v397 = vsub.s32 3, %v396
    %v398 = vrot.slane %v381, %v397
    %v403 = vmul.f32 %v378, %v386
    %v404 = vmul.f32 %v377, %v390
    %v405 = vmul.f32 %v376, %v394
    %v406 = vmul.f32 %v379, %v398
    %407 = vst [vmem:[#allocation2 + $0xe0] sm:$0xff] %v403
    %408 = vst [vmem:[#allocation2 + $0xe8] sm:$0xff] %v404
    %409 = vst [vmem:[#allocation2 + $0xf0] sm:$0xff] %v405
    %410 = vst [vmem:[#allocation2 + $0xf8] sm:$0xff] %v406
    %411 = vrot.lane.b32.xlu0 %v94, 111
    %v412 = vpop.permute.xlu0 %411
    %413 = vrot.lane.b32.xlu0 %v95, 111
    %v414 = vpop.permute.xlu0 %413
    %415 = vrot.lane.b32.xlu0 %v96, 111
    %v416 = vpop.permute.xlu0 %415
    %417 = vrot.lane.b32.xlu0 %v97, 111
    %v418 = vpop.permute.xlu0 %417
    %vm419 = vcmp.lt.s32.totalorder %v107, 111
    %v420 = vsel %vm419, %v416, %v418
    %v421 = vsel %vm419, %v414, %v416
    %v422 = vsel %vm419, %v412, %v414
    %v423 = vsel %vm419, %v418, %v412
    %s424 = scalar_lea.vmem %s3, 32
    %v425 = vld [vmem:[%s424] ss:$8 sm:$0xf]
    %v427 = vlaneseq
    %v428 = vshrl.u32 %v427, 7
    %v429 = vsub.s32 0, %v428
    %v430 = vrot.slane %v425, %v429
    %v431 = vlaneseq
    %v432 = vshrl.u32 %v431, 7
    %v433 = vsub.s32 1, %v432
    %v434 = vrot.slane %v425, %v433
    %v435 = vlaneseq
    %v436 = vshrl.u32 %v435, 7
    %v437 = vsub.s32 2, %v436
    %v438 = vrot.slane %v425, %v437
    %v439 = vlaneseq
    %v440 = vshrl.u32 %v439, 7
    %v441 = vsub.s32 3, %v440
    %v442 = vrot.slane %v425, %v441
    %v447 = vmul.f32 %v422, %v430
    %v448 = vmul.f32 %v421, %v434
    %v449 = vmul.f32 %v420, %v438
    %v450 = vmul.f32 %v423, %v442
    %451 = vst [vmem:[#allocation2 + $0x100] sm:$0xff] %v447
    %452 = vst [vmem:[#allocation2 + $0x108] sm:$0xff] %v448
    %453 = vst [vmem:[#allocation2 + $0x110] sm:$0xff] %v449
    %454 = vst [vmem:[#allocation2 + $0x118] sm:$0xff] %v450
    %v455 = vld [vmem:[#allocation3] sm:$0xff]
    %v456 = vld [vmem:[#allocation2] sm:$0xff]
    %v457 = vld [vmem:[#allocation2 + $0x8] sm:$0xff]
    %v458 = vld [vmem:[#allocation2 + $0x10] sm:$0xff]
    %v459 = vld [vmem:[#allocation2 + $0x18] sm:$0xff]
    %v460 = vld [vmem:[#allocation2 + $0x20] sm:$0xff]
    %v461 = vld [vmem:[#allocation2 + $0x28] sm:$0xff]
    %v462 = vld [vmem:[#allocation2 + $0x30] sm:$0xff]
    %v463 = vld [vmem:[#allocation2 + $0x38] sm:$0xff]
    %v464 = vld [vmem:[#allocation2 + $0x40] sm:$0xff]
    %v465 = vld [vmem:[#allocation2 + $0x48] sm:$0xff]
    %v466 = vld [vmem:[#allocation2 + $0x50] sm:$0xff]
    %v467 = vld [vmem:[#allocation2 + $0x58] sm:$0xff]
    %v468 = vld [vmem:[#allocation2 + $0x60] sm:$0xff]
    %v469 = vld [vmem:[#allocation2 + $0x68] sm:$0xff]
    %v470 = vld [vmem:[#allocation2 + $0x70] sm:$0xff]
    %v471 = vld [vmem:[#allocation2 + $0x78] sm:$0xff]
    %v472 = vld [vmem:[#allocation2 + $0x80] sm:$0xff]
    %v473 = vld [vmem:[#allocation2 + $0x88] sm:$0xff]
    %v474 = vld [vmem:[#allocation2 + $0x90] sm:$0xff]
    %v475 = vld [vmem:[#allocation2 + $0x98] sm:$0xff]
    %v476 = vld [vmem:[#allocation2 + $0xa0] sm:$0xff]
    %v477 = vld [vmem:[#allocation2 + $0xa8] sm:$0xff]
    %v478 = vld [vmem:[#allocation2 + $0xb0] sm:$0xff]
    %v479 = vld [vmem:[#allocation2 + $0xb8] sm:$0xff]
    %v480 = vld [vmem:[#allocation2 + $0xc0] sm:$0xff]
    %v481 = vld [vmem:[#allocation2 + $0xc8] sm:$0xff]
    %v482 = vld [vmem:[#allocation2 + $0xd0] sm:$0xff]
    %v483 = vld [vmem:[#allocation2 + $0xd8] sm:$0xff]
    %v484 = vld [vmem:[#allocation2 + $0xe0] sm:$0xff]
    %v485 = vld [vmem:[#allocation2 + $0xe8] sm:$0xff]
    %v486 = vld [vmem:[#allocation2 + $0xf0] sm:$0xff]
    %v487 = vld [vmem:[#allocation2 + $0xf8] sm:$0xff]
    %v488 = vld [vmem:[#allocation2 + $0x100] sm:$0xff]
    %v489 = vld [vmem:[#allocation2 + $0x108] sm:$0xff]
    %v490 = vld [vmem:[#allocation2 + $0x110] sm:$0xff]
    %v491 = vld [vmem:[#allocation2 + $0x118] sm:$0xff]
    %v492 = vld [vmem:[#allocation2 + $0x120] sm:$0xff]
    %v493 = vld [vmem:[#allocation2 + $0x128] sm:$0xff]
    %v494 = vld [vmem:[#allocation2 + $0x130] sm:$0xff]
    %v495 = vld [vmem:[#allocation2 + $0x138] sm:$0xff]
    %vm496 = vcmask 654336
    %v498 = vsel %vm496, %v455, 0
    %500 = vmatprep.subr.mxu0 %v457
    %501 = vmatpush1.msra.mxu0 %v456
    %502 = vmatprep.subr.mxu0 %v461
    %503 = vmatpush1.msra.mxu0 %v460
    %504 = vmatprep.subr.mxu0 %v465
    %505 = vmatpush1.msra.mxu0 %v464
    %506 = vmatprep.subr.mxu0 %v469
    %507 = vmatpush1.msra.mxu0 %v468
    %508 = vmatprep.subr.mxu0 %v473
    %509 = vmatpush1.msra.mxu0 %v472
    %510 = vmatprep.subr.mxu0 %v477
    %511 = vmatpush1.msra.mxu0 %v476
    %512 = vmatprep.subr.mxu0 %v481
    %513 = vmatpush1.msra.mxu0 %v480
    %514 = vmatprep.subr.mxu0 %v485
    %515 = vmatpush1.msra.mxu0 %v484
    %516 = vmatprep.subr.mxu0 %v489
    %517 = vmatpush1.msra.mxu0 %v488
    %518 = vmatprep.subr.mxu0 %v493
    %519 = vmatpush1.msra.mxu0 %v492
    %520 = vmatprep.subr.mxu0 0.0
    %521 = vmatpush1.msra.mxu0 0.0
    %522 = vmatprep.subr.mxu0 0.0
    %523 = vmatpush1.msra.mxu0 0.0
    %524 = vmatprep.subr.mxu0 0.0
    %525 = vmatpush1.msra.mxu0 0.0
    %526 = vmatprep.subr.mxu0 0.0
    %527 = vmatpush1.msra.mxu0 0.0
    %528 = vmatprep.subr.mxu0 0.0
    %529 = vmatpush1.msra.mxu0 0.0
    %530 = vmatprep.subr.mxu0 0.0
    %531 = vmatpush1.msra.mxu0 0.0
    %532 = vmatprep.subr.mxu0 0.0
    %533 = vmatpush1.msra.mxu0 0.0
    %534 = vmatprep.subr.mxu0 0.0
    %535 = vmatpush1.msra.mxu0 0.0
    %536 = vmatprep.subr.mxu0 0.0
    %537 = vmatpush1.msra.mxu0 0.0
    %538 = vmatprep.subr.mxu0 0.0
    %539 = vmatpush1.msra.mxu0 0.0
    %540 = vmatprep.subr.mxu0 0.0
    %541 = vmatpush1.msra.mxu0 0.0
    %542 = vmatprep.subr.mxu0 0.0
    %543 = vmatpush1.msra.mxu0 0.0
    %544 = vmatprep.subr.mxu0 0.0
    %545 = vmatpush1.msra.mxu0 0.0
    %546 = vmatprep.subr.mxu0 0.0
    %547 = vmatpush1.msra.mxu0 0.0
    %548 = vmatprep.subr.mxu0 0.0
    %549 = vmatpush1.msra.mxu0 0.0
    %550 = vmatprep.subr.mxu0 0.0
    %551 = vmatpush1.msra.mxu0 0.0
    %552 = vmatprep.subr.mxu0 0.0
    %553 = vmatpush1.msra.mxu0 0.0
    %554 = vmatprep.subr.mxu0 0.0
    %555 = vmatpush1.msra.mxu0 0.0
    %556 = vmatprep.subr.mxu0 0.0
    %557 = vmatpush1.msra.mxu0 0.0
    %558 = vmatprep.subr.mxu0 0.0
    %559 = vmatpush1.msra.mxu0 0.0
    %560 = vmatprep.subr.mxu0 0.0
    %561 = vmatpush1.msra.mxu0 0.0
    %562 = vmatprep.subr.mxu0 0.0
    %563 = vmatpush1.msra.mxu0 0.0
    %564 = vmatprep.mubr.f32.mxu0 0.0
    %565 = vmatmul.mubr.f32.gmra.mrb[0].mxu0 %v498
    %v566 = vpop.f32.mrb[0].mxu0
    %v567 = vadd.f32 0.0, %v566
    %v568 = vpop.f32.mrb[0].mxu0
    %v569 = vadd.f32 0.0, %v568
    %570 = vdwg.mxu0
    %571 = vmatprep.subr.mxu0 %v459
    %572 = vmatpush1.msra.mxu0 %v458
    %573 = vmatprep.subr.mxu0 %v463
    %574 = vmatpush1.msra.mxu0 %v462
    %575 = vmatprep.subr.mxu0 %v467
    %576 = vmatpush1.msra.mxu0 %v466
    %577 = vmatprep.subr.mxu0 %v471
    %578 = vmatpush1.msra.mxu0 %v470
    %579 = vmatprep.subr.mxu0 %v475
    %580 = vmatpush1.msra.mxu0 %v474
    %581 = vmatprep.subr.mxu0 %v479
    %582 = vmatpush1.msra.mxu0 %v478
    %583 = vmatprep.subr.mxu0 %v483
    %584 = vmatpush1.msra.mxu0 %v482
    %585 = vmatprep.subr.mxu0 %v487
    %586 = vmatpush1.msra.mxu0 %v486
    %587 = vmatprep.subr.mxu0 %v491
    %588 = vmatpush1.msra.mxu0 %v490
    %589 = vmatprep.subr.mxu0 %v495
    %590 = vmatpush1.msra.mxu0 %v494
    %591 = vmatprep.subr.mxu0 0.0
    %592 = vmatpush1.msra.mxu0 0.0
    %593 = vmatprep.subr.mxu0 0.0
    %594 = vmatpush1.msra.mxu0 0.0
    %595 = vmatprep.subr.mxu0 0.0
    %596 = vmatpush1.msra.mxu0 0.0
    %597 = vmatprep.subr.mxu0 0.0
    %598 = vmatpush1.msra.mxu0 0.0
    %599 = vmatprep.subr.mxu0 0.0
    %600 = vmatpush1.msra.mxu0 0.0
    %601 = vmatprep.subr.mxu0 0.0
    %602 = vmatpush1.msra.mxu0 0.0
    %603 = vmatprep.subr.mxu0 0.0
    %604 = vmatpush1.msra.mxu0 0.0
    %605 = vmatprep.subr.mxu0 0.0
    %606 = vmatpush1.msra.mxu0 0.0
    %607 = vmatprep.subr.mxu0 0.0
    %608 = vmatpush1.msra.mxu0 0.0
    %609 = vmatprep.subr.mxu0 0.0
    %610 = vmatpush1.msra.mxu0 0.0
    %611 = vmatprep.subr.mxu0 0.0
    %612 = vmatpush1.msra.mxu0 0.0
    %613 = vmatprep.subr.mxu0 0.0
    %614 = vmatpush1.msra.mxu0 0.0
    %615 = vmatprep.subr.mxu0 0.0
    %616 = vmatpush1.msra.mxu0 0.0
    %617 = vmatprep.subr.mxu0 0.0
    %618 = vmatpush1.msra.mxu0 0.0
    %619 = vmatprep.subr.mxu0 0.0
    %620 = vmatpush1.msra.mxu0 0.0
    %621 = vmatprep.subr.mxu0 0.0
    %622 = vmatpush1.msra.mxu0 0.0
    %623 = vmatprep.subr.mxu0 0.0
    %624 = vmatpush1.msra.mxu0 0.0
    %625 = vmatprep.subr.mxu0 0.0
    %626 = vmatpush1.msra.mxu0 0.0
    %627 = vmatprep.subr.mxu0 0.0
    %628 = vmatpush1.msra.mxu0 0.0
    %629 = vmatprep.subr.mxu0 0.0
    %630 = vmatpush1.msra.mxu0 0.0
    %631 = vmatprep.subr.mxu0 0.0
    %632 = vmatpush1.msra.mxu0 0.0
    %633 = vmatprep.subr.mxu0 0.0
    %634 = vmatpush1.msra.mxu0 0.0
    %635 = vmatprep.mubr.f32.mxu0 0.0
    %636 = vmatmul.mubr.f32.gmra.mrb[0].mxu0 %v498
    %v637 = vpop.f32.mrb[0].mxu0
    %v638 = vadd.f32 0.0, %v637
    %v639 = vpop.f32.mrb[0].mxu0
    %v640 = vadd.f32 0.0, %v639
    %641 = vdwg.mxu0
    %v642 = vadd.f32 %v567, %v569
    %v643 = vadd.f32 %v642, %v638
    %v644 = vadd.f32 %v643, %v640
    %645 = vadd.xlane.f32.xlu0 %v644
    %v646 = vpop.xlane.xlu0 %645
    %v647 = vrcp.pop 512.0
    %v648 = vmul.f32 %v646, %v647
    %v649 = vsub.f32 %v567, %v648
    %v650 = vsub.f32 %v569, %v648
    %v651 = vsub.f32 %v638, %v648
    %v652 = vsub.f32 %v640, %v648
    %v653 = vmul.f32 %v649, %v649
    %v654 = vmul.f32 %v650, %v650
    %v655 = vmul.f32 %v651, %v651
    %v656 = vmul.f32 %v652, %v652
    %v657 = vadd.f32 %v653, %v654
    %v658 = vadd.f32 %v657, %v655
    %v659 = vadd.f32 %v658, %v656
    %660 = vadd.xlane.f32.xlu0 %v659
    %v661 = vpop.xlane.xlu0 %660
    %v662 = vmul.f32 %v661, %v647
    %v663 = vld [vmem:[%s1] sm:$0xff]
    %v664 = vadd.f32 %v662, 1e-05
    %v665 = vrsqrt.pop %v664
    %v666 = vmul.f32 %v663, %v665
    %v667 = vld [vmem:[%s2] sm:$0xff]
    %v668 = vmul.f32 %v648, %v666
    %v669 = vsub.f32 %v667, %v668
    %671 = vset.pattern.permute.xlu0 0
    %672 = vperm.xlu0 %671, %v666
    %v673 = vpop.permute.xlu0 %672
    %v675 = vmul.f32 %v567, %v673
    %v676 = vmul.f32 %v569, %v673
    %v677 = vmul.f32 %v638, %v673
    %v678 = vmul.f32 %v640, %v673
    %680 = vset.pattern.permute.xlu0 0
    %681 = vperm.xlu0 %680, %v669
    %v682 = vpop.permute.xlu0 %681
    %v684 = vadd.f32 %v675, %v682
    %v685 = vadd.f32 %v676, %v682
    %v686 = vadd.f32 %v677, %v682
    %v687 = vadd.f32 %v678, %v682
    %v688 = vmax.f32 %v684, 0.0
    %v689 = vmax.f32 %v685, 0.0
    %v690 = vmax.f32 %v686, 0.0
    %v691 = vmax.f32 %v687, 0.0
    %692 = vrot.lane.b32.xlu0 %v688, 17
    %v693 = vpop.permute.xlu0 %692
    %694 = vrot.lane.b32.xlu0 %v689, 17
    %v695 = vpop.permute.xlu0 %694
    %696 = vrot.lane.b32.xlu0 %v690, 17
    %v697 = vpop.permute.xlu0 %696
    %698 = vrot.lane.b32.xlu0 %v691, 17
    %v699 = vpop.permute.xlu0 %698
    %v700 = vsel %vm108, %v697, %v699
    %v701 = vsel %vm108, %v695, %v697
    %v702 = vsel %vm108, %v693, %v695
    %v703 = vsel %vm108, %v699, %v693
    %v704 = vld [vmem:[%s3] ss:$8 sm:$0xf]
    %v706 = vlaneseq
    %v707 = vshrl.u32 %v706, 7
    %v708 = vsub.s32 0, %v707
    %v709 = vrot.slane %v704, %v708
    %v710 = vlaneseq
    %v711 = vshrl.u32 %v710, 7
    %v712 = vsub.s32 1, %v711
    %v713 = vrot.slane %v704, %v712
    %v714 = vlaneseq
    %v715 = vshrl.u32 %v714, 7
    %v716 = vsub.s32 2, %v715
    %v717 = vrot.slane %v704, %v716
    %v718 = vlaneseq
    %v719 = vshrl.u32 %v718, 7
    %v720 = vsub.s32 3, %v719
    %v721 = vrot.slane %v704, %v720
    %v726 = vmul.f32 %v703, %v709
    %v727 = vmul.f32 %v702, %v713
    %v728 = vmul.f32 %v701, %v717
    %v729 = vmul.f32 %v700, %v721
    %730 = vst [vmem:[#allocation2] sm:$0xff] %v726
    %731 = vst [vmem:[#allocation2 + $0x8] sm:$0xff] %v727
    %732 = vst [vmem:[#allocation2 + $0x10] sm:$0xff] %v728
    %733 = vst [vmem:[#allocation2 + $0x18] sm:$0xff] %v729
    %734 = vrot.lane.b32.xlu0 %v688, 16
    %v735 = vpop.permute.xlu0 %734
    %736 = vrot.lane.b32.xlu0 %v689, 16
    %v737 = vpop.permute.xlu0 %736
    %738 = vrot.lane.b32.xlu0 %v690, 16
    %v739 = vpop.permute.xlu0 %738
    %740 = vrot.lane.b32.xlu0 %v691, 16
    %v741 = vpop.permute.xlu0 %740
    %v742 = vsel %vm151, %v739, %v741
    %v743 = vsel %vm151, %v737, %v739
    %v744 = vsel %vm151, %v735, %v737
    %v745 = vsel %vm151, %v741, %v735
    %v746 = vld [vmem:[%s156] ss:$8 sm:$0xf]
    %v748 = vlaneseq
    %v749 = vshrl.u32 %v748, 7
    %v750 = vsub.s32 0, %v749
    %v751 = vrot.slane %v746, %v750
    %v752 = vlaneseq
    %v753 = vshrl.u32 %v752, 7
    %v754 = vsub.s32 1, %v753
    %v755 = vrot.slane %v746, %v754
    %v756 = vlaneseq
    %v757 = vshrl.u32 %v756, 7
    %v758 = vsub.s32 2, %v757
    %v759 = vrot.slane %v746, %v758
    %v760 = vlaneseq
    %v761 = vshrl.u32 %v760, 7
    %v762 = vsub.s32 3, %v761
    %v763 = vrot.slane %v746, %v762
    %v768 = vmul.f32 %v745, %v751
    %v769 = vmul.f32 %v744, %v755
    %v770 = vmul.f32 %v743, %v759
    %v771 = vmul.f32 %v742, %v763
    %772 = vst [vmem:[#allocation2 + $0x20] sm:$0xff] %v768
    %773 = vst [vmem:[#allocation2 + $0x28] sm:$0xff] %v769
    %774 = vst [vmem:[#allocation2 + $0x30] sm:$0xff] %v770
    %775 = vst [vmem:[#allocation2 + $0x38] sm:$0xff] %v771
    %776 = vrot.lane.b32.xlu0 %v688, 15
    %v777 = vpop.permute.xlu0 %776
    %778 = vrot.lane.b32.xlu0 %v689, 15
    %v779 = vpop.permute.xlu0 %778
    %780 = vrot.lane.b32.xlu0 %v690, 15
    %v781 = vpop.permute.xlu0 %780
    %782 = vrot.lane.b32.xlu0 %v691, 15
    %v783 = vpop.permute.xlu0 %782
    %v784 = vsel %vm195, %v781, %v783
    %v785 = vsel %vm195, %v779, %v781
    %v786 = vsel %vm195, %v777, %v779
    %v787 = vsel %vm195, %v783, %v777
    %v788 = vld [vmem:[%s200] ss:$8 sm:$0xf]
    %v790 = vlaneseq
    %v791 = vshrl.u32 %v790, 7
    %v792 = vsub.s32 0, %v791
    %v793 = vrot.slane %v788, %v792
    %v794 = vlaneseq
    %v795 = vshrl.u32 %v794, 7
    %v796 = vsub.s32 1, %v795
    %v797 = vrot.slane %v788, %v796
    %v798 = vlaneseq
    %v799 = vshrl.u32 %v798, 7
    %v800 = vsub.s32 2, %v799
    %v801 = vrot.slane %v788, %v800
    %v802 = vlaneseq
    %v803 = vshrl.u32 %v802, 7
    %v804 = vsub.s32 3, %v803
    %v805 = vrot.slane %v788, %v804
    %v810 = vmul.f32 %v787, %v793
    %v811 = vmul.f32 %v786, %v797
    %v812 = vmul.f32 %v785, %v801
    %v813 = vmul.f32 %v784, %v805
    %814 = vst [vmem:[#allocation2 + $0x40] sm:$0xff] %v810
    %815 = vst [vmem:[#allocation2 + $0x48] sm:$0xff] %v811
    %816 = vst [vmem:[#allocation2 + $0x50] sm:$0xff] %v812
    %817 = vst [vmem:[#allocation2 + $0x58] sm:$0xff] %v813
    %818 = vrot.lane.b32.xlu0 %v688, 1
    %v819 = vpop.permute.xlu0 %818
    %820 = vrot.lane.b32.xlu0 %v689, 1
    %v821 = vpop.permute.xlu0 %820
    %822 = vrot.lane.b32.xlu0 %v690, 1
    %v823 = vpop.permute.xlu0 %822
    %824 = vrot.lane.b32.xlu0 %v691, 1
    %v825 = vpop.permute.xlu0 %824
    %v826 = vsel %vm239, %v823, %v825
    %v827 = vsel %vm239, %v821, %v823
    %v828 = vsel %vm239, %v819, %v821
    %v829 = vsel %vm239, %v825, %v819
    %v830 = vld [vmem:[%s244] ss:$8 sm:$0xf]
    %v832 = vlaneseq
    %v833 = vshrl.u32 %v832, 7
    %v834 = vsub.s32 0, %v833
    %v835 = vrot.slane %v830, %v834
    %v836 = vlaneseq
    %v837 = vshrl.u32 %v836, 7
    %v838 = vsub.s32 1, %v837
    %v839 = vrot.slane %v830, %v838
    %v840 = vlaneseq
    %v841 = vshrl.u32 %v840, 7
    %v842 = vsub.s32 2, %v841
    %v843 = vrot.slane %v830, %v842
    %v844 = vlaneseq
    %v845 = vshrl.u32 %v844, 7
    %v846 = vsub.s32 3, %v845
    %v847 = vrot.slane %v830, %v846
    %v852 = vmul.f32 %v829, %v835
    %v853 = vmul.f32 %v828, %v839
    %v854 = vmul.f32 %v827, %v843
    %v855 = vmul.f32 %v826, %v847
    %856 = vst [vmem:[#allocation2 + $0x60] sm:$0xff] %v852
    %857 = vst [vmem:[#allocation2 + $0x68] sm:$0xff] %v853
    %858 = vst [vmem:[#allocation2 + $0x70] sm:$0xff] %v854
    %859 = vst [vmem:[#allocation2 + $0x78] sm:$0xff] %v855
    %860 = vst [vmem:[#allocation2 + $0x80] sm:$0xff] %v688
    %861 = vst [vmem:[#allocation2 + $0x88] sm:$0xff] %v689
    %862 = vst [vmem:[#allocation2 + $0x90] sm:$0xff] %v690
    %863 = vst [vmem:[#allocation2 + $0x98] sm:$0xff] %v691
    %864 = vrot.lane.b32.xlu0 %v688, 127
    %v865 = vpop.permute.xlu0 %864
    %866 = vrot.lane.b32.xlu0 %v689, 127
    %v867 = vpop.permute.xlu0 %866
    %868 = vrot.lane.b32.xlu0 %v690, 127
    %v869 = vpop.permute.xlu0 %868
    %870 = vrot.lane.b32.xlu0 %v691, 127
    %v871 = vpop.permute.xlu0 %870
    %v872 = vsel %vm287, %v869, %v871
    %v873 = vsel %vm287, %v867, %v869
    %v874 = vsel %vm287, %v865, %v867
    %v875 = vsel %vm287, %v871, %v865
    %v876 = vld [vmem:[%s292] ss:$8 sm:$0xf]
    %v878 = vlaneseq
    %v879 = vshrl.u32 %v878, 7
    %v880 = vsub.s32 0, %v879
    %v881 = vrot.slane %v876, %v880
    %v882 = vlaneseq
    %v883 = vshrl.u32 %v882, 7
    %v884 = vsub.s32 1, %v883
    %v885 = vrot.slane %v876, %v884
    %v886 = vlaneseq
    %v887 = vshrl.u32 %v886, 7
    %v888 = vsub.s32 2, %v887
    %v889 = vrot.slane %v876, %v888
    %v890 = vlaneseq
    %v891 = vshrl.u32 %v890, 7
    %v892 = vsub.s32 3, %v891
    %v893 = vrot.slane %v876, %v892
    %v898 = vmul.f32 %v874, %v881
    %v899 = vmul.f32 %v873, %v885
    %v900 = vmul.f32 %v872, %v889
    %v901 = vmul.f32 %v875, %v893
    %902 = vst [vmem:[#allocation2 + $0xa0] sm:$0xff] %v898
    %903 = vst [vmem:[#allocation2 + $0xa8] sm:$0xff] %v899
    %904 = vst [vmem:[#allocation2 + $0xb0] sm:$0xff] %v900
    %905 = vst [vmem:[#allocation2 + $0xb8] sm:$0xff] %v901
    %906 = vrot.lane.b32.xlu0 %v688, 113
    %v907 = vpop.permute.xlu0 %906
    %908 = vrot.lane.b32.xlu0 %v689, 113
    %v909 = vpop.permute.xlu0 %908
    %910 = vrot.lane.b32.xlu0 %v690, 113
    %v911 = vpop.permute.xlu0 %910
    %912 = vrot.lane.b32.xlu0 %v691, 113
    %v913 = vpop.permute.xlu0 %912
    %v914 = vsel %vm331, %v911, %v913
    %v915 = vsel %vm331, %v909, %v911
    %v916 = vsel %vm331, %v907, %v909
    %v917 = vsel %vm331, %v913, %v907
    %v918 = vld [vmem:[%s336] ss:$8 sm:$0xf]
    %v920 = vlaneseq
    %v921 = vshrl.u32 %v920, 7
    %v922 = vsub.s32 0, %v921
    %v923 = vrot.slane %v918, %v922
    %v924 = vlaneseq
    %v925 = vshrl.u32 %v924, 7
    %v926 = vsub.s32 1, %v925
    %v927 = vrot.slane %v918, %v926
    %v928 = vlaneseq
    %v929 = vshrl.u32 %v928, 7
    %v930 = vsub.s32 2, %v929
    %v931 = vrot.slane %v918, %v930
    %v932 = vlaneseq
    %v933 = vshrl.u32 %v932, 7
    %v934 = vsub.s32 3, %v933
    %v935 = vrot.slane %v918, %v934
    %v940 = vmul.f32 %v916, %v923
    %v941 = vmul.f32 %v915, %v927
    %v942 = vmul.f32 %v914, %v931
    %v943 = vmul.f32 %v917, %v935
    %944 = vst [vmem:[#allocation2 + $0xc0] sm:$0xff] %v940
    %945 = vst [vmem:[#allocation2 + $0xc8] sm:$0xff] %v941
    %946 = vst [vmem:[#allocation2 + $0xd0] sm:$0xff] %v942
    %947 = vst [vmem:[#allocation2 + $0xd8] sm:$0xff] %v943
    %948 = vrot.lane.b32.xlu0 %v688, 112
    %v949 = vpop.permute.xlu0 %948
    %950 = vrot.lane.b32.xlu0 %v689, 112
    %v951 = vpop.permute.xlu0 %950
    %952 = vrot.lane.b32.xlu0 %v690, 112
    %v953 = vpop.permute.xlu0 %952
    %954 = vrot.lane.b32.xlu0 %v691, 112
    %v955 = vpop.permute.xlu0 %954
    %v956 = vsel %vm375, %v953, %v955
    %v957 = vsel %vm375, %v951, %v953
    %v958 = vsel %vm375, %v949, %v951
    %v959 = vsel %vm375, %v955, %v949
    %v960 = vld [vmem:[%s380] ss:$8 sm:$0xf]
    %v962 = vlaneseq
    %v963 = vshrl.u32 %v962, 7
    %v964 = vsub.s32 0, %v963
    %v965 = vrot.slane %v960, %v964
    %v966 = vlaneseq
    %v967 = vshrl.u32 %v966, 7
    %v968 = vsub.s32 1, %v967
    %v969 = vrot.slane %v960, %v968
    %v970 = vlaneseq
    %v971 = vshrl.u32 %v970, 7
    %v972 = vsub.s32 2, %v971
    %v973 = vrot.slane %v960, %v972
    %v974 = vlaneseq
    %v975 = vshrl.u32 %v974, 7
    %v976 = vsub.s32 3, %v975
    %v977 = vrot.slane %v960, %v976
    %v982 = vmul.f32 %v958, %v965
    %v983 = vmul.f32 %v957, %v969
    %v984 = vmul.f32 %v956, %v973
    %v985 = vmul.f32 %v959, %v977
    %986 = vst [vmem:[#allocation2 + $0xe0] sm:$0xff] %v982
    %987 = vst [vmem:[#allocation2 + $0xe8] sm:$0xff] %v983
    %988 = vst [vmem:[#allocation2 + $0xf0] sm:$0xff] %v984
    %989 = vst [vmem:[#allocation2 + $0xf8] sm:$0xff] %v985
    %990 = vrot.lane.b32.xlu0 %v688, 111
    %v991 = vpop.permute.xlu0 %990
    %992 = vrot.lane.b32.xlu0 %v689, 111
    %v993 = vpop.permute.xlu0 %992
    %994 = vrot.lane.b32.xlu0 %v690, 111
    %v995 = vpop.permute.xlu0 %994
    %996 = vrot.lane.b32.xlu0 %v691, 111
    %v997 = vpop.permute.xlu0 %996
    %v998 = vsel %vm419, %v995, %v997
    %v999 = vsel %vm419, %v993, %v995
    %v1000 = vsel %vm419, %v991, %v993
    %v1001 = vsel %vm419, %v997, %v991
    %v1002 = vld [vmem:[%s424] ss:$8 sm:$0xf]
    %v1004 = vlaneseq
    %v1005 = vshrl.u32 %v1004, 7
    %v1006 = vsub.s32 0, %v1005
    %v1007 = vrot.slane %v1002, %v1006
    %v1008 = vlaneseq
    %v1009 = vshrl.u32 %v1008, 7
    %v1010 = vsub.s32 1, %v1009
    %v1011 = vrot.slane %v1002, %v1010
    %v1012 = vlaneseq
    %v1013 = vshrl.u32 %v1012, 7
    %v1014 = vsub.s32 2, %v1013
    %v1015 = vrot.slane %v1002, %v1014
    %v1016 = vlaneseq
    %v1017 = vshrl.u32 %v1016, 7
    %v1018 = vsub.s32 3, %v1017
    %v1019 = vrot.slane %v1002, %v1018
    %v1024 = vmul.f32 %v1000, %v1007
    %v1025 = vmul.f32 %v999, %v1011
    %v1026 = vmul.f32 %v998, %v1015
    %v1027 = vmul.f32 %v1001, %v1019
    %1028 = vst [vmem:[#allocation2 + $0x100] sm:$0xff] %v1024
    %1029 = vst [vmem:[#allocation2 + $0x108] sm:$0xff] %v1025
    %1030 = vst [vmem:[#allocation2 + $0x110] sm:$0xff] %v1026
    %1031 = vst [vmem:[#allocation2 + $0x118] sm:$0xff] %v1027
    %s1032 = scalar_lea.vmem [#allocation3], 8
    %v1033 = vld [vmem:[%s1032] sm:$0xff]
    %v1034 = vld [vmem:[#allocation2] sm:$0xff]
    %v1035 = vld [vmem:[#allocation2 + $0x8] sm:$0xff]
    %v1036 = vld [vmem:[#allocation2 + $0x10] sm:$0xff]
    %v1037 = vld [vmem:[#allocation2 + $0x18] sm:$0xff]
    %v1038 = vld [vmem:[#allocation2 + $0x20] sm:$0xff]
    %v1039 = vld [vmem:[#allocation2 + $0x28] sm:$0xff]
    %v1040 = vld [vmem:[#allocation2 + $0x30] sm:$0xff]
    %v1041 = vld [vmem:[#allocation2 + $0x38] sm:$0xff]
    %v1042 = vld [vmem:[#allocation2 + $0x40] sm:$0xff]
    %v1043 = vld [vmem:[#allocation2 + $0x48] sm:$0xff]
    %v1044 = vld [vmem:[#allocation2 + $0x50] sm:$0xff]
    %v1045 = vld [vmem:[#allocation2 + $0x58] sm:$0xff]
    %v1046 = vld [vmem:[#allocation2 + $0x60] sm:$0xff]
    %v1047 = vld [vmem:[#allocation2 + $0x68] sm:$0xff]
    %v1048 = vld [vmem:[#allocation2 + $0x70] sm:$0xff]
    %v1049 = vld [vmem:[#allocation2 + $0x78] sm:$0xff]
    %v1050 = vld [vmem:[#allocation2 + $0x80] sm:$0xff]
    %v1051 = vld [vmem:[#allocation2 + $0x88] sm:$0xff]
    %v1052 = vld [vmem:[#allocation2 + $0x90] sm:$0xff]
    %v1053 = vld [vmem:[#allocation2 + $0x98] sm:$0xff]
    %v1054 = vld [vmem:[#allocation2 + $0xa0] sm:$0xff]
    %v1055 = vld [vmem:[#allocation2 + $0xa8] sm:$0xff]
    %v1056 = vld [vmem:[#allocation2 + $0xb0] sm:$0xff]
    %v1057 = vld [vmem:[#allocation2 + $0xb8] sm:$0xff]
    %v1058 = vld [vmem:[#allocation2 + $0xc0] sm:$0xff]
    %v1059 = vld [vmem:[#allocation2 + $0xc8] sm:$0xff]
    %v1060 = vld [vmem:[#allocation2 + $0xd0] sm:$0xff]
    %v1061 = vld [vmem:[#allocation2 + $0xd8] sm:$0xff]
    %v1062 = vld [vmem:[#allocation2 + $0xe0] sm:$0xff]
    %v1063 = vld [vmem:[#allocation2 + $0xe8] sm:$0xff]
    %v1064 = vld [vmem:[#allocation2 + $0xf0] sm:$0xff]
    %v1065 = vld [vmem:[#allocation2 + $0xf8] sm:$0xff]
    %v1066 = vld [vmem:[#allocation2 + $0x100] sm:$0xff]
    %v1067 = vld [vmem:[#allocation2 + $0x108] sm:$0xff]
    %v1068 = vld [vmem:[#allocation2 + $0x110] sm:$0xff]
    %v1069 = vld [vmem:[#allocation2 + $0x118] sm:$0xff]
    %v1070 = vld [vmem:[#allocation2 + $0x120] sm:$0xff]
    %v1071 = vld [vmem:[#allocation2 + $0x128] sm:$0xff]
    %v1072 = vld [vmem:[#allocation2 + $0x130] sm:$0xff]
    %v1073 = vld [vmem:[#allocation2 + $0x138] sm:$0xff]
    %v1075 = vsel %vm496, %v1033, 0
    %1077 = vmatprep.subr.mxu0 %v1035
    %1078 = vmatpush1.msra.mxu0 %v1034
    %1079 = vmatprep.subr.mxu0 %v1039
    %1080 = vmatpush1.msra.mxu0 %v1038
    %1081 = vmatprep.subr.mxu0 %v1043
    %1082 = vmatpush1.msra.mxu0 %v1042
    %1083 = vmatprep.subr.mxu0 %v1047
    %1084 = vmatpush1.msra.mxu0 %v1046
    %1085 = vmatprep.subr.mxu0 %v1051
    %1086 = vmatpush1.msra.mxu0 %v1050
    %1087 = vmatprep.subr.mxu0 %v1055
    %1088 = vmatpush1.msra.mxu0 %v1054
    %1089 = vmatprep.subr.mxu0 %v1059
    %1090 = vmatpush1.msra.mxu0 %v1058
    %1091 = vmatprep.subr.mxu0 %v1063
    %1092 = vmatpush1.msra.mxu0 %v1062
    %1093 = vmatprep.subr.mxu0 %v1067
    %1094 = vmatpush1.msra.mxu0 %v1066
    %1095 = vmatprep.subr.mxu0 %v1071
    %1096 = vmatpush1.msra.mxu0 %v1070
    %1097 = vmatprep.subr.mxu0 0.0
    %1098 = vmatpush1.msra.mxu0 0.0
    %1099 = vmatprep.subr.mxu0 0.0
    %1100 = vmatpush1.msra.mxu0 0.0
    %1101 = vmatprep.subr.mxu0 0.0
    %1102 = vmatpush1.msra.mxu0 0.0
    %1103 = vmatprep.subr.mxu0 0.0
    %1104 = vmatpush1.msra.mxu0 0.0
    %1105 = vmatprep.subr.mxu0 0.0
    %1106 = vmatpush1.msra.mxu0 0.0
    %1107 = vmatprep.subr.mxu0 0.0
    %1108 = vmatpush1.msra.mxu0 0.0
    %1109 = vmatprep.subr.mxu0 0.0
    %1110 = vmatpush1.msra.mxu0 0.0
    %1111 = vmatprep.subr.mxu0 0.0
    %1112 = vmatpush1.msra.mxu0 0.0
    %1113 = vmatprep.subr.mxu0 0.0
    %1114 = vmatpush1.msra.mxu0 0.0
    %1115 = vmatprep.subr.mxu0 0.0
    %1116 = vmatpush1.msra.mxu0 0.0
    %1117 = vmatprep.subr.mxu0 0.0
    %1118 = vmatpush1.msra.mxu0 0.0
    %1119 = vmatprep.subr.mxu0 0.0
    %1120 = vmatpush1.msra.mxu0 0.0
    %1121 = vmatprep.subr.mxu0 0.0
    %1122 = vmatpush1.msra.mxu0 0.0
    %1123 = vmatprep.subr.mxu0 0.0
    %1124 = vmatpush1.msra.mxu0 0.0
    %1125 = vmatprep.subr.mxu0 0.0
    %1126 = vmatpush1.msra.mxu0 0.0
    %1127 = vmatprep.subr.mxu0 0.0
    %1128 = vmatpush1.msra.mxu0 0.0
    %1129 = vmatprep.subr.mxu0 0.0
    %1130 = vmatpush1.msra.mxu0 0.0
    %1131 = vmatprep.subr.mxu0 0.0
    %1132 = vmatpush1.msra.mxu0 0.0
    %1133 = vmatprep.subr.mxu0 0.0
    %1134 = vmatpush1.msra.mxu0 0.0
    %1135 = vmatprep.subr.mxu0 0.0
    %1136 = vmatpush1.msra.mxu0 0.0
    %1137 = vmatprep.subr.mxu0 0.0
    %1138 = vmatpush1.msra.mxu0 0.0
    %1139 = vmatprep.subr.mxu0 0.0
    %1140 = vmatpush1.msra.mxu0 0.0
    %1141 = vmatprep.mubr.f32.mxu0 0.0
    %1142 = vmatmul.mubr.f32.gmra.mrb[0].mxu0 %v1075
    %v1143 = vpop.f32.mrb[0].mxu0
    %v1144 = vadd.f32 0.0, %v1143
    %v1145 = vpop.f32.mrb[0].mxu0
    %v1146 = vadd.f32 0.0, %v1145
    %1147 = vdwg.mxu0
    %1148 = vmatprep.subr.mxu0 %v1037
    %1149 = vmatpush1.msra.mxu0 %v1036
    %1150 = vmatprep.subr.mxu0 %v1041
    %1151 = vmatpush1.msra.mxu0 %v1040
    %1152 = vmatprep.subr.mxu0 %v1045
    %1153 = vmatpush1.msra.mxu0 %v1044
    %1154 = vmatprep.subr.mxu0 %v1049
    %1155 = vmatpush1.msra.mxu0 %v1048
    %1156 = vmatprep.subr.mxu0 %v1053
    %1157 = vmatpush1.msra.mxu0 %v1052
    %1158 = vmatprep.subr.mxu0 %v1057
    %1159 = vmatpush1.msra.mxu0 %v1056
    %1160 = vmatprep.subr.mxu0 %v1061
    %1161 = vmatpush1.msra.mxu0 %v1060
    %1162 = vmatprep.subr.mxu0 %v1065
    %1163 = vmatpush1.msra.mxu0 %v1064
    %1164 = vmatprep.subr.mxu0 %v1069
    %1165 = vmatpush1.msra.mxu0 %v1068
    %1166 = vmatprep.subr.mxu0 %v1073
    %1167 = vmatpush1.msra.mxu0 %v1072
    %1168 = vmatprep.subr.mxu0 0.0
    %1169 = vmatpush1.msra.mxu0 0.0
    %1170 = vmatprep.subr.mxu0 0.0
    %1171 = vmatpush1.msra.mxu0 0.0
    %1172 = vmatprep.subr.mxu0 0.0
    %1173 = vmatpush1.msra.mxu0 0.0
    %1174 = vmatprep.subr.mxu0 0.0
    %1175 = vmatpush1.msra.mxu0 0.0
    %1176 = vmatprep.subr.mxu0 0.0
    %1177 = vmatpush1.msra.mxu0 0.0
    %1178 = vmatprep.subr.mxu0 0.0
    %1179 = vmatpush1.msra.mxu0 0.0
    %1180 = vmatprep.subr.mxu0 0.0
    %1181 = vmatpush1.msra.mxu0 0.0
    %1182 = vmatprep.subr.mxu0 0.0
    %1183 = vmatpush1.msra.mxu0 0.0
    %1184 = vmatprep.subr.mxu0 0.0
    %1185 = vmatpush1.msra.mxu0 0.0
    %1186 = vmatprep.subr.mxu0 0.0
    %1187 = vmatpush1.msra.mxu0 0.0
    %1188 = vmatprep.subr.mxu0 0.0
    %1189 = vmatpush1.msra.mxu0 0.0
    %1190 = vmatprep.subr.mxu0 0.0
    %1191 = vmatpush1.msra.mxu0 0.0
    %1192 = vmatprep.subr.mxu0 0.0
    %1193 = vmatpush1.msra.mxu0 0.0
    %1194 = vmatprep.subr.mxu0 0.0
    %1195 = vmatpush1.msra.mxu0 0.0
    %1196 = vmatprep.subr.mxu0 0.0
    %1197 = vmatpush1.msra.mxu0 0.0
    %1198 = vmatprep.subr.mxu0 0.0
    %1199 = vmatpush1.msra.mxu0 0.0
    %1200 = vmatprep.subr.mxu0 0.0
    %1201 = vmatpush1.msra.mxu0 0.0
    %1202 = vmatprep.subr.mxu0 0.0
    %1203 = vmatpush1.msra.mxu0 0.0
    %1204 = vmatprep.subr.mxu0 0.0
    %1205 = vmatpush1.msra.mxu0 0.0
    %1206 = vmatprep.subr.mxu0 0.0
    %1207 = vmatpush1.msra.mxu0 0.0
    %1208 = vmatprep.subr.mxu0 0.0
    %1209 = vmatpush1.msra.mxu0 0.0
    %1210 = vmatprep.subr.mxu0 0.0
    %1211 = vmatpush1.msra.mxu0 0.0
    %1212 = vmatprep.mubr.f32.mxu0 0.0
    %1213 = vmatmul.mubr.f32.gmra.mrb[0].mxu0 %v1075
    %v1214 = vpop.f32.mrb[0].mxu0
    %v1215 = vadd.f32 0.0, %v1214
    %v1216 = vpop.f32.mrb[0].mxu0
    %v1217 = vadd.f32 0.0, %v1216
    %1218 = vdwg.mxu0
    %v1219 = vadd.f32 %v1144, %v1146
    %v1220 = vadd.f32 %v1219, %v1215
    %v1221 = vadd.f32 %v1220, %v1217
    %1222 = vadd.xlane.f32.xlu0 %v1221
    %v1223 = vpop.xlane.xlu0 %1222
    %v1224 = vmul.f32 %v1223, %v647
    %v1225 = vsub.f32 %v1144, %v1224
    %v1226 = vsub.f32 %v1146, %v1224
    %v1227 = vsub.f32 %v1215, %v1224
    %v1228 = vsub.f32 %v1217, %v1224
    %v1229 = vmul.f32 %v1225, %v1225
    %v1230 = vmul.f32 %v1226, %v1226
    %v1231 = vmul.f32 %v1227, %v1227
    %v1232 = vmul.f32 %v1228, %v1228
    %v1233 = vadd.f32 %v1229, %v1230
    %v1234 = vadd.f32 %v1233, %v1231
    %v1235 = vadd.f32 %v1234, %v1232
    %1236 = vadd.xlane.f32.xlu0 %v1235
    %v1237 = vpop.xlane.xlu0 %1236
    %v1238 = vmul.f32 %v1237, %v647
    %s1239 = scalar_lea.vmem %s1, 8
    %v1240 = vld [vmem:[%s1239] sm:$0xff]
    %v1241 = vadd.f32 %v1238, 1e-05
    %v1242 = vrsqrt.pop %v1241
    %v1243 = vmul.f32 %v1240, %v1242
    %s1244 = scalar_lea.vmem %s2, 8
    %v1245 = vld [vmem:[%s1244] sm:$0xff]
    %v1246 = vmul.f32 %v1224, %v1243
    %v1247 = vsub.f32 %v1245, %v1246
    %1249 = vset.pattern.permute.xlu0 0
    %1250 = vperm.xlu0 %1249, %v1243
    %v1251 = vpop.permute.xlu0 %1250
    %v1253 = vmul.f32 %v1144, %v1251
    %v1254 = vmul.f32 %v1146, %v1251
    %v1255 = vmul.f32 %v1215, %v1251
    %v1256 = vmul.f32 %v1217, %v1251
    %1258 = vset.pattern.permute.xlu0 0
    %1259 = vperm.xlu0 %1258, %v1247
    %v1260 = vpop.permute.xlu0 %1259
    %v1262 = vadd.f32 %v1253, %v1260
    %v1263 = vadd.f32 %v1254, %v1260
    %v1264 = vadd.f32 %v1255, %v1260
    %v1265 = vadd.f32 %v1256, %v1260
    %v1266 = vmax.f32 %v1262, 0.0
    %v1267 = vmax.f32 %v1263, 0.0
    %v1268 = vmax.f32 %v1264, 0.0
    %v1269 = vmax.f32 %v1265, 0.0
    %1270 = vrot.lane.b32.xlu0 %v1266, 17
    %v1271 = vpop.permute.xlu0 %1270
    %1272 = vrot.lane.b32.xlu0 %v1267, 17
    %v1273 = vpop.permute.xlu0 %1272
    %1274 = vrot.lane.b32.xlu0 %v1268, 17
    %v1275 = vpop.permute.xlu0 %1274
    %1276 = vrot.lane.b32.xlu0 %v1269, 17
    %v1277 = vpop.permute.xlu0 %1276
    %v1278 = vsel %vm108, %v1275, %v1277
    %v1279 = vsel %vm108, %v1273, %v1275
    %v1280 = vsel %vm108, %v1271, %v1273
    %v1281 = vsel %vm108, %v1277, %v1271
    %v1282 = vld [vmem:[%s3] ss:$8 sm:$0xf]
    %v1284 = vlaneseq
    %v1285 = vshrl.u32 %v1284, 7
    %v1286 = vsub.s32 0, %v1285
    %v1287 = vrot.slane %v1282, %v1286
    %v1288 = vlaneseq
    %v1289 = vshrl.u32 %v1288, 7
    %v1290 = vsub.s32 1, %v1289
    %v1291 = vrot.slane %v1282, %v1290
    %v1292 = vlaneseq
    %v1293 = vshrl.u32 %v1292, 7
    %v1294 = vsub.s32 2, %v1293
    %v1295 = vrot.slane %v1282, %v1294
    %v1296 = vlaneseq
    %v1297 = vshrl.u32 %v1296, 7
    %v1298 = vsub.s32 3, %v1297
    %v1299 = vrot.slane %v1282, %v1298
    %v1304 = vmul.f32 %v1281, %v1287
    %v1305 = vmul.f32 %v1280, %v1291
    %v1306 = vmul.f32 %v1279, %v1295
    %v1307 = vmul.f32 %v1278, %v1299
    %1308 = vst [vmem:[#allocation2] sm:$0xff] %v1304
    %1309 = vst [vmem:[#allocation2 + $0x8] sm:$0xff] %v1305
    %1310 = vst [vmem:[#allocation2 + $0x10] sm:$0xff] %v1306
    %1311 = vst [vmem:[#allocation2 + $0x18] sm:$0xff] %v1307
    %1312 = vrot.lane.b32.xlu0 %v1266, 16
    %v1313 = vpop.permute.xlu0 %1312
    %1314 = vrot.lane.b32.xlu0 %v1267, 16
    %v1315 = vpop.permute.xlu0 %1314
    %1316 = vrot.lane.b32.xlu0 %v1268, 16
    %v1317 = vpop.permute.xlu0 %1316
    %1318 = vrot.lane.b32.xlu0 %v1269, 16
    %v1319 = vpop.permute.xlu0 %1318
    %v1320 = vsel %vm151, %v1317, %v1319
    %v1321 = vsel %vm151, %v1315, %v1317
    %v1322 = vsel %vm151, %v1313, %v1315
    %v1323 = vsel %vm151, %v1319, %v1313
    %v1324 = vld [vmem:[%s156] ss:$8 sm:$0xf]
    %v1326 = vlaneseq
    %v1327 = vshrl.u32 %v1326, 7
    %v1328 = vsub.s32 0, %v1327
    %v1329 = vrot.slane %v1324, %v1328
    %v1330 = vlaneseq
    %v1331 = vshrl.u32 %v1330, 7
    %v1332 = vsub.s32 1, %v1331
    %v1333 = vrot.slane %v1324, %v1332
    %v1334 = vlaneseq
    %v1335 = vshrl.u32 %v1334, 7
    %v1336 = vsub.s32 2, %v1335
    %v1337 = vrot.slane %v1324, %v1336
    %v1338 = vlaneseq
    %v1339 = vshrl.u32 %v1338, 7
    %v1340 = vsub.s32 3, %v1339
    %v1341 = vrot.slane %v1324, %v1340
    %v1346 = vmul.f32 %v1323, %v1329
    %v1347 = vmul.f32 %v1322, %v1333
    %v1348 = vmul.f32 %v1321, %v1337
    %v1349 = vmul.f32 %v1320, %v1341
    %1350 = vst [vmem:[#allocation2 + $0x20] sm:$0xff] %v1346
    %1351 = vst [vmem:[#allocation2 + $0x28] sm:$0xff] %v1347
    %1352 = vst [vmem:[#allocation2 + $0x30] sm:$0xff] %v1348
    %1353 = vst [vmem:[#allocation2 + $0x38] sm:$0xff] %v1349
    %1354 = vrot.lane.b32.xlu0 %v1266, 15
    %v1355 = vpop.permute.xlu0 %1354
    %1356 = vrot.lane.b32.xlu0 %v1267, 15
    %v1357 = vpop.permute.xlu0 %1356
    %1358 = vrot.lane.b32.xlu0 %v1268, 15
    %v1359 = vpop.permute.xlu0 %1358
    %1360 = vrot.lane.b32.xlu0 %v1269, 15
    %v1361 = vpop.permute.xlu0 %1360
    %v1362 = vsel %vm195, %v1359, %v1361
    %v1363 = vsel %vm195, %v1357, %v1359
    %v1364 = vsel %vm195, %v1355, %v1357
    %v1365 = vsel %vm195, %v1361, %v1355
    %v1366 = vld [vmem:[%s200] ss:$8 sm:$0xf]
    %v1368 = vlaneseq
    %v1369 = vshrl.u32 %v1368, 7
    %v1370 = vsub.s32 0, %v1369
    %v1371 = vrot.slane %v1366, %v1370
    %v1372 = vlaneseq
    %v1373 = vshrl.u32 %v1372, 7
    %v1374 = vsub.s32 1, %v1373
    %v1375 = vrot.slane %v1366, %v1374
    %v1376 = vlaneseq
    %v1377 = vshrl.u32 %v1376, 7
    %v1378 = vsub.s32 2, %v1377
    %v1379 = vrot.slane %v1366, %v1378
    %v1380 = vlaneseq
    %v1381 = vshrl.u32 %v1380, 7
    %v1382 = vsub.s32 3, %v1381
    %v1383 = vrot.slane %v1366, %v1382
    %v1388 = vmul.f32 %v1365, %v1371
    %v1389 = vmul.f32 %v1364, %v1375
    %v1390 = vmul.f32 %v1363, %v1379
    %v1391 = vmul.f32 %v1362, %v1383
    %1392 = vst [vmem:[#allocation2 + $0x40] sm:$0xff] %v1388
    %1393 = vst [vmem:[#allocation2 + $0x48] sm:$0xff] %v1389
    %1394 = vst [vmem:[#allocation2 + $0x50] sm:$0xff] %v1390
    %1395 = vst [vmem:[#allocation2 + $0x58] sm:$0xff] %v1391
    %1396 = vrot.lane.b32.xlu0 %v1266, 1
    %v1397 = vpop.permute.xlu0 %1396
    %1398 = vrot.lane.b32.xlu0 %v1267, 1
    %v1399 = vpop.permute.xlu0 %1398
    %1400 = vrot.lane.b32.xlu0 %v1268, 1
    %v1401 = vpop.permute.xlu0 %1400
    %1402 = vrot.lane.b32.xlu0 %v1269, 1
    %v1403 = vpop.permute.xlu0 %1402
    %v1404 = vsel %vm239, %v1401, %v1403
    %v1405 = vsel %vm239, %v1399, %v1401
    %v1406 = vsel %vm239, %v1397, %v1399
    %v1407 = vsel %vm239, %v1403, %v1397
    %v1408 = vld [vmem:[%s244] ss:$8 sm:$0xf]
    %v1410 = vlaneseq
    %v1411 = vshrl.u32 %v1410, 7
    %v1412 = vsub.s32 0, %v1411
    %v1413 = vrot.slane %v1408, %v1412
    %v1414 = vlaneseq
    %v1415 = vshrl.u32 %v1414, 7
    %v1416 = vsub.s32 1, %v1415
    %v1417 = vrot.slane %v1408, %v1416
    %v1418 = vlaneseq
    %v1419 = vshrl.u32 %v1418, 7
    %v1420 = vsub.s32 2, %v1419
    %v1421 = vrot.slane %v1408, %v1420
    %v1422 = vlaneseq
    %v1423 = vshrl.u32 %v1422, 7
    %v1424 = vsub.s32 3, %v1423
    %v1425 = vrot.slane %v1408, %v1424
    %v1430 = vmul.f32 %v1407, %v1413
    %v1431 = vmul.f32 %v1406, %v1417
    %v1432 = vmul.f32 %v1405, %v1421
    %v1433 = vmul.f32 %v1404, %v1425
    %1434 = vst [vmem:[#allocation2 + $0x60] sm:$0xff] %v1430
    %1435 = vst [vmem:[#allocation2 + $0x68] sm:$0xff] %v1431
    %1436 = vst [vmem:[#allocation2 + $0x70] sm:$0xff] %v1432
    %1437 = vst [vmem:[#allocation2 + $0x78] sm:$0xff] %v1433
    %1438 = vst [vmem:[#allocation2 + $0x80] sm:$0xff] %v1266
    %1439 = vst [vmem:[#allocation2 + $0x88] sm:$0xff] %v1267
    %1440 = vst [vmem:[#allocation2 + $0x90] sm:$0xff] %v1268
    %1441 = vst [vmem:[#allocation2 + $0x98] sm:$0xff] %v1269
    %1442 = vrot.lane.b32.xlu0 %v1266, 127
    %v1443 = vpop.permute.xlu0 %1442
    %1444 = vrot.lane.b32.xlu0 %v1267, 127
    %v1445 = vpop.permute.xlu0 %1444
    %1446 = vrot.lane.b32.xlu0 %v1268, 127
    %v1447 = vpop.permute.xlu0 %1446
    %1448 = vrot.lane.b32.xlu0 %v1269, 127
    %v1449 = vpop.permute.xlu0 %1448
    %v1450 = vsel %vm287, %v1447, %v1449
    %v1451 = vsel %vm287, %v1445, %v1447
    %v1452 = vsel %vm287, %v1443, %v1445
    %v1453 = vsel %vm287, %v1449, %v1443
    %v1454 = vld [vmem:[%s292] ss:$8 sm:$0xf]
    %v1456 = vlaneseq
    %v1457 = vshrl.u32 %v1456, 7
    %v1458 = vsub.s32 0, %v1457
    %v1459 = vrot.slane %v1454, %v1458
    %v1460 = vlaneseq
    %v1461 = vshrl.u32 %v1460, 7
    %v1462 = vsub.s32 1, %v1461
    %v1463 = vrot.slane %v1454, %v1462
    %v1464 = vlaneseq
    %v1465 = vshrl.u32 %v1464, 7
    %v1466 = vsub.s32 2, %v1465
    %v1467 = vrot.slane %v1454, %v1466
    %v1468 = vlaneseq
    %v1469 = vshrl.u32 %v1468, 7
    %v1470 = vsub.s32 3, %v1469
    %v1471 = vrot.slane %v1454, %v1470
    %v1476 = vmul.f32 %v1452, %v1459
    %v1477 = vmul.f32 %v1451, %v1463
    %v1478 = vmul.f32 %v1450, %v1467
    %v1479 = vmul.f32 %v1453, %v1471
    %1480 = vst [vmem:[#allocation2 + $0xa0] sm:$0xff] %v1476
    %1481 = vst [vmem:[#allocation2 + $0xa8] sm:$0xff] %v1477
    %1482 = vst [vmem:[#allocation2 + $0xb0] sm:$0xff] %v1478
    %1483 = vst [vmem:[#allocation2 + $0xb8] sm:$0xff] %v1479
    %1484 = vrot.lane.b32.xlu0 %v1266, 113
    %v1485 = vpop.permute.xlu0 %1484
    %1486 = vrot.lane.b32.xlu0 %v1267, 113
    %v1487 = vpop.permute.xlu0 %1486
    %1488 = vrot.lane.b32.xlu0 %v1268, 113
    %v1489 = vpop.permute.xlu0 %1488
    %1490 = vrot.lane.b32.xlu0 %v1269, 113
    %v1491 = vpop.permute.xlu0 %1490
    %v1492 = vsel %vm331, %v1489, %v1491
    %v1493 = vsel %vm331, %v1487, %v1489
    %v1494 = vsel %vm331, %v1485, %v1487
    %v1495 = vsel %vm331, %v1491, %v1485
    %v1496 = vld [vmem:[%s336] ss:$8 sm:$0xf]
    %v1498 = vlaneseq
    %v1499 = vshrl.u32 %v1498, 7
    %v1500 = vsub.s32 0, %v1499
    %v1501 = vrot.slane %v1496, %v1500
    %v1502 = vlaneseq
    %v1503 = vshrl.u32 %v1502, 7
    %v1504 = vsub.s32 1, %v1503
    %v1505 = vrot.slane %v1496, %v1504
    %v1506 = vlaneseq
    %v1507 = vshrl.u32 %v1506, 7
    %v1508 = vsub.s32 2, %v1507
    %v1509 = vrot.slane %v1496, %v1508
    %v1510 = vlaneseq
    %v1511 = vshrl.u32 %v1510, 7
    %v1512 = vsub.s32 3, %v1511
    %v1513 = vrot.slane %v1496, %v1512
    %v1518 = vmul.f32 %v1494, %v1501
    %v1519 = vmul.f32 %v1493, %v1505
    %v1520 = vmul.f32 %v1492, %v1509
    %v1521 = vmul.f32 %v1495, %v1513
    %1522 = vst [vmem:[#allocation2 + $0xc0] sm:$0xff] %v1518
    %1523 = vst [vmem:[#allocation2 + $0xc8] sm:$0xff] %v1519
    %1524 = vst [vmem:[#allocation2 + $0xd0] sm:$0xff] %v1520
    %1525 = vst [vmem:[#allocation2 + $0xd8] sm:$0xff] %v1521
    %1526 = vrot.lane.b32.xlu0 %v1266, 112
    %v1527 = vpop.permute.xlu0 %1526
    %1528 = vrot.lane.b32.xlu0 %v1267, 112
    %v1529 = vpop.permute.xlu0 %1528
    %1530 = vrot.lane.b32.xlu0 %v1268, 112
    %v1531 = vpop.permute.xlu0 %1530
    %1532 = vrot.lane.b32.xlu0 %v1269, 112
    %v1533 = vpop.permute.xlu0 %1532
    %v1534 = vsel %vm375, %v1531, %v1533
    %v1535 = vsel %vm375, %v1529, %v1531
    %v1536 = vsel %vm375, %v1527, %v1529
    %v1537 = vsel %vm375, %v1533, %v1527
    %v1538 = vld [vmem:[%s380] ss:$8 sm:$0xf]
    %v1540 = vlaneseq
    %v1541 = vshrl.u32 %v1540, 7
    %v1542 = vsub.s32 0, %v1541
    %v1543 = vrot.slane %v1538, %v1542
    %v1544 = vlaneseq
    %v1545 = vshrl.u32 %v1544, 7
    %v1546 = vsub.s32 1, %v1545
    %v1547 = vrot.slane %v1538, %v1546
    %v1548 = vlaneseq
    %v1549 = vshrl.u32 %v1548, 7
    %v1550 = vsub.s32 2, %v1549
    %v1551 = vrot.slane %v1538, %v1550
    %v1552 = vlaneseq
    %v1553 = vshrl.u32 %v1552, 7
    %v1554 = vsub.s32 3, %v1553
    %v1555 = vrot.slane %v1538, %v1554
    %v1560 = vmul.f32 %v1536, %v1543
    %v1561 = vmul.f32 %v1535, %v1547
    %v1562 = vmul.f32 %v1534, %v1551
    %v1563 = vmul.f32 %v1537, %v1555
    %1564 = vst [vmem:[#allocation2 + $0xe0] sm:$0xff] %v1560
    %1565 = vst [vmem:[#allocation2 + $0xe8] sm:$0xff] %v1561
    %1566 = vst [vmem:[#allocation2 + $0xf0] sm:$0xff] %v1562
    %1567 = vst [vmem:[#allocation2 + $0xf8] sm:$0xff] %v1563
    %1568 = vrot.lane.b32.xlu0 %v1266, 111
    %v1569 = vpop.permute.xlu0 %1568
    %1570 = vrot.lane.b32.xlu0 %v1267, 111
    %v1571 = vpop.permute.xlu0 %1570
    %1572 = vrot.lane.b32.xlu0 %v1268, 111
    %v1573 = vpop.permute.xlu0 %1572
    %1574 = vrot.lane.b32.xlu0 %v1269, 111
    %v1575 = vpop.permute.xlu0 %1574
    %v1576 = vsel %vm419, %v1573, %v1575
    %v1577 = vsel %vm419, %v1571, %v1573
    %v1578 = vsel %vm419, %v1569, %v1571
    %v1579 = vsel %vm419, %v1575, %v1569
    %v1580 = vld [vmem:[%s424] ss:$8 sm:$0xf]
    %v1582 = vlaneseq
    %v1583 = vshrl.u32 %v1582, 7
    %v1584 = vsub.s32 0, %v1583
    %v1585 = vrot.slane %v1580, %v1584
    %v1586 = vlaneseq
    %v1587 = vshrl.u32 %v1586, 7
    %v1588 = vsub.s32 1, %v1587
    %v1589 = vrot.slane %v1580, %v1588
    %v1590 = vlaneseq
    %v1591 = vshrl.u32 %v1590, 7
    %v1592 = vsub.s32 2, %v1591
    %v1593 = vrot.slane %v1580, %v1592
    %v1594 = vlaneseq
    %v1595 = vshrl.u32 %v1594, 7
    %v1596 = vsub.s32 3, %v1595
    %v1597 = vrot.slane %v1580, %v1596
    %v1602 = vmul.f32 %v1578, %v1585
    %v1603 = vmul.f32 %v1577, %v1589
    %v1604 = vmul.f32 %v1576, %v1593
    %v1605 = vmul.f32 %v1579, %v1597
    %1606 = vst [vmem:[#allocation2 + $0x100] sm:$0xff] %v1602
    %1607 = vst [vmem:[#allocation2 + $0x108] sm:$0xff] %v1603
    %1608 = vst [vmem:[#allocation2 + $0x110] sm:$0xff] %v1604
    %1609 = vst [vmem:[#allocation2 + $0x118] sm:$0xff] %v1605
    %s1610 = scalar_lea.vmem [#allocation3], 16
    %v1611 = vld [vmem:[%s1610] sm:$0xff]
    %v1612 = vld [vmem:[#allocation2] sm:$0xff]
    %v1613 = vld [vmem:[#allocation2 + $0x8] sm:$0xff]
    %v1614 = vld [vmem:[#allocation2 + $0x10] sm:$0xff]
    %v1615 = vld [vmem:[#allocation2 + $0x18] sm:$0xff]
    %v1616 = vld [vmem:[#allocation2 + $0x20] sm:$0xff]
    %v1617 = vld [vmem:[#allocation2 + $0x28] sm:$0xff]
    %v1618 = vld [vmem:[#allocation2 + $0x30] sm:$0xff]
    %v1619 = vld [vmem:[#allocation2 + $0x38] sm:$0xff]
    %v1620 = vld [vmem:[#allocation2 + $0x40] sm:$0xff]
    %v1621 = vld [vmem:[#allocation2 + $0x48] sm:$0xff]
    %v1622 = vld [vmem:[#allocation2 + $0x50] sm:$0xff]
    %v1623 = vld [vmem:[#allocation2 + $0x58] sm:$0xff]
    %v1624 = vld [vmem:[#allocation2 + $0x60] sm:$0xff]
    %v1625 = vld [vmem:[#allocation2 + $0x68] sm:$0xff]
    %v1626 = vld [vmem:[#allocation2 + $0x70] sm:$0xff]
    %v1627 = vld [vmem:[#allocation2 + $0x78] sm:$0xff]
    %v1628 = vld [vmem:[#allocation2 + $0x80] sm:$0xff]
    %v1629 = vld [vmem:[#allocation2 + $0x88] sm:$0xff]
    %v1630 = vld [vmem:[#allocation2 + $0x90] sm:$0xff]
    %v1631 = vld [vmem:[#allocation2 + $0x98] sm:$0xff]
    %v1632 = vld [vmem:[#allocation2 + $0xa0] sm:$0xff]
    %v1633 = vld [vmem:[#allocation2 + $0xa8] sm:$0xff]
    %v1634 = vld [vmem:[#allocation2 + $0xb0] sm:$0xff]
    %v1635 = vld [vmem:[#allocation2 + $0xb8] sm:$0xff]
    %v1636 = vld [vmem:[#allocation2 + $0xc0] sm:$0xff]
    %v1637 = vld [vmem:[#allocation2 + $0xc8] sm:$0xff]
    %v1638 = vld [vmem:[#allocation2 + $0xd0] sm:$0xff]
    %v1639 = vld [vmem:[#allocation2 + $0xd8] sm:$0xff]
    %v1640 = vld [vmem:[#allocation2 + $0xe0] sm:$0xff]
    %v1641 = vld [vmem:[#allocation2 + $0xe8] sm:$0xff]
    %v1642 = vld [vmem:[#allocation2 + $0xf0] sm:$0xff]
    %v1643 = vld [vmem:[#allocation2 + $0xf8] sm:$0xff]
    %v1644 = vld [vmem:[#allocation2 + $0x100] sm:$0xff]
    %v1645 = vld [vmem:[#allocation2 + $0x108] sm:$0xff]
    %v1646 = vld [vmem:[#allocation2 + $0x110] sm:$0xff]
    %v1647 = vld [vmem:[#allocation2 + $0x118] sm:$0xff]
    %v1648 = vld [vmem:[#allocation2 + $0x120] sm:$0xff]
    %v1649 = vld [vmem:[#allocation2 + $0x128] sm:$0xff]
    %v1650 = vld [vmem:[#allocation2 + $0x130] sm:$0xff]
    %v1651 = vld [vmem:[#allocation2 + $0x138] sm:$0xff]
    %v1653 = vsel %vm496, %v1611, 0
    %1655 = vmatprep.subr.mxu0 %v1613
    %1656 = vmatpush1.msra.mxu0 %v1612
    %1657 = vmatprep.subr.mxu0 %v1617
    %1658 = vmatpush1.msra.mxu0 %v1616
    %1659 = vmatprep.subr.mxu0 %v1621
    %1660 = vmatpush1.msra.mxu0 %v1620
    %1661 = vmatprep.subr.mxu0 %v1625
    %1662 = vmatpush1.msra.mxu0 %v1624
    %1663 = vmatprep.subr.mxu0 %v1629
    %1664 = vmatpush1.msra.mxu0 %v1628
    %1665 = vmatprep.subr.mxu0 %v1633
    %1666 = vmatpush1.msra.mxu0 %v1632
    %1667 = vmatprep.subr.mxu0 %v1637
    %1668 = vmatpush1.msra.mxu0 %v1636
    %1669 = vmatprep.subr.mxu0 %v1641
    %1670 = vmatpush1.msra.mxu0 %v1640
    %1671 = vmatprep.subr.mxu0 %v1645
    %1672 = vmatpush1.msra.mxu0 %v1644
    %1673 = vmatprep.subr.mxu0 %v1649
    %1674 = vmatpush1.msra.mxu0 %v1648
    %1675 = vmatprep.subr.mxu0 0.0
    %1676 = vmatpush1.msra.mxu0 0.0
    %1677 = vmatprep.subr.mxu0 0.0
    %1678 = vmatpush1.msra.mxu0 0.0
    %1679 = vmatprep.subr.mxu0 0.0
    %1680 = vmatpush1.msra.mxu0 0.0
    %1681 = vmatprep.subr.mxu0 0.0
    %1682 = vmatpush1.msra.mxu0 0.0
    %1683 = vmatprep.subr.mxu0 0.0
    %1684 = vmatpush1.msra.mxu0 0.0
    %1685 = vmatprep.subr.mxu0 0.0
    %1686 = vmatpush1.msra.mxu0 0.0
    %1687 = vmatprep.subr.mxu0 0.0
    %1688 = vmatpush1.msra.mxu0 0.0
    %1689 = vmatprep.subr.mxu0 0.0
    %1690 = vmatpush1.msra.mxu0 0.0
    %1691 = vmatprep.subr.mxu0 0.0
    %1692 = vmatpush1.msra.mxu0 0.0
    %1693 = vmatprep.subr.mxu0 0.0
    %1694 = vmatpush1.msra.mxu0 0.0
    %1695 = vmatprep.subr.mxu0 0.0
    %1696 = vmatpush1.msra.mxu0 0.0
    %1697 = vmatprep.subr.mxu0 0.0
    %1698 = vmatpush1.msra.mxu0 0.0
    %1699 = vmatprep.subr.mxu0 0.0
    %1700 = vmatpush1.msra.mxu0 0.0
    %1701 = vmatprep.subr.mxu0 0.0
    %1702 = vmatpush1.msra.mxu0 0.0
    %1703 = vmatprep.subr.mxu0 0.0
    %1704 = vmatpush1.msra.mxu0 0.0
    %1705 = vmatprep.subr.mxu0 0.0
    %1706 = vmatpush1.msra.mxu0 0.0
    %1707 = vmatprep.subr.mxu0 0.0
    %1708 = vmatpush1.msra.mxu0 0.0
    %1709 = vmatprep.subr.mxu0 0.0
    %1710 = vmatpush1.msra.mxu0 0.0
    %1711 = vmatprep.subr.mxu0 0.0
    %1712 = vmatpush1.msra.mxu0 0.0
    %1713 = vmatprep.subr.mxu0 0.0
    %1714 = vmatpush1.msra.mxu0 0.0
    %1715 = vmatprep.subr.mxu0 0.0
    %1716 = vmatpush1.msra.mxu0 0.0
    %1717 = vmatprep.subr.mxu0 0.0
    %1718 = vmatpush1.msra.mxu0 0.0
    %1719 = vmatprep.mubr.f32.mxu0 0.0
    %1720 = vmatmul.mubr.f32.gmra.mrb[0].mxu0 %v1653
    %v1721 = vpop.f32.mrb[0].mxu0
    %v1722 = vadd.f32 0.0, %v1721
    %v1723 = vpop.f32.mrb[0].mxu0
    %v1724 = vadd.f32 0.0, %v1723
    %1725 = vdwg.mxu0
    %1726 = vmatprep.subr.mxu0 %v1615
    %1727 = vmatpush1.msra.mxu0 %v1614
    %1728 = vmatprep.subr.mxu0 %v1619
    %1729 = vmatpush1.msra.mxu0 %v1618
    %1730 = vmatprep.subr.mxu0 %v1623
    %1731 = vmatpush1.msra.mxu0 %v1622
    %1732 = vmatprep.subr.mxu0 %v1627
    %1733 = vmatpush1.msra.mxu0 %v1626
    %1734 = vmatprep.subr.mxu0 %v1631
    %1735 = vmatpush1.msra.mxu0 %v1630
    %1736 = vmatprep.subr.mxu0 %v1635
    %1737 = vmatpush1.msra.mxu0 %v1634
    %1738 = vmatprep.subr.mxu0 %v1639
    %1739 = vmatpush1.msra.mxu0 %v1638
    %1740 = vmatprep.subr.mxu0 %v1643
    %1741 = vmatpush1.msra.mxu0 %v1642
    %1742 = vmatprep.subr.mxu0 %v1647
    %1743 = vmatpush1.msra.mxu0 %v1646
    %1744 = vmatprep.subr.mxu0 %v1651
    %1745 = vmatpush1.msra.mxu0 %v1650
    %1746 = vmatprep.subr.mxu0 0.0
    %1747 = vmatpush1.msra.mxu0 0.0
    %1748 = vmatprep.subr.mxu0 0.0
    %1749 = vmatpush1.msra.mxu0 0.0
    %1750 = vmatprep.subr.mxu0 0.0
    %1751 = vmatpush1.msra.mxu0 0.0
    %1752 = vmatprep.subr.mxu0 0.0
    %1753 = vmatpush1.msra.mxu0 0.0
    %1754 = vmatprep.subr.mxu0 0.0
    %1755 = vmatpush1.msra.mxu0 0.0
    %1756 = vmatprep.subr.mxu0 0.0
    %1757 = vmatpush1.msra.mxu0 0.0
    %1758 = vmatprep.subr.mxu0 0.0
    %1759 = vmatpush1.msra.mxu0 0.0
    %1760 = vmatprep.subr.mxu0 0.0
    %1761 = vmatpush1.msra.mxu0 0.0
    %1762 = vmatprep.subr.mxu0 0.0
    %1763 = vmatpush1.msra.mxu0 0.0
    %1764 = vmatprep.subr.mxu0 0.0
    %1765 = vmatpush1.msra.mxu0 0.0
    %1766 = vmatprep.subr.mxu0 0.0
    %1767 = vmatpush1.msra.mxu0 0.0
    %1768 = vmatprep.subr.mxu0 0.0
    %1769 = vmatpush1.msra.mxu0 0.0
    %1770 = vmatprep.subr.mxu0 0.0
    %1771 = vmatpush1.msra.mxu0 0.0
    %1772 = vmatprep.subr.mxu0 0.0
    %1773 = vmatpush1.msra.mxu0 0.0
    %1774 = vmatprep.subr.mxu0 0.0
    %1775 = vmatpush1.msra.mxu0 0.0
    %1776 = vmatprep.subr.mxu0 0.0
    %1777 = vmatpush1.msra.mxu0 0.0
    %1778 = vmatprep.subr.mxu0 0.0
    %1779 = vmatpush1.msra.mxu0 0.0
    %1780 = vmatprep.subr.mxu0 0.0
    %1781 = vmatpush1.msra.mxu0 0.0
    %1782 = vmatprep.subr.mxu0 0.0
    %1783 = vmatpush1.msra.mxu0 0.0
    %1784 = vmatprep.subr.mxu0 0.0
    %1785 = vmatpush1.msra.mxu0 0.0
    %1786 = vmatprep.subr.mxu0 0.0
    %1787 = vmatpush1.msra.mxu0 0.0
    %1788 = vmatprep.subr.mxu0 0.0
    %1789 = vmatpush1.msra.mxu0 0.0
    %1790 = vmatprep.mubr.f32.mxu0 0.0
    %1791 = vmatmul.mubr.f32.gmra.mrb[0].mxu0 %v1653
    %v1792 = vpop.f32.mrb[0].mxu0
    %v1793 = vadd.f32 0.0, %v1792
    %v1794 = vpop.f32.mrb[0].mxu0
    %v1795 = vadd.f32 0.0, %v1794
    %1796 = vdwg.mxu0
    %v1797 = vadd.f32 %v1722, %v1724
    %v1798 = vadd.f32 %v1797, %v1793
    %v1799 = vadd.f32 %v1798, %v1795
    %1800 = vadd.xlane.f32.xlu0 %v1799
    %v1801 = vpop.xlane.xlu0 %1800
    %v1802 = vmul.f32 %v1801, %v647
    %v1803 = vsub.f32 %v1722, %v1802
    %v1804 = vsub.f32 %v1724, %v1802
    %v1805 = vsub.f32 %v1793, %v1802
    %v1806 = vsub.f32 %v1795, %v1802
    %v1807 = vmul.f32 %v1803, %v1803
    %v1808 = vmul.f32 %v1804, %v1804
    %v1809 = vmul.f32 %v1805, %v1805
    %v1810 = vmul.f32 %v1806, %v1806
    %v1811 = vadd.f32 %v1807, %v1808
    %v1812 = vadd.f32 %v1811, %v1809
    %v1813 = vadd.f32 %v1812, %v1810
    %1814 = vadd.xlane.f32.xlu0 %v1813
    %v1815 = vpop.xlane.xlu0 %1814
    %v1816 = vmul.f32 %v1815, %v647
    %s1817 = scalar_lea.vmem %s1, 16
    %v1818 = vld [vmem:[%s1817] sm:$0xff]
    %v1819 = vadd.f32 %v1816, 1e-05
    %v1820 = vrsqrt.pop %v1819
    %v1821 = vmul.f32 %v1818, %v1820
    %s1822 = scalar_lea.vmem %s2, 16
    %v1823 = vld [vmem:[%s1822] sm:$0xff]
    %v1824 = vmul.f32 %v1802, %v1821
    %v1825 = vsub.f32 %v1823, %v1824
    %1827 = vset.pattern.permute.xlu0 0
    %1828 = vperm.xlu0 %1827, %v1821
    %v1829 = vpop.permute.xlu0 %1828
    %v1831 = vmul.f32 %v1722, %v1829
    %v1832 = vmul.f32 %v1724, %v1829
    %v1833 = vmul.f32 %v1793, %v1829
    %v1834 = vmul.f32 %v1795, %v1829
    %1836 = vset.pattern.permute.xlu0 0
    %1837 = vperm.xlu0 %1836, %v1825
    %v1838 = vpop.permute.xlu0 %1837
    %v1840 = vadd.f32 %v1831, %v1838
    %v1841 = vadd.f32 %v1832, %v1838
    %v1842 = vadd.f32 %v1833, %v1838
    %v1843 = vadd.f32 %v1834, %v1838
    %v1844 = vmax.f32 %v1840, 0.0
    %v1845 = vmax.f32 %v1841, 0.0
    %v1846 = vmax.f32 %v1842, 0.0
    %v1847 = vmax.f32 %v1843, 0.0
    %1848 = vrot.lane.b32.xlu0 %v1844, 17
    %v1849 = vpop.permute.xlu0 %1848
    %1850 = vrot.lane.b32.xlu0 %v1845, 17
    %v1851 = vpop.permute.xlu0 %1850
    %1852 = vrot.lane.b32.xlu0 %v1846, 17
    %v1853 = vpop.permute.xlu0 %1852
    %1854 = vrot.lane.b32.xlu0 %v1847, 17
    %v1855 = vpop.permute.xlu0 %1854
    %v1856 = vsel %vm108, %v1853, %v1855
    %v1857 = vsel %vm108, %v1851, %v1853
    %v1858 = vsel %vm108, %v1849, %v1851
    %v1859 = vsel %vm108, %v1855, %v1849
    %v1860 = vld [vmem:[%s3] ss:$8 sm:$0xf]
    %v1862 = vlaneseq
    %v1863 = vshrl.u32 %v1862, 7
    %v1864 = vsub.s32 0, %v1863
    %v1865 = vrot.slane %v1860, %v1864
    %v1866 = vlaneseq
    %v1867 = vshrl.u32 %v1866, 7
    %v1868 = vsub.s32 1, %v1867
    %v1869 = vrot.slane %v1860, %v1868
    %v1870 = vlaneseq
    %v1871 = vshrl.u32 %v1870, 7
    %v1872 = vsub.s32 2, %v1871
    %v1873 = vrot.slane %v1860, %v1872
    %v1874 = vlaneseq
    %v1875 = vshrl.u32 %v1874, 7
    %v1876 = vsub.s32 3, %v1875
    %v1877 = vrot.slane %v1860, %v1876
    %v1882 = vmul.f32 %v1859, %v1865
    %v1883 = vmul.f32 %v1858, %v1869
    %v1884 = vmul.f32 %v1857, %v1873
    %v1885 = vmul.f32 %v1856, %v1877
    %1886 = vst [vmem:[#allocation2] sm:$0xff] %v1882
    %1887 = vst [vmem:[#allocation2 + $0x8] sm:$0xff] %v1883
    %1888 = vst [vmem:[#allocation2 + $0x10] sm:$0xff] %v1884
    %1889 = vst [vmem:[#allocation2 + $0x18] sm:$0xff] %v1885
    %1890 = vrot.lane.b32.xlu0 %v1844, 16
    %v1891 = vpop.permute.xlu0 %1890
    %1892 = vrot.lane.b32.xlu0 %v1845, 16
    %v1893 = vpop.permute.xlu0 %1892
    %1894 = vrot.lane.b32.xlu0 %v1846, 16
    %v1895 = vpop.permute.xlu0 %1894
    %1896 = vrot.lane.b32.xlu0 %v1847, 16
    %v1897 = vpop.permute.xlu0 %1896
    %v1898 = vsel %vm151, %v1895, %v1897
    %v1899 = vsel %vm151, %v1893, %v1895
    %v1900 = vsel %vm151, %v1891, %v1893
    %v1901 = vsel %vm151, %v1897, %v1891
    %v1902 = vld [vmem:[%s156] ss:$8 sm:$0xf]
    %v1904 = vlaneseq
    %v1905 = vshrl.u32 %v1904, 7
    %v1906 = vsub.s32 0, %v1905
    %v1907 = vrot.slane %v1902, %v1906
    %v1908 = vlaneseq
    %v1909 = vshrl.u32 %v1908, 7
    %v1910 = vsub.s32 1, %v1909
    %v1911 = vrot.slane %v1902, %v1910
    %v1912 = vlaneseq
    %v1913 = vshrl.u32 %v1912, 7
    %v1914 = vsub.s32 2, %v1913
    %v1915 = vrot.slane %v1902, %v1914
    %v1916 = vlaneseq
    %v1917 = vshrl.u32 %v1916, 7
    %v1918 = vsub.s32 3, %v1917
    %v1919 = vrot.slane %v1902, %v1918
    %v1924 = vmul.f32 %v1901, %v1907
    %v1925 = vmul.f32 %v1900, %v1911
    %v1926 = vmul.f32 %v1899, %v1915
    %v1927 = vmul.f32 %v1898, %v1919
    %1928 = vst [vmem:[#allocation2 + $0x20] sm:$0xff] %v1924
    %1929 = vst [vmem:[#allocation2 + $0x28] sm:$0xff] %v1925
    %1930 = vst [vmem:[#allocation2 + $0x30] sm:$0xff] %v1926
    %1931 = vst [vmem:[#allocation2 + $0x38] sm:$0xff] %v1927
    %1932 = vrot.lane.b32.xlu0 %v1844, 15
    %v1933 = vpop.permute.xlu0 %1932
    %1934 = vrot.lane.b32.xlu0 %v1845, 15
    %v1935 = vpop.permute.xlu0 %1934
    %1936 = vrot.lane.b32.xlu0 %v1846, 15
    %v1937 = vpop.permute.xlu0 %1936
    %1938 = vrot.lane.b32.xlu0 %v1847, 15
    %v1939 = vpop.permute.xlu0 %1938
    %v1940 = vsel %vm195, %v1937, %v1939
    %v1941 = vsel %vm195, %v1935, %v1937
    %v1942 = vsel %vm195, %v1933, %v1935
    %v1943 = vsel %vm195, %v1939, %v1933
    %v1944 = vld [vmem:[%s200] ss:$8 sm:$0xf]
    %v1946 = vlaneseq
    %v1947 = vshrl.u32 %v1946, 7
    %v1948 = vsub.s32 0, %v1947
    %v1949 = vrot.slane %v1944, %v1948
    %v1950 = vlaneseq
    %v1951 = vshrl.u32 %v1950, 7
    %v1952 = vsub.s32 1, %v1951
    %v1953 = vrot.slane %v1944, %v1952
    %v1954 = vlaneseq
    %v1955 = vshrl.u32 %v1954, 7
    %v1956 = vsub.s32 2, %v1955
    %v1957 = vrot.slane %v1944, %v1956
    %v1958 = vlaneseq
    %v1959 = vshrl.u32 %v1958, 7
    %v1960 = vsub.s32 3, %v1959
    %v1961 = vrot.slane %v1944, %v1960
    %v1966 = vmul.f32 %v1943, %v1949
    %v1967 = vmul.f32 %v1942, %v1953
    %v1968 = vmul.f32 %v1941, %v1957
    %v1969 = vmul.f32 %v1940, %v1961
    %1970 = vst [vmem:[#allocation2 + $0x40] sm:$0xff] %v1966
    %1971 = vst [vmem:[#allocation2 + $0x48] sm:$0xff] %v1967
    %1972 = vst [vmem:[#allocation2 + $0x50] sm:$0xff] %v1968
    %1973 = vst [vmem:[#allocation2 + $0x58] sm:$0xff] %v1969
    %1974 = vrot.lane.b32.xlu0 %v1844, 1
    %v1975 = vpop.permute.xlu0 %1974
    %1976 = vrot.lane.b32.xlu0 %v1845, 1
    %v1977 = vpop.permute.xlu0 %1976
    %1978 = vrot.lane.b32.xlu0 %v1846, 1
    %v1979 = vpop.permute.xlu0 %1978
    %1980 = vrot.lane.b32.xlu0 %v1847, 1
    %v1981 = vpop.permute.xlu0 %1980
    %v1982 = vsel %vm239, %v1979, %v1981
    %v1983 = vsel %vm239, %v1977, %v1979
    %v1984 = vsel %vm239, %v1975, %v1977
    %v1985 = vsel %vm239, %v1981, %v1975
    %v1986 = vld [vmem:[%s244] ss:$8 sm:$0xf]
    %v1988 = vlaneseq
    %v1989 = vshrl.u32 %v1988, 7
    %v1990 = vsub.s32 0, %v1989
    %v1991 = vrot.slane %v1986, %v1990
    %v1992 = vlaneseq
    %v1993 = vshrl.u32 %v1992, 7
    %v1994 = vsub.s32 1, %v1993
    %v1995 = vrot.slane %v1986, %v1994
    %v1996 = vlaneseq
    %v1997 = vshrl.u32 %v1996, 7
    %v1998 = vsub.s32 2, %v1997
    %v1999 = vrot.slane %v1986, %v1998
    %v2000 = vlaneseq
    %v2001 = vshrl.u32 %v2000, 7
    %v2002 = vsub.s32 3, %v2001
    %v2003 = vrot.slane %v1986, %v2002
    %v2008 = vmul.f32 %v1985, %v1991
    %v2009 = vmul.f32 %v1984, %v1995
    %v2010 = vmul.f32 %v1983, %v1999
    %v2011 = vmul.f32 %v1982, %v2003
    %2012 = vst [vmem:[#allocation2 + $0x60] sm:$0xff] %v2008
    %2013 = vst [vmem:[#allocation2 + $0x68] sm:$0xff] %v2009
    %2014 = vst [vmem:[#allocation2 + $0x70] sm:$0xff] %v2010
    %2015 = vst [vmem:[#allocation2 + $0x78] sm:$0xff] %v2011
    %2016 = vst [vmem:[#allocation2 + $0x80] sm:$0xff] %v1844
    %2017 = vst [vmem:[#allocation2 + $0x88] sm:$0xff] %v1845
    %2018 = vst [vmem:[#allocation2 + $0x90] sm:$0xff] %v1846
    %2019 = vst [vmem:[#allocation2 + $0x98] sm:$0xff] %v1847
    %2020 = vrot.lane.b32.xlu0 %v1844, 127
    %v2021 = vpop.permute.xlu0 %2020
    %2022 = vrot.lane.b32.xlu0 %v1845, 127
    %v2023 = vpop.permute.xlu0 %2022
    %2024 = vrot.lane.b32.xlu0 %v1846, 127
    %v2025 = vpop.permute.xlu0 %2024
    %2026 = vrot.lane.b32.xlu0 %v1847, 127
    %v2027 = vpop.permute.xlu0 %2026
    %v2028 = vsel %vm287, %v2025, %v2027
    %v2029 = vsel %vm287, %v2023, %v2025
    %v2030 = vsel %vm287, %v2021, %v2023
    %v2031 = vsel %vm287, %v2027, %v2021
    %v2032 = vld [vmem:[%s292] ss:$8 sm:$0xf]
    %v2034 = vlaneseq
    %v2035 = vshrl.u32 %v2034, 7
    %v2036 = vsub.s32 0, %v2035
    %v2037 = vrot.slane %v2032, %v2036
    %v2038 = vlaneseq
    %v2039 = vshrl.u32 %v2038, 7
    %v2040 = vsub.s32 1, %v2039
    %v2041 = vrot.slane %v2032, %v2040
    %v2042 = vlaneseq
    %v2043 = vshrl.u32 %v2042, 7
    %v2044 = vsub.s32 2, %v2043
    %v2045 = vrot.slane %v2032, %v2044
    %v2046 = vlaneseq
    %v2047 = vshrl.u32 %v2046, 7
    %v2048 = vsub.s32 3, %v2047
    %v2049 = vrot.slane %v2032, %v2048
    %v2054 = vmul.f32 %v2030, %v2037
    %v2055 = vmul.f32 %v2029, %v2041
    %v2056 = vmul.f32 %v2028, %v2045
    %v2057 = vmul.f32 %v2031, %v2049
    %2058 = vst [vmem:[#allocation2 + $0xa0] sm:$0xff] %v2054
    %2059 = vst [vmem:[#allocation2 + $0xa8] sm:$0xff] %v2055
    %2060 = vst [vmem:[#allocation2 + $0xb0] sm:$0xff] %v2056
    %2061 = vst [vmem:[#allocation2 + $0xb8] sm:$0xff] %v2057
    %2062 = vrot.lane.b32.xlu0 %v1844, 113
    %v2063 = vpop.permute.xlu0 %2062
    %2064 = vrot.lane.b32.xlu0 %v1845, 113
    %v2065 = vpop.permute.xlu0 %2064
    %2066 = vrot.lane.b32.xlu0 %v1846, 113
    %v2067 = vpop.permute.xlu0 %2066
    %2068 = vrot.lane.b32.xlu0 %v1847, 113
    %v2069 = vpop.permute.xlu0 %2068
    %v2070 = vsel %vm331, %v2067, %v2069
    %v2071 = vsel %vm331, %v2065, %v2067
    %v2072 = vsel %vm331, %v2063, %v2065
    %v2073 = vsel %vm331, %v2069, %v2063
    %v2074 = vld [vmem:[%s336] ss:$8 sm:$0xf]
    %v2076 = vlaneseq
    %v2077 = vshrl.u32 %v2076, 7
    %v2078 = vsub.s32 0, %v2077
    %v2079 = vrot.slane %v2074, %v2078
    %v2080 = vlaneseq
    %v2081 = vshrl.u32 %v2080, 7
    %v2082 = vsub.s32 1, %v2081
    %v2083 = vrot.slane %v2074, %v2082
    %v2084 = vlaneseq
    %v2085 = vshrl.u32 %v2084, 7
    %v2086 = vsub.s32 2, %v2085
    %v2087 = vrot.slane %v2074, %v2086
    %v2088 = vlaneseq
    %v2089 = vshrl.u32 %v2088, 7
    %v2090 = vsub.s32 3, %v2089
    %v2091 = vrot.slane %v2074, %v2090
    %v2096 = vmul.f32 %v2072, %v2079
    %v2097 = vmul.f32 %v2071, %v2083
    %v2098 = vmul.f32 %v2070, %v2087
    %v2099 = vmul.f32 %v2073, %v2091
    %2100 = vst [vmem:[#allocation2 + $0xc0] sm:$0xff] %v2096
    %2101 = vst [vmem:[#allocation2 + $0xc8] sm:$0xff] %v2097
    %2102 = vst [vmem:[#allocation2 + $0xd0] sm:$0xff] %v2098
    %2103 = vst [vmem:[#allocation2 + $0xd8] sm:$0xff] %v2099
    %2104 = vrot.lane.b32.xlu0 %v1844, 112
    %v2105 = vpop.permute.xlu0 %2104
    %2106 = vrot.lane.b32.xlu0 %v1845, 112
    %v2107 = vpop.permute.xlu0 %2106
    %2108 = vrot.lane.b32.xlu0 %v1846, 112
    %v2109 = vpop.permute.xlu0 %2108
    %2110 = vrot.lane.b32.xlu0 %v1847, 112
    %v2111 = vpop.permute.xlu0 %2110
    %v2112 = vsel %vm375, %v2109, %v2111
    %v2113 = vsel %vm375, %v2107, %v2109
    %v2114 = vsel %vm375, %v2105, %v2107
    %v2115 = vsel %vm375, %v2111, %v2105
    %v2116 = vld [vmem:[%s380] ss:$8 sm:$0xf]
    %v2118 = vlaneseq
    %v2119 = vshrl.u32 %v2118, 7
    %v2120 = vsub.s32 0, %v2119
    %v2121 = vrot.slane %v2116, %v2120
    %v2122 = vlaneseq
    %v2123 = vshrl.u32 %v2122, 7
    %v2124 = vsub.s32 1, %v2123
    %v2125 = vrot.slane %v2116, %v2124
    %v2126 = vlaneseq
    %v2127 = vshrl.u32 %v2126, 7
    %v2128 = vsub.s32 2, %v2127
    %v2129 = vrot.slane %v2116, %v2128
    %v2130 = vlaneseq
    %v2131 = vshrl.u32 %v2130, 7
    %v2132 = vsub.s32 3, %v2131
    %v2133 = vrot.slane %v2116, %v2132
    %v2138 = vmul.f32 %v2114, %v2121
    %v2139 = vmul.f32 %v2113, %v2125
    %v2140 = vmul.f32 %v2112, %v2129
    %v2141 = vmul.f32 %v2115, %v2133
    %2142 = vst [vmem:[#allocation2 + $0xe0] sm:$0xff] %v2138
    %2143 = vst [vmem:[#allocation2 + $0xe8] sm:$0xff] %v2139
    %2144 = vst [vmem:[#allocation2 + $0xf0] sm:$0xff] %v2140
    %2145 = vst [vmem:[#allocation2 + $0xf8] sm:$0xff] %v2141
    %2146 = vrot.lane.b32.xlu0 %v1844, 111
    %v2147 = vpop.permute.xlu0 %2146
    %2148 = vrot.lane.b32.xlu0 %v1845, 111
    %v2149 = vpop.permute.xlu0 %2148
    %2150 = vrot.lane.b32.xlu0 %v1846, 111
    %v2151 = vpop.permute.xlu0 %2150
    %2152 = vrot.lane.b32.xlu0 %v1847, 111
    %v2153 = vpop.permute.xlu0 %2152
    %v2154 = vsel %vm419, %v2151, %v2153
    %v2155 = vsel %vm419, %v2149, %v2151
    %v2156 = vsel %vm419, %v2147, %v2149
    %v2157 = vsel %vm419, %v2153, %v2147
    %v2158 = vld [vmem:[%s424] ss:$8 sm:$0xf]
    %v2160 = vlaneseq
    %v2161 = vshrl.u32 %v2160, 7
    %v2162 = vsub.s32 0, %v2161
    %v2163 = vrot.slane %v2158, %v2162
    %v2164 = vlaneseq
    %v2165 = vshrl.u32 %v2164, 7
    %v2166 = vsub.s32 1, %v2165
    %v2167 = vrot.slane %v2158, %v2166
    %v2168 = vlaneseq
    %v2169 = vshrl.u32 %v2168, 7
    %v2170 = vsub.s32 2, %v2169
    %v2171 = vrot.slane %v2158, %v2170
    %v2172 = vlaneseq
    %v2173 = vshrl.u32 %v2172, 7
    %v2174 = vsub.s32 3, %v2173
    %v2175 = vrot.slane %v2158, %v2174
    %v2180 = vmul.f32 %v2156, %v2163
    %v2181 = vmul.f32 %v2155, %v2167
    %v2182 = vmul.f32 %v2154, %v2171
    %v2183 = vmul.f32 %v2157, %v2175
    %2184 = vst [vmem:[#allocation2 + $0x100] sm:$0xff] %v2180
    %2185 = vst [vmem:[#allocation2 + $0x108] sm:$0xff] %v2181
    %2186 = vst [vmem:[#allocation2 + $0x110] sm:$0xff] %v2182
    %2187 = vst [vmem:[#allocation2 + $0x118] sm:$0xff] %v2183
    %s2188 = scalar_lea.vmem [#allocation3], 24
    %v2189 = vld [vmem:[%s2188] sm:$0xff]
    %v2190 = vld [vmem:[#allocation2] sm:$0xff]
    %v2191 = vld [vmem:[#allocation2 + $0x8] sm:$0xff]
    %v2192 = vld [vmem:[#allocation2 + $0x10] sm:$0xff]
    %v2193 = vld [vmem:[#allocation2 + $0x18] sm:$0xff]
    %v2194 = vld [vmem:[#allocation2 + $0x20] sm:$0xff]
    %v2195 = vld [vmem:[#allocation2 + $0x28] sm:$0xff]
    %v2196 = vld [vmem:[#allocation2 + $0x30] sm:$0xff]
    %v2197 = vld [vmem:[#allocation2 + $0x38] sm:$0xff]
    %v2198 = vld [vmem:[#allocation2 + $0x40] sm:$0xff]
    %v2199 = vld [vmem:[#allocation2 + $0x48] sm:$0xff]
    %v2200 = vld [vmem:[#allocation2 + $0x50] sm:$0xff]
    %v2201 = vld [vmem:[#allocation2 + $0x58] sm:$0xff]
    %v2202 = vld [vmem:[#allocation2 + $0x60] sm:$0xff]
    %v2203 = vld [vmem:[#allocation2 + $0x68] sm:$0xff]
    %v2204 = vld [vmem:[#allocation2 + $0x70] sm:$0xff]
    %v2205 = vld [vmem:[#allocation2 + $0x78] sm:$0xff]
    %v2206 = vld [vmem:[#allocation2 + $0x80] sm:$0xff]
    %v2207 = vld [vmem:[#allocation2 + $0x88] sm:$0xff]
    %v2208 = vld [vmem:[#allocation2 + $0x90] sm:$0xff]
    %v2209 = vld [vmem:[#allocation2 + $0x98] sm:$0xff]
    %v2210 = vld [vmem:[#allocation2 + $0xa0] sm:$0xff]
    %v2211 = vld [vmem:[#allocation2 + $0xa8] sm:$0xff]
    %v2212 = vld [vmem:[#allocation2 + $0xb0] sm:$0xff]
    %v2213 = vld [vmem:[#allocation2 + $0xb8] sm:$0xff]
    %v2214 = vld [vmem:[#allocation2 + $0xc0] sm:$0xff]
    %v2215 = vld [vmem:[#allocation2 + $0xc8] sm:$0xff]
    %v2216 = vld [vmem:[#allocation2 + $0xd0] sm:$0xff]
    %v2217 = vld [vmem:[#allocation2 + $0xd8] sm:$0xff]
    %v2218 = vld [vmem:[#allocation2 + $0xe0] sm:$0xff]
    %v2219 = vld [vmem:[#allocation2 + $0xe8] sm:$0xff]
    %v2220 = vld [vmem:[#allocation2 + $0xf0] sm:$0xff]
    %v2221 = vld [vmem:[#allocation2 + $0xf8] sm:$0xff]
    %v2222 = vld [vmem:[#allocation2 + $0x100] sm:$0xff]
    %v2223 = vld [vmem:[#allocation2 + $0x108] sm:$0xff]
    %v2224 = vld [vmem:[#allocation2 + $0x110] sm:$0xff]
    %v2225 = vld [vmem:[#allocation2 + $0x118] sm:$0xff]
    %v2226 = vld [vmem:[#allocation2 + $0x120] sm:$0xff]
    %v2227 = vld [vmem:[#allocation2 + $0x128] sm:$0xff]
    %v2228 = vld [vmem:[#allocation2 + $0x130] sm:$0xff]
    %v2229 = vld [vmem:[#allocation2 + $0x138] sm:$0xff]
    %v2231 = vsel %vm496, %v2189, 0
    %2233 = vmatprep.subr.mxu0 %v2191
    %2234 = vmatpush1.msra.mxu0 %v2190
    %2235 = vmatprep.subr.mxu0 %v2195
    %2236 = vmatpush1.msra.mxu0 %v2194
    %2237 = vmatprep.subr.mxu0 %v2199
    %2238 = vmatpush1.msra.mxu0 %v2198
    %2239 = vmatprep.subr.mxu0 %v2203
    %2240 = vmatpush1.msra.mxu0 %v2202
    %2241 = vmatprep.subr.mxu0 %v2207
    %2242 = vmatpush1.msra.mxu0 %v2206
    %2243 = vmatprep.subr.mxu0 %v2211
    %2244 = vmatpush1.msra.mxu0 %v2210
    %2245 = vmatprep.subr.mxu0 %v2215
    %2246 = vmatpush1.msra.mxu0 %v2214
    %2247 = vmatprep.subr.mxu0 %v2219
    %2248 = vmatpush1.msra.mxu0 %v2218
    %2249 = vmatprep.subr.mxu0 %v2223
    %2250 = vmatpush1.msra.mxu0 %v2222
    %2251 = vmatprep.subr.mxu0 %v2227
    %2252 = vmatpush1.msra.mxu0 %v2226
    %2253 = vmatprep.subr.mxu0 0.0
    %2254 = vmatpush1.msra.mxu0 0.0
    %2255 = vmatprep.subr.mxu0 0.0
    %2256 = vmatpush1.msra.mxu0 0.0
    %2257 = vmatprep.subr.mxu0 0.0
    %2258 = vmatpush1.msra.mxu0 0.0
    %2259 = vmatprep.subr.mxu0 0.0
    %2260 = vmatpush1.msra.mxu0 0.0
    %2261 = vmatprep.subr.mxu0 0.0
    %2262 = vmatpush1.msra.mxu0 0.0
    %2263 = vmatprep.subr.mxu0 0.0
    %2264 = vmatpush1.msra.mxu0 0.0
    %2265 = vmatprep.subr.mxu0 0.0
    %2266 = vmatpush1.msra.mxu0 0.0
    %2267 = vmatprep.subr.mxu0 0.0
    %2268 = vmatpush1.msra.mxu0 0.0
    %2269 = vmatprep.subr.mxu0 0.0
    %2270 = vmatpush1.msra.mxu0 0.0
    %2271 = vmatprep.subr.mxu0 0.0
    %2272 = vmatpush1.msra.mxu0 0.0
    %2273 = vmatprep.subr.mxu0 0.0
    %2274 = vmatpush1.msra.mxu0 0.0
    %2275 = vmatprep.subr.mxu0 0.0
    %2276 = vmatpush1.msra.mxu0 0.0
    %2277 = vmatprep.subr.mxu0 0.0
    %2278 = vmatpush1.msra.mxu0 0.0
    %2279 = vmatprep.subr.mxu0 0.0
    %2280 = vmatpush1.msra.mxu0 0.0
    %2281 = vmatprep.subr.mxu0 0.0
    %2282 = vmatpush1.msra.mxu0 0.0
    %2283 = vmatprep.subr.mxu0 0.0
    %2284 = vmatpush1.msra.mxu0 0.0
    %2285 = vmatprep.subr.mxu0 0.0
    %2286 = vmatpush1.msra.mxu0 0.0
    %2287 = vmatprep.subr.mxu0 0.0
    %2288 = vmatpush1.msra.mxu0 0.0
    %2289 = vmatprep.subr.mxu0 0.0
    %2290 = vmatpush1.msra.mxu0 0.0
    %2291 = vmatprep.subr.mxu0 0.0
    %2292 = vmatpush1.msra.mxu0 0.0
    %2293 = vmatprep.subr.mxu0 0.0
    %2294 = vmatpush1.msra.mxu0 0.0
    %2295 = vmatprep.subr.mxu0 0.0
    %2296 = vmatpush1.msra.mxu0 0.0
    %2297 = vmatprep.mubr.f32.mxu0 0.0
    %2298 = vmatmul.mubr.f32.gmra.mrb[0].mxu0 %v2231
    %v2299 = vpop.f32.mrb[0].mxu0
    %v2300 = vadd.f32 0.0, %v2299
    %v2301 = vpop.f32.mrb[0].mxu0
    %v2302 = vadd.f32 0.0, %v2301
    %2303 = vdwg.mxu0
    %2304 = vmatprep.subr.mxu0 %v2193
    %2305 = vmatpush1.msra.mxu0 %v2192
    %2306 = vmatprep.subr.mxu0 %v2197
    %2307 = vmatpush1.msra.mxu0 %v2196
    %2308 = vmatprep.subr.mxu0 %v2201
    %2309 = vmatpush1.msra.mxu0 %v2200
    %2310 = vmatprep.subr.mxu0 %v2205
    %2311 = vmatpush1.msra.mxu0 %v2204
    %2312 = vmatprep.subr.mxu0 %v2209
    %2313 = vmatpush1.msra.mxu0 %v2208
    %2314 = vmatprep.subr.mxu0 %v2213
    %2315 = vmatpush1.msra.mxu0 %v2212
    %2316 = vmatprep.subr.mxu0 %v2217
    %2317 = vmatpush1.msra.mxu0 %v2216
    %2318 = vmatprep.subr.mxu0 %v2221
    %2319 = vmatpush1.msra.mxu0 %v2220
    %2320 = vmatprep.subr.mxu0 %v2225
    %2321 = vmatpush1.msra.mxu0 %v2224
    %2322 = vmatprep.subr.mxu0 %v2229
    %2323 = vmatpush1.msra.mxu0 %v2228
    %2324 = vmatprep.subr.mxu0 0.0
    %2325 = vmatpush1.msra.mxu0 0.0
    %2326 = vmatprep.subr.mxu0 0.0
    %2327 = vmatpush1.msra.mxu0 0.0
    %2328 = vmatprep.subr.mxu0 0.0
    %2329 = vmatpush1.msra.mxu0 0.0
    %2330 = vmatprep.subr.mxu0 0.0
    %2331 = vmatpush1.msra.mxu0 0.0
    %2332 = vmatprep.subr.mxu0 0.0
    %2333 = vmatpush1.msra.mxu0 0.0
    %2334 = vmatprep.subr.mxu0 0.0
    %2335 = vmatpush1.msra.mxu0 0.0
    %2336 = vmatprep.subr.mxu0 0.0
    %2337 = vmatpush1.msra.mxu0 0.0
    %2338 = vmatprep.subr.mxu0 0.0
    %2339 = vmatpush1.msra.mxu0 0.0
    %2340 = vmatprep.subr.mxu0 0.0
    %2341 = vmatpush1.msra.mxu0 0.0
    %2342 = vmatprep.subr.mxu0 0.0
    %2343 = vmatpush1.msra.mxu0 0.0
    %2344 = vmatprep.subr.mxu0 0.0
    %2345 = vmatpush1.msra.mxu0 0.0
    %2346 = vmatprep.subr.mxu0 0.0
    %2347 = vmatpush1.msra.mxu0 0.0
    %2348 = vmatprep.subr.mxu0 0.0
    %2349 = vmatpush1.msra.mxu0 0.0
    %2350 = vmatprep.subr.mxu0 0.0
    %2351 = vmatpush1.msra.mxu0 0.0
    %2352 = vmatprep.subr.mxu0 0.0
    %2353 = vmatpush1.msra.mxu0 0.0
    %2354 = vmatprep.subr.mxu0 0.0
    %2355 = vmatpush1.msra.mxu0 0.0
    %2356 = vmatprep.subr.mxu0 0.0
    %2357 = vmatpush1.msra.mxu0 0.0
    %2358 = vmatprep.subr.mxu0 0.0
    %2359 = vmatpush1.msra.mxu0 0.0
    %2360 = vmatprep.subr.mxu0 0.0
    %2361 = vmatpush1.msra.mxu0 0.0
    %2362 = vmatprep.subr.mxu0 0.0
    %2363 = vmatpush1.msra.mxu0 0.0
    %2364 = vmatprep.subr.mxu0 0.0
    %2365 = vmatpush1.msra.mxu0 0.0
    %2366 = vmatprep.subr.mxu0 0.0
    %2367 = vmatpush1.msra.mxu0 0.0
    %2368 = vmatprep.mubr.f32.mxu0 0.0
    %2369 = vmatmul.mubr.f32.gmra.mrb[0].mxu0 %v2231
    %v2370 = vpop.f32.mrb[0].mxu0
    %v2371 = vadd.f32 0.0, %v2370
    %v2372 = vpop.f32.mrb[0].mxu0
    %v2373 = vadd.f32 0.0, %v2372
    %2374 = vdwg.mxu0
    %v2375 = vadd.f32 %v2300, %v2302
    %v2376 = vadd.f32 %v2375, %v2371
    %v2377 = vadd.f32 %v2376, %v2373
    %2378 = vadd.xlane.f32.xlu0 %v2377
    %v2379 = vpop.xlane.xlu0 %2378
    %v2380 = vmul.f32 %v2379, %v647
    %v2381 = vsub.f32 %v2300, %v2380
    %v2382 = vsub.f32 %v2302, %v2380
    %v2383 = vsub.f32 %v2371, %v2380
    %v2384 = vsub.f32 %v2373, %v2380
    %v2385 = vmul.f32 %v2381, %v2381
    %v2386 = vmul.f32 %v2382, %v2382
    %v2387 = vmul.f32 %v2383, %v2383
    %v2388 = vmul.f32 %v2384, %v2384
    %v2389 = vadd.f32 %v2385, %v2386
    %v2390 = vadd.f32 %v2389, %v2387
    %v2391 = vadd.f32 %v2390, %v2388
    %2392 = vadd.xlane.f32.xlu0 %v2391
    %v2393 = vpop.xlane.xlu0 %2392
    %v2394 = vmul.f32 %v2393, %v647
    %s2395 = scalar_lea.vmem %s1, 24
    %v2396 = vld [vmem:[%s2395] sm:$0xff]
    %v2397 = vadd.f32 %v2394, 1e-05
    %v2398 = vrsqrt.pop %v2397
    %v2399 = vmul.f32 %v2396, %v2398
    %s2400 = scalar_lea.vmem %s2, 24
    %v2401 = vld [vmem:[%s2400] sm:$0xff]
    %v2402 = vmul.f32 %v2380, %v2399
    %v2403 = vsub.f32 %v2401, %v2402
    %2405 = vset.pattern.permute.xlu0 0
    %2406 = vperm.xlu0 %2405, %v2399
    %v2407 = vpop.permute.xlu0 %2406
    %v2409 = vmul.f32 %v2300, %v2407
    %v2410 = vmul.f32 %v2302, %v2407
    %v2411 = vmul.f32 %v2371, %v2407
    %v2412 = vmul.f32 %v2373, %v2407
    %2414 = vset.pattern.permute.xlu0 0
    %2415 = vperm.xlu0 %2414, %v2403
    %v2416 = vpop.permute.xlu0 %2415
    %v2418 = vadd.f32 %v2409, %v2416
    %v2419 = vadd.f32 %v2410, %v2416
    %v2420 = vadd.f32 %v2411, %v2416
    %v2421 = vadd.f32 %v2412, %v2416
    %v2426 = vcombine.low %v2418, %v2419
    %v2427 = vcombine.low %v2420, %v2421
    %v2429 = vunpack.c.l.s4 1966171168
    %v2430 = vunpack.c.0.s8 %v2429
    %v2431 = vlaneseq
    %v2432 = vshrl.u32 %v2431, 7
    %v2433 = vsub.s32 %v2430, %v2432
    %v2434 = vrot.slane %v2426, %v2433
    %v2436 = vunpack.c.l.s4 1966171168
    %v2437 = vunpack.c.0.s8 %v2436
    %v2438 = vlaneseq
    %v2439 = vshrl.u32 %v2438, 7
    %v2440 = vsub.s32 %v2437, %v2439
    %v2441 = vrot.slane %v2427, %v2440
    %v2442 = vcombine.low %v2434, %v2441
    %v2444 = vunpack.c.l.s4 1966171168
    %v2445 = vunpack.c.0.s8 %v2444
    %v2446 = vlaneseq
    %v2447 = vshrl.u32 %v2446, 7
    %v2448 = vsub.s32 %v2445, %v2447
    %v2449 = vrot.slane %v2442, %v2448
    %2451 = vst.msk [vmem:[#allocation8] sm:$0xf] %vm90, %v2449
    // Predicated region
    $region30: #{tpu_custom_call.1} parent=1 // pred_check
      _
    $region31: #{tpu_custom_call.1} parent=1 // pred_check_branch
      %2453 = sbr.rel (0) target = $region33
    $region32: #{tpu_custom_call.1} parent=1 // pred_region
      %s2455 = ssub.s32 64, 64
      %2456 = vsyncadd [#allocation5], %s2455
      %s2458 = sshll.u32 [#allocation8], 4
      %s2459 = int_to_ptr.vmem [resolvable:$true] %s2458
      %2461 = dma.vmem_to_hbm [thread:$0]  %s2459, 64, %s5, [#allocation5]
    $region33: #{tpu_custom_call.1} parent=1 // pred_fallthru
      _
    // Predicated region
    $region34: #{tpu_custom_call.1} parent=1 // pred_check
      _
    $region35: #{tpu_custom_call.1} parent=1 // pred_check_branch
      %2463 = sbr.rel (0) target = $region37
    $region36: #{tpu_custom_call.1} parent=1 // pred_region
      %2464 = dma.done [#allocation5], 64
    $region37: #{tpu_custom_call.1} parent=1 // pred_fallthru
      _
    %2465 = vsyncpa [#allocation4], 1
    %2466 = vsyncpa [#allocation7], 1
    %2467 = vsyncpa [#allocation5], 1

</llo_original>
